<compile_context>
chip_gen: v7x
topology: tpu7x:2x2x1
jax: 0.10.0
libtpu: 0.0.40
codegen_flags: <defaults>
</compile_context>

<pallas_src>
import functools
import math

import jax
import jax.numpy as jnp
from jax.experimental import pallas as pl
from jax.experimental.pallas import tpu as pltpu


# ----------------------------------------------------------------------------
# Positional embedding (glue, plain JAX — identical math to posemb_sincos_1d)
# ----------------------------------------------------------------------------
def posemb_sincos_1d(n, dim, temperature=10000.0, dtype=jnp.float32):
    position = jnp.arange(n, dtype=jnp.float32)[:, None]                  # (n, 1)
    div_term = jnp.exp(
        jnp.arange(0, dim, 2, dtype=jnp.float32) * -(math.log(temperature) / dim)
    )                                                                     # (dim//2,)
    ang = position * div_term                                             # (n, dim//2)
    pe = jnp.zeros((n, dim), jnp.float32)
    pe = pe.at[:, 0::2].set(jnp.sin(ang))
    pe = pe.at[:, 1::2].set(jnp.cos(ang))
    return pe[None].astype(dtype)                                         # (1, n, dim)


# ----------------------------------------------------------------------------
# Single fused Pallas kernel: the FULL transformer (all layers), no grid.
# All weights are whole VMEM-resident blocks; the depth loop is unrolled.
# ----------------------------------------------------------------------------
def _transformer_kernel(x_ref, ln1w_ref, ln1b_ref, wqkv_ref, wout_ref,
                        ln2w_ref, ln2b_ref, w1_ref, b1_ref, w2_ref, b2_ref,
                        o_ref, *, depth, heads, dim_head):
    B, N, D = x_ref.shape
    BN = B * N
    dh = dim_head
    eps = 1e-5

    x = x_ref[...].astype(jnp.float32).reshape(BN, D)   # fold (B, N) -> rows

    def layernorm(y, w, b):                              # w, b: (1, D)
        mu = jnp.mean(y, axis=-1, keepdims=True)
        var = jnp.maximum(jnp.mean(y * y, axis=-1, keepdims=True) - mu * mu, 0.0)
        return (y - mu) * jax.lax.rsqrt(var + eps) * w + b

    for l in range(depth):                               # static unroll (small depth)
        # ---------------- Attention ----------------
        xn = layernorm(x, ln1w_ref[l], ln1b_ref[l])      # (BN, D)

        # Single fused QKV matmul (softmax scale already folded into Q columns).
        qkv = jnp.dot(xn, wqkv_ref[l],
                      preferred_element_type=jnp.float32)          # (BN, 3*H*dh)
        qkv = qkv.reshape(B, N, 3 * heads * dh)                    # leading reshape only

        # TODO(synk): at production head counts replace this static per-head
        # loop with a single (B*heads)-batched score/context einsum.
        ctx_heads = []
        for h in range(heads):                           # static lane slices of width dh
            q_off = 0 * heads * dh + h * dh
            k_off = 1 * heads * dh + h * dh
            v_off = 2 * heads * dh + h * dh
            qh = qkv[:, :, q_off:q_off + dh]             # (B, N, dh)
            kh = qkv[:, :, k_off:k_off + dh]
            vh = qkv[:, :, v_off:v_off + dh]

            dots = jnp.einsum("bnd,bmd->bnm", qh, kh,
                              preferred_element_type=jnp.float32)  # (B, N, N)
            dots = dots - jnp.max(dots, axis=-1, keepdims=True)
            e = jnp.exp(dots)
            inv = pl.reciprocal(jnp.sum(e, axis=-1, keepdims=True), approx=True)
            attn = e * inv                                         # softmax
            ctx_heads.append(jnp.einsum("bnm,bmd->bnd", attn, vh,
                                        preferred_element_type=jnp.float32))

        # Concat heads (head-major, matching 'b h n d -> b n (h d)') and do ONE
        # output-projection matmul with the fused (heads*dh, D) weight.
        ctx = jnp.concatenate(ctx_heads, axis=-1).reshape(BN, heads * dh)
        x = x + jnp.dot(ctx, wout_ref[l], preferred_element_type=jnp.float32)

        # ---------------- FeedForward ----------------
        xn2 = layernorm(x, ln2w_ref[l], ln2b_ref[l])
        h1 = jnp.dot(xn2, w1_ref[l], preferred_element_type=jnp.float32) + b1_ref[l]
        # exact (erf-based) GELU, matching torch.nn.GELU() default
        h1 = 0.5 * h1 * (1.0 + jax.lax.erf(h1 * (2.0 ** -0.5)))
        x = x + jnp.dot(h1, w2_ref[l], preferred_element_type=jnp.float32) + b2_ref[l]

    # Single writeback at the end.  (At production sizes D >= 128 this store is
    # already lane-dense; at D=32 it is a one-off masked store and negligible.)
    o_ref[...] = x.reshape(B, N, D).astype(o_ref.dtype)


# ----------------------------------------------------------------------------
# Wrapper: ONE pallas_call, no grid, whole arrays resident in VMEM.
# ----------------------------------------------------------------------------
def transformer_forward(x, params, *, heads, dim_head):
    B, N, D = x.shape
    depth = params["w_qkv"].shape[0]
    scale = dim_head ** (-0.5)

    # Positional embedding (glue, plain JAX).
    x = x + posemb_sincos_1d(N, D, dtype=x.dtype)

    # Fused QKV weight: (depth, 3, heads, D, dh) -> (depth, D, 3*heads*dh),
    # column order = (q|k|v, head, dh).  Fold softmax scale into the Q block.
    w_qkv = params["w_qkv"].at[:, 0].multiply(scale)
    w_qkv_fused = jnp.transpose(w_qkv, (0, 3, 1, 2, 4)).reshape(
        depth, D, 3 * heads * dim_head)
    # Fused output projection: (depth, heads, dh, D) -> (depth, heads*dh, D).
    w_out_fused = params["w_out"].reshape(depth, heads * dim_head, D)

    inputs = (x, params["ln1_w"], params["ln1_b"], w_qkv_fused, w_out_fused,
              params["ln2_w"], params["ln2_b"], params["w1"], params["b1"],
              params["w2"], params["b2"])

    kernel = functools.partial(_transformer_kernel, depth=depth,
                               heads=heads, dim_head=dim_head)

    # TODO(synk): for production sizes re-introduce a (parallel batch/token,
    # arbitrary layer) grid with per-layer weight BlockSpecs (bf16, K-tiled)
    # instead of whole resident blocks.
    return pl.pallas_call(
        kernel,
        out_shape=jax.ShapeDtypeStruct((B, N, D), x.dtype),
        in_specs=[pl.BlockSpec(memory_space=pltpu.MemorySpace.VMEM)
                  for _ in inputs],
        out_specs=pl.BlockSpec(memory_space=pltpu.MemorySpace.VMEM),
    )(*inputs)


# ----------------------------------------------------------------------------
# Deterministic parameter init (synthetic; shapes from the module __init__),
# stacked along a leading `depth` axis with head-major QKV / out-proj layout.
# ----------------------------------------------------------------------------
def init_params(key, dim, depth, heads, dim_head, mlp_dim):
    k = jax.random.split(key, 6)
    return dict(
        ln1_w=jnp.ones((depth, 1, dim), jnp.float32),
        ln1_b=jnp.zeros((depth, 1, dim), jnp.float32),
        w_qkv=0.02 * jax.random.normal(k[0], (depth, 3, heads, dim, dim_head), jnp.float32),
        w_out=0.02 * jax.random.normal(k[1], (depth, heads, dim_head, dim), jnp.float32),
        ln2_w=jnp.ones((depth, 1, dim), jnp.float32),
        ln2_b=jnp.zeros((depth, 1, dim), jnp.float32),
        w1=0.02 * jax.random.normal(k[2], (depth, dim, mlp_dim), jnp.float32),
        b1=0.02 * jax.random.normal(k[3], (depth, 1, mlp_dim), jnp.float32),
        w2=0.02 * jax.random.normal(k[4], (depth, mlp_dim, dim), jnp.float32),
        b2=0.02 * jax.random.normal(k[5], (depth, 1, dim), jnp.float32),
    )


# ----------------------------------------------------------------------------
# Plain-JAX reference (same parametrisation; matches the PyTorch forward)
# ----------------------------------------------------------------------------
def transformer_ref(x, p, heads, dim_head):
    _, N, D = x.shape
    x = x + posemb_sincos_1d(N, D, dtype=x.dtype)
    depth = p["w_qkv"].shape[0]
    scale = dim_head ** (-0.5)

    def ln(y, w, b):
        mu = y.mean(-1, keepdims=True)
        var = ((y - mu) ** 2).mean(-1, keepdims=True)
        return (y - mu) / jnp.sqrt(var + 1e-5) * w + b

    for l in range(depth):
        xn = ln(x, p["ln1_w"][l], p["ln1_b"][l])
        q = jnp.einsum("bnd,hde->bhne", xn, p["w_qkv"][l, 0])
        k = jnp.einsum("bnd,hde->bhne", xn, p["w_qkv"][l, 1])
        v = jnp.einsum("bnd,hde->bhne", xn, p["w_qkv"][l, 2])
        dots = jnp.einsum("bhne,bhme->bhnm", q, k) * scale
        attn = jax.nn.softmax(dots, axis=-1)
        out = jnp.einsum("bhnm,bhme->bhne", attn, v)
        x = x + jnp.einsum("bhne,hef->bnf", out, p["w_out"][l])
        xn2 = ln(x, p["ln2_w"][l], p["ln2_b"][l])
        h1 = jax.nn.gelu(xn2 @ p["w1"][l] + p["b1"][l], approximate=False)
        x = x + (h1 @ p["w2"][l] + p["b2"][l])
    return x


# ----------------------------------------------------------------------------
if __name__ == "__main__":
    B, N = 2, 8                    # batch, sequence
    dim, depth, heads, dim_head, mlp_dim = 32, 2, 4, 8, 64

    key = jax.random.PRNGKey(0)
    key, kx = jax.random.split(key)
    x = jax.random.normal(kx, (B, N, dim), jnp.float32)

    params = init_params(key, dim, depth, heads, dim_head, mlp_dim)

    out = transformer_forward(x, params, heads=heads, dim_head=dim_head)
    out = jax.block_until_ready(out)

    ref = transformer_ref(x, params, heads, dim_head)
    assert out.shape == (B, N, dim)
    # Tolerance slightly looser than 1e-4 because the softmax denominator uses
    # the EUP approximate reciprocal (pl.reciprocal(approx=True)).
    assert jnp.allclose(out, ref, atol=1e-3, rtol=1e-3), "mismatch vs JAX reference"

    print("KERNEL_OK")
</pallas_src>

<mosaic_0001>
module attributes {stable_mosaic.version = 11 : i64} {
  func.func @_transformer_kernel(%arg0: memref<2x8x32xf32, #tpu.memory_space<vmem>>, %arg1: memref<2x1x32xf32, #tpu.memory_space<vmem>>, %arg2: memref<2x1x32xf32, #tpu.memory_space<vmem>>, %arg3: memref<2x32x96xf32, #tpu.memory_space<vmem>>, %arg4: memref<2x32x32xf32, #tpu.memory_space<vmem>>, %arg5: memref<2x1x32xf32, #tpu.memory_space<vmem>>, %arg6: memref<2x1x32xf32, #tpu.memory_space<vmem>>, %arg7: memref<2x32x64xf32, #tpu.memory_space<vmem>>, %arg8: memref<2x1x64xf32, #tpu.memory_space<vmem>>, %arg9: memref<2x64x32xf32, #tpu.memory_space<vmem>>, %arg10: memref<2x1x32xf32, #tpu.memory_space<vmem>>, %arg11: memref<2x8x32xf32, #tpu.memory_space<vmem>>) attributes {dimension_semantics = [], scalar_prefetch = 0 : i64, scratch_operands = 0 : i64, tpu.core_type = #tpu.core_type<tc>} {
    %c0 = arith.constant 0 : index
    %c0_0 = arith.constant 0 : index
    %c0_1 = arith.constant 0 : index
    %0 = vector.load %arg0[%c0, %c0_0, %c0_1] : memref<2x8x32xf32, #tpu.memory_space<vmem>>, vector<2x8x32xf32>
    %1 = vector.shape_cast %0 : vector<2x8x32xf32> to vector<16x32xf32>
    %c0_2 = arith.constant 0 : index
    %c0_3 = arith.constant 0 : index
    %c0_4 = arith.constant 0 : index
    %2 = vector.load %arg1[%c0_2, %c0_3, %c0_4] : memref<2x1x32xf32, #tpu.memory_space<vmem>>, vector<1x1x32xf32>
    %3 = vector.shape_cast %2 : vector<1x1x32xf32> to vector<1x32xf32>
    %c0_5 = arith.constant 0 : index
    %c0_6 = arith.constant 0 : index
    %c0_7 = arith.constant 0 : index
    %4 = vector.load %arg2[%c0_5, %c0_6, %c0_7] : memref<2x1x32xf32, #tpu.memory_space<vmem>>, vector<1x1x32xf32>
    %5 = vector.shape_cast %4 : vector<1x1x32xf32> to vector<1x32xf32>
    %cst = arith.constant dense<0.000000e+00> : vector<16xf32>
    %6 = vector.multi_reduction <add>, %1, %cst [1] : vector<16x32xf32> to vector<16xf32>
    %7 = vector.shape_cast %6 : vector<16xf32> to vector<16x1xf32>
    %cst_8 = arith.constant 3.200000e+01 : f32
    %8 = vector.broadcast %cst_8 : f32 to vector<16x1xf32>
    %9 = arith.divf %7, %8 : vector<16x1xf32>
    %10 = arith.mulf %1, %1 : vector<16x32xf32>
    %cst_9 = arith.constant dense<0.000000e+00> : vector<16xf32>
    %11 = vector.multi_reduction <add>, %10, %cst_9 [1] : vector<16x32xf32> to vector<16xf32>
    %12 = vector.shape_cast %11 : vector<16xf32> to vector<16x1xf32>
    %cst_10 = arith.constant 3.200000e+01 : f32
    %13 = vector.broadcast %cst_10 : f32 to vector<16x1xf32>
    %14 = arith.divf %12, %13 : vector<16x1xf32>
    %15 = arith.mulf %9, %9 : vector<16x1xf32>
    %16 = arith.subf %14, %15 : vector<16x1xf32>
    %cst_11 = arith.constant 0.000000e+00 : f32
    %17 = vector.broadcast %cst_11 : f32 to vector<16x1xf32>
    %18 = arith.maximumf %16, %17 : vector<16x1xf32>
    %19 = vector.broadcast %9 : vector<16x1xf32> to vector<16x32xf32>
    %20 = arith.subf %1, %19 : vector<16x32xf32>
    %cst_12 = arith.constant 9.99999974E-6 : f32
    %21 = vector.broadcast %cst_12 : f32 to vector<16x1xf32>
    %22 = arith.addf %18, %21 : vector<16x1xf32>
    %23 = math.rsqrt %22 : vector<16x1xf32>
    %24 = vector.broadcast %23 : vector<16x1xf32> to vector<16x32xf32>
    %25 = arith.mulf %20, %24 : vector<16x32xf32>
    %26 = vector.broadcast %3 : vector<1x32xf32> to vector<16x32xf32>
    %27 = arith.mulf %25, %26 : vector<16x32xf32>
    %28 = vector.broadcast %5 : vector<1x32xf32> to vector<16x32xf32>
    %29 = arith.addf %27, %28 : vector<16x32xf32>
    %c0_13 = arith.constant 0 : index
    %c0_14 = arith.constant 0 : index
    %c0_15 = arith.constant 0 : index
    %30 = vector.load %arg3[%c0_13, %c0_14, %c0_15] : memref<2x32x96xf32, #tpu.memory_space<vmem>>, vector<1x32x96xf32>
    %31 = vector.shape_cast %30 : vector<1x32x96xf32> to vector<32x96xf32>
    %cst_16 = arith.constant dense<0.000000e+00> : vector<16x96xf32>
    %32 = tpu.matmul %29, %31, %cst_16 {dimension_numbers = #tpu.dot_dimension_numbers<[1], [0], [0], [1], [0, 0, 1, 1], [], []>} : vector<16x32xf32>, vector<32x96xf32>, vector<16x96xf32> -> vector<16x96xf32>
    %33 = vector.shape_cast %32 : vector<16x96xf32> to vector<2x8x96xf32>
    %34 = vector.extract_strided_slice %33 {offsets = [0, 0, 0], sizes = [2, 8, 8], strides = [1, 1, 1]} : vector<2x8x96xf32> to vector<2x8x8xf32>
    %35 = vector.extract_strided_slice %33 {offsets = [0, 0, 32], sizes = [2, 8, 8], strides = [1, 1, 1]} : vector<2x8x96xf32> to vector<2x8x8xf32>
    %36 = vector.extract_strided_slice %33 {offsets = [0, 0, 64], sizes = [2, 8, 8], strides = [1, 1, 1]} : vector<2x8x96xf32> to vector<2x8x8xf32>
    "tpu.trace_start"() <{level = 10 : i32, message = "bnd,bmd->bnm"}> : () -> ()
    %cst_17 = arith.constant dense<0.000000e+00> : vector<2x8x8xf32>
    %37 = tpu.matmul %34, %35, %cst_17 {dimension_numbers = #tpu.dot_dimension_numbers<[2], [2], [1], [1], [0, 0, 0, 1, 1, 1], [0], [0]>} : vector<2x8x8xf32>, vector<2x8x8xf32>, vector<2x8x8xf32> -> vector<2x8x8xf32>
    "tpu.trace_stop"() : () -> ()
    %cst_18 = arith.constant dense<0xFF800000> : vector<2x8xf32>
    %38 = vector.multi_reduction <maximumf>, %37, %cst_18 [2] : vector<2x8x8xf32> to vector<2x8xf32>
    %39 = vector.shape_cast %38 : vector<2x8xf32> to vector<2x8x1xf32>
    %40 = vector.broadcast %39 : vector<2x8x1xf32> to vector<2x8x8xf32>
    %41 = arith.subf %37, %40 : vector<2x8x8xf32>
    %42 = math.exp %41 : vector<2x8x8xf32>
    %cst_19 = arith.constant dense<0.000000e+00> : vector<2x8xf32>
    %43 = vector.multi_reduction <add>, %42, %cst_19 [2] : vector<2x8x8xf32> to vector<2x8xf32>
    %44 = vector.shape_cast %43 : vector<2x8xf32> to vector<2x8x1xf32>
    %45 = tpu.reciprocal %44 {approx = true} : vector<2x8x1xf32> -> vector<2x8x1xf32>
    %46 = vector.broadcast %45 : vector<2x8x1xf32> to vector<2x8x8xf32>
    %47 = arith.mulf %42, %46 : vector<2x8x8xf32>
    "tpu.trace_start"() <{level = 10 : i32, message = "bnm,bmd->bnd"}> : () -> ()
    %cst_20 = arith.constant dense<0.000000e+00> : vector<2x8x8xf32>
    %48 = tpu.matmul %47, %36, %cst_20 {dimension_numbers = #tpu.dot_dimension_numbers<[2], [1], [1], [2], [0, 0, 0, 1, 1, 2], [0], [0]>} : vector<2x8x8xf32>, vector<2x8x8xf32>, vector<2x8x8xf32> -> vector<2x8x8xf32>
    "tpu.trace_stop"() : () -> ()
    %49 = vector.extract_strided_slice %33 {offsets = [0, 0, 8], sizes = [2, 8, 8], strides = [1, 1, 1]} : vector<2x8x96xf32> to vector<2x8x8xf32>
    %50 = vector.extract_strided_slice %33 {offsets = [0, 0, 40], sizes = [2, 8, 8], strides = [1, 1, 1]} : vector<2x8x96xf32> to vector<2x8x8xf32>
    %51 = vector.extract_strided_slice %33 {offsets = [0, 0, 72], sizes = [2, 8, 8], strides = [1, 1, 1]} : vector<2x8x96xf32> to vector<2x8x8xf32>
    "tpu.trace_start"() <{level = 10 : i32, message = "bnd,bmd->bnm"}> : () -> ()
    %cst_21 = arith.constant dense<0.000000e+00> : vector<2x8x8xf32>
    %52 = tpu.matmul %49, %50, %cst_21 {dimension_numbers = #tpu.dot_dimension_numbers<[2], [2], [1], [1], [0, 0, 0, 1, 1, 1], [0], [0]>} : vector<2x8x8xf32>, vector<2x8x8xf32>, vector<2x8x8xf32> -> vector<2x8x8xf32>
    "tpu.trace_stop"() : () -> ()
    %cst_22 = arith.constant dense<0xFF800000> : vector<2x8xf32>
    %53 = vector.multi_reduction <maximumf>, %52, %cst_22 [2] : vector<2x8x8xf32> to vector<2x8xf32>
    %54 = vector.shape_cast %53 : vector<2x8xf32> to vector<2x8x1xf32>
    %55 = vector.broadcast %54 : vector<2x8x1xf32> to vector<2x8x8xf32>
    %56 = arith.subf %52, %55 : vector<2x8x8xf32>
    %57 = math.exp %56 : vector<2x8x8xf32>
    %cst_23 = arith.constant dense<0.000000e+00> : vector<2x8xf32>
    %58 = vector.multi_reduction <add>, %57, %cst_23 [2] : vector<2x8x8xf32> to vector<2x8xf32>
    %59 = vector.shape_cast %58 : vector<2x8xf32> to vector<2x8x1xf32>
    %60 = tpu.reciprocal %59 {approx = true} : vector<2x8x1xf32> -> vector<2x8x1xf32>
    %61 = vector.broadcast %60 : vector<2x8x1xf32> to vector<2x8x8xf32>
    %62 = arith.mulf %57, %61 : vector<2x8x8xf32>
    "tpu.trace_start"() <{level = 10 : i32, message = "bnm,bmd->bnd"}> : () -> ()
    %cst_24 = arith.constant dense<0.000000e+00> : vector<2x8x8xf32>
    %63 = tpu.matmul %62, %51, %cst_24 {dimension_numbers = #tpu.dot_dimension_numbers<[2], [1], [1], [2], [0, 0, 0, 1, 1, 2], [0], [0]>} : vector<2x8x8xf32>, vector<2x8x8xf32>, vector<2x8x8xf32> -> vector<2x8x8xf32>
    "tpu.trace_stop"() : () -> ()
    %64 = vector.extract_strided_slice %33 {offsets = [0, 0, 16], sizes = [2, 8, 8], strides = [1, 1, 1]} : vector<2x8x96xf32> to vector<2x8x8xf32>
    %65 = vector.extract_strided_slice %33 {offsets = [0, 0, 48], sizes = [2, 8, 8], strides = [1, 1, 1]} : vector<2x8x96xf32> to vector<2x8x8xf32>
    %66 = vector.extract_strided_slice %33 {offsets = [0, 0, 80], sizes = [2, 8, 8], strides = [1, 1, 1]} : vector<2x8x96xf32> to vector<2x8x8xf32>
    "tpu.trace_start"() <{level = 10 : i32, message = "bnd,bmd->bnm"}> : () -> ()
    %cst_25 = arith.constant dense<0.000000e+00> : vector<2x8x8xf32>
    %67 = tpu.matmul %64, %65, %cst_25 {dimension_numbers = #tpu.dot_dimension_numbers<[2], [2], [1], [1], [0, 0, 0, 1, 1, 1], [0], [0]>} : vector<2x8x8xf32>, vector<2x8x8xf32>, vector<2x8x8xf32> -> vector<2x8x8xf32>
    "tpu.trace_stop"() : () -> ()
    %cst_26 = arith.constant dense<0xFF800000> : vector<2x8xf32>
    %68 = vector.multi_reduction <maximumf>, %67, %cst_26 [2] : vector<2x8x8xf32> to vector<2x8xf32>
    %69 = vector.shape_cast %68 : vector<2x8xf32> to vector<2x8x1xf32>
    %70 = vector.broadcast %69 : vector<2x8x1xf32> to vector<2x8x8xf32>
    %71 = arith.subf %67, %70 : vector<2x8x8xf32>
    %72 = math.exp %71 : vector<2x8x8xf32>
    %cst_27 = arith.constant dense<0.000000e+00> : vector<2x8xf32>
    %73 = vector.multi_reduction <add>, %72, %cst_27 [2] : vector<2x8x8xf32> to vector<2x8xf32>
    %74 = vector.shape_cast %73 : vector<2x8xf32> to vector<2x8x1xf32>
    %75 = tpu.reciprocal %74 {approx = true} : vector<2x8x1xf32> -> vector<2x8x1xf32>
    %76 = vector.broadcast %75 : vector<2x8x1xf32> to vector<2x8x8xf32>
    %77 = arith.mulf %72, %76 : vector<2x8x8xf32>
    "tpu.trace_start"() <{level = 10 : i32, message = "bnm,bmd->bnd"}> : () -> ()
    %cst_28 = arith.constant dense<0.000000e+00> : vector<2x8x8xf32>
    %78 = tpu.matmul %77, %66, %cst_28 {dimension_numbers = #tpu.dot_dimension_numbers<[2], [1], [1], [2], [0, 0, 0, 1, 1, 2], [0], [0]>} : vector<2x8x8xf32>, vector<2x8x8xf32>, vector<2x8x8xf32> -> vector<2x8x8xf32>
    "tpu.trace_stop"() : () -> ()
    %79 = vector.extract_strided_slice %33 {offsets = [0, 0, 24], sizes = [2, 8, 8], strides = [1, 1, 1]} : vector<2x8x96xf32> to vector<2x8x8xf32>
    %80 = vector.extract_strided_slice %33 {offsets = [0, 0, 56], sizes = [2, 8, 8], strides = [1, 1, 1]} : vector<2x8x96xf32> to vector<2x8x8xf32>
    %81 = vector.extract_strided_slice %33 {offsets = [0, 0, 88], sizes = [2, 8, 8], strides = [1, 1, 1]} : vector<2x8x96xf32> to vector<2x8x8xf32>
    "tpu.trace_start"() <{level = 10 : i32, message = "bnd,bmd->bnm"}> : () -> ()
    %cst_29 = arith.constant dense<0.000000e+00> : vector<2x8x8xf32>
    %82 = tpu.matmul %79, %80, %cst_29 {dimension_numbers = #tpu.dot_dimension_numbers<[2], [2], [1], [1], [0, 0, 0, 1, 1, 1], [0], [0]>} : vector<2x8x8xf32>, vector<2x8x8xf32>, vector<2x8x8xf32> -> vector<2x8x8xf32>
    "tpu.trace_stop"() : () -> ()
    %cst_30 = arith.constant dense<0xFF800000> : vector<2x8xf32>
    %83 = vector.multi_reduction <maximumf>, %82, %cst_30 [2] : vector<2x8x8xf32> to vector<2x8xf32>
    %84 = vector.shape_cast %83 : vector<2x8xf32> to vector<2x8x1xf32>
    %85 = vector.broadcast %84 : vector<2x8x1xf32> to vector<2x8x8xf32>
    %86 = arith.subf %82, %85 : vector<2x8x8xf32>
    %87 = math.exp %86 : vector<2x8x8xf32>
    %cst_31 = arith.constant dense<0.000000e+00> : vector<2x8xf32>
    %88 = vector.multi_reduction <add>, %87, %cst_31 [2] : vector<2x8x8xf32> to vector<2x8xf32>
    %89 = vector.shape_cast %88 : vector<2x8xf32> to vector<2x8x1xf32>
    %90 = tpu.reciprocal %89 {approx = true} : vector<2x8x1xf32> -> vector<2x8x1xf32>
    %91 = vector.broadcast %90 : vector<2x8x1xf32> to vector<2x8x8xf32>
    %92 = arith.mulf %87, %91 : vector<2x8x8xf32>
    "tpu.trace_start"() <{level = 10 : i32, message = "bnm,bmd->bnd"}> : () -> ()
    %cst_32 = arith.constant dense<0.000000e+00> : vector<2x8x8xf32>
    %93 = tpu.matmul %92, %81, %cst_32 {dimension_numbers = #tpu.dot_dimension_numbers<[2], [1], [1], [2], [0, 0, 0, 1, 1, 2], [0], [0]>} : vector<2x8x8xf32>, vector<2x8x8xf32>, vector<2x8x8xf32> -> vector<2x8x8xf32>
    "tpu.trace_stop"() : () -> ()
    %94 = tpu.concatenate %48, %63, %78, %93 in 2 : vector<2x8x8xf32>, vector<2x8x8xf32>, vector<2x8x8xf32>, vector<2x8x8xf32> -> vector<2x8x32xf32>
    %95 = vector.shape_cast %94 : vector<2x8x32xf32> to vector<16x32xf32>
    %c0_33 = arith.constant 0 : index
    %c0_34 = arith.constant 0 : index
    %c0_35 = arith.constant 0 : index
    %96 = vector.load %arg4[%c0_33, %c0_34, %c0_35] : memref<2x32x32xf32, #tpu.memory_space<vmem>>, vector<1x32x32xf32>
    %97 = vector.shape_cast %96 : vector<1x32x32xf32> to vector<32x32xf32>
    %cst_36 = arith.constant dense<0.000000e+00> : vector<16x32xf32>
    %98 = tpu.matmul %95, %97, %cst_36 {dimension_numbers = #tpu.dot_dimension_numbers<[1], [0], [0], [1], [0, 0, 1, 1], [], []>} : vector<16x32xf32>, vector<32x32xf32>, vector<16x32xf32> -> vector<16x32xf32>
    %99 = arith.addf %1, %98 : vector<16x32xf32>
    %c0_37 = arith.constant 0 : index
    %c0_38 = arith.constant 0 : index
    %c0_39 = arith.constant 0 : index
    %100 = vector.load %arg5[%c0_37, %c0_38, %c0_39] : memref<2x1x32xf32, #tpu.memory_space<vmem>>, vector<1x1x32xf32>
    %101 = vector.shape_cast %100 : vector<1x1x32xf32> to vector<1x32xf32>
    %c0_40 = arith.constant 0 : index
    %c0_41 = arith.constant 0 : index
    %c0_42 = arith.constant 0 : index
    %102 = vector.load %arg6[%c0_40, %c0_41, %c0_42] : memref<2x1x32xf32, #tpu.memory_space<vmem>>, vector<1x1x32xf32>
    %103 = vector.shape_cast %102 : vector<1x1x32xf32> to vector<1x32xf32>
    %cst_43 = arith.constant dense<0.000000e+00> : vector<16xf32>
    %104 = vector.multi_reduction <add>, %99, %cst_43 [1] : vector<16x32xf32> to vector<16xf32>
    %105 = vector.shape_cast %104 : vector<16xf32> to vector<16x1xf32>
    %cst_44 = arith.constant 3.200000e+01 : f32
    %106 = vector.broadcast %cst_44 : f32 to vector<16x1xf32>
    %107 = arith.divf %105, %106 : vector<16x1xf32>
    %108 = arith.mulf %99, %99 : vector<16x32xf32>
    %cst_45 = arith.constant dense<0.000000e+00> : vector<16xf32>
    %109 = vector.multi_reduction <add>, %108, %cst_45 [1] : vector<16x32xf32> to vector<16xf32>
    %110 = vector.shape_cast %109 : vector<16xf32> to vector<16x1xf32>
    %cst_46 = arith.constant 3.200000e+01 : f32
    %111 = vector.broadcast %cst_46 : f32 to vector<16x1xf32>
    %112 = arith.divf %110, %111 : vector<16x1xf32>
    %113 = arith.mulf %107, %107 : vector<16x1xf32>
    %114 = arith.subf %112, %113 : vector<16x1xf32>
    %cst_47 = arith.constant 0.000000e+00 : f32
    %115 = vector.broadcast %cst_47 : f32 to vector<16x1xf32>
    %116 = arith.maximumf %114, %115 : vector<16x1xf32>
    %117 = vector.broadcast %107 : vector<16x1xf32> to vector<16x32xf32>
    %118 = arith.subf %99, %117 : vector<16x32xf32>
    %cst_48 = arith.constant 9.99999974E-6 : f32
    %119 = vector.broadcast %cst_48 : f32 to vector<16x1xf32>
    %120 = arith.addf %116, %119 : vector<16x1xf32>
    %121 = math.rsqrt %120 : vector<16x1xf32>
    %122 = vector.broadcast %121 : vector<16x1xf32> to vector<16x32xf32>
    %123 = arith.mulf %118, %122 : vector<16x32xf32>
    %124 = vector.broadcast %101 : vector<1x32xf32> to vector<16x32xf32>
    %125 = arith.mulf %123, %124 : vector<16x32xf32>
    %126 = vector.broadcast %103 : vector<1x32xf32> to vector<16x32xf32>
    %127 = arith.addf %125, %126 : vector<16x32xf32>
    %c0_49 = arith.constant 0 : index
    %c0_50 = arith.constant 0 : index
    %c0_51 = arith.constant 0 : index
    %128 = vector.load %arg7[%c0_49, %c0_50, %c0_51] : memref<2x32x64xf32, #tpu.memory_space<vmem>>, vector<1x32x64xf32>
    %129 = vector.shape_cast %128 : vector<1x32x64xf32> to vector<32x64xf32>
    %cst_52 = arith.constant dense<0.000000e+00> : vector<16x64xf32>
    %130 = tpu.matmul %127, %129, %cst_52 {dimension_numbers = #tpu.dot_dimension_numbers<[1], [0], [0], [1], [0, 0, 1, 1], [], []>} : vector<16x32xf32>, vector<32x64xf32>, vector<16x64xf32> -> vector<16x64xf32>
    %c0_53 = arith.constant 0 : index
    %c0_54 = arith.constant 0 : index
    %c0_55 = arith.constant 0 : index
    %131 = vector.load %arg8[%c0_53, %c0_54, %c0_55] : memref<2x1x64xf32, #tpu.memory_space<vmem>>, vector<1x1x64xf32>
    %132 = vector.shape_cast %131 : vector<1x1x64xf32> to vector<1x64xf32>
    %133 = vector.broadcast %132 : vector<1x64xf32> to vector<16x64xf32>
    %134 = arith.addf %130, %133 : vector<16x64xf32>
    %cst_56 = arith.constant 5.000000e-01 : f32
    %135 = vector.broadcast %cst_56 : f32 to vector<16x64xf32>
    %136 = arith.mulf %135, %134 : vector<16x64xf32>
    %cst_57 = arith.constant 0.707106769 : f32
    %137 = vector.broadcast %cst_57 : f32 to vector<16x64xf32>
    %138 = arith.mulf %134, %137 : vector<16x64xf32>
    %139 = math.erf %138 : vector<16x64xf32>
    %cst_58 = arith.constant 1.000000e+00 : f32
    %140 = vector.broadcast %cst_58 : f32 to vector<16x64xf32>
    %141 = arith.addf %140, %139 : vector<16x64xf32>
    %142 = arith.mulf %136, %141 : vector<16x64xf32>
    %c0_59 = arith.constant 0 : index
    %c0_60 = arith.constant 0 : index
    %c0_61 = arith.constant 0 : index
    %143 = vector.load %arg9[%c0_59, %c0_60, %c0_61] : memref<2x64x32xf32, #tpu.memory_space<vmem>>, vector<1x64x32xf32>
    %144 = vector.shape_cast %143 : vector<1x64x32xf32> to vector<64x32xf32>
    %cst_62 = arith.constant dense<0.000000e+00> : vector<16x32xf32>
    %145 = tpu.matmul %142, %144, %cst_62 {dimension_numbers = #tpu.dot_dimension_numbers<[1], [0], [0], [1], [0, 0, 1, 1], [], []>} : vector<16x64xf32>, vector<64x32xf32>, vector<16x32xf32> -> vector<16x32xf32>
    %146 = arith.addf %99, %145 : vector<16x32xf32>
    %c0_63 = arith.constant 0 : index
    %c0_64 = arith.constant 0 : index
    %c0_65 = arith.constant 0 : index
    %147 = vector.load %arg10[%c0_63, %c0_64, %c0_65] : memref<2x1x32xf32, #tpu.memory_space<vmem>>, vector<1x1x32xf32>
    %148 = vector.shape_cast %147 : vector<1x1x32xf32> to vector<1x32xf32>
    %149 = vector.broadcast %148 : vector<1x32xf32> to vector<16x32xf32>
    %150 = arith.addf %146, %149 : vector<16x32xf32>
    %c1 = arith.constant 1 : index
    %c0_66 = arith.constant 0 : index
    %c0_67 = arith.constant 0 : index
    %151 = vector.load %arg1[%c1, %c0_66, %c0_67] : memref<2x1x32xf32, #tpu.memory_space<vmem>>, vector<1x1x32xf32>
    %152 = vector.shape_cast %151 : vector<1x1x32xf32> to vector<1x32xf32>
    %c1_68 = arith.constant 1 : index
    %c0_69 = arith.constant 0 : index
    %c0_70 = arith.constant 0 : index
    %153 = vector.load %arg2[%c1_68, %c0_69, %c0_70] : memref<2x1x32xf32, #tpu.memory_space<vmem>>, vector<1x1x32xf32>
    %154 = vector.shape_cast %153 : vector<1x1x32xf32> to vector<1x32xf32>
    %cst_71 = arith.constant dense<0.000000e+00> : vector<16xf32>
    %155 = vector.multi_reduction <add>, %150, %cst_71 [1] : vector<16x32xf32> to vector<16xf32>
    %156 = vector.shape_cast %155 : vector<16xf32> to vector<16x1xf32>
    %cst_72 = arith.constant 3.200000e+01 : f32
    %157 = vector.broadcast %cst_72 : f32 to vector<16x1xf32>
    %158 = arith.divf %156, %157 : vector<16x1xf32>
    %159 = arith.mulf %150, %150 : vector<16x32xf32>
    %cst_73 = arith.constant dense<0.000000e+00> : vector<16xf32>
    %160 = vector.multi_reduction <add>, %159, %cst_73 [1] : vector<16x32xf32> to vector<16xf32>
    %161 = vector.shape_cast %160 : vector<16xf32> to vector<16x1xf32>
    %cst_74 = arith.constant 3.200000e+01 : f32
    %162 = vector.broadcast %cst_74 : f32 to vector<16x1xf32>
    %163 = arith.divf %161, %162 : vector<16x1xf32>
    %164 = arith.mulf %158, %158 : vector<16x1xf32>
    %165 = arith.subf %163, %164 : vector<16x1xf32>
    %cst_75 = arith.constant 0.000000e+00 : f32
    %166 = vector.broadcast %cst_75 : f32 to vector<16x1xf32>
    %167 = arith.maximumf %165, %166 : vector<16x1xf32>
    %168 = vector.broadcast %158 : vector<16x1xf32> to vector<16x32xf32>
    %169 = arith.subf %150, %168 : vector<16x32xf32>
    %cst_76 = arith.constant 9.99999974E-6 : f32
    %170 = vector.broadcast %cst_76 : f32 to vector<16x1xf32>
    %171 = arith.addf %167, %170 : vector<16x1xf32>
    %172 = math.rsqrt %171 : vector<16x1xf32>
    %173 = vector.broadcast %172 : vector<16x1xf32> to vector<16x32xf32>
    %174 = arith.mulf %169, %173 : vector<16x32xf32>
    %175 = vector.broadcast %152 : vector<1x32xf32> to vector<16x32xf32>
    %176 = arith.mulf %174, %175 : vector<16x32xf32>
    %177 = vector.broadcast %154 : vector<1x32xf32> to vector<16x32xf32>
    %178 = arith.addf %176, %177 : vector<16x32xf32>
    %c1_77 = arith.constant 1 : index
    %c0_78 = arith.constant 0 : index
    %c0_79 = arith.constant 0 : index
    %179 = vector.load %arg3[%c1_77, %c0_78, %c0_79] : memref<2x32x96xf32, #tpu.memory_space<vmem>>, vector<1x32x96xf32>
    %180 = vector.shape_cast %179 : vector<1x32x96xf32> to vector<32x96xf32>
    %cst_80 = arith.constant dense<0.000000e+00> : vector<16x96xf32>
    %181 = tpu.matmul %178, %180, %cst_80 {dimension_numbers = #tpu.dot_dimension_numbers<[1], [0], [0], [1], [0, 0, 1, 1], [], []>} : vector<16x32xf32>, vector<32x96xf32>, vector<16x96xf32> -> vector<16x96xf32>
    %182 = vector.shape_cast %181 : vector<16x96xf32> to vector<2x8x96xf32>
    %183 = vector.extract_strided_slice %182 {offsets = [0, 0, 0], sizes = [2, 8, 8], strides = [1, 1, 1]} : vector<2x8x96xf32> to vector<2x8x8xf32>
    %184 = vector.extract_strided_slice %182 {offsets = [0, 0, 32], sizes = [2, 8, 8], strides = [1, 1, 1]} : vector<2x8x96xf32> to vector<2x8x8xf32>
    %185 = vector.extract_strided_slice %182 {offsets = [0, 0, 64], sizes = [2, 8, 8], strides = [1, 1, 1]} : vector<2x8x96xf32> to vector<2x8x8xf32>
    "tpu.trace_start"() <{level = 10 : i32, message = "bnd,bmd->bnm"}> : () -> ()
    %cst_81 = arith.constant dense<0.000000e+00> : vector<2x8x8xf32>
    %186 = tpu.matmul %183, %184, %cst_81 {dimension_numbers = #tpu.dot_dimension_numbers<[2], [2], [1], [1], [0, 0, 0, 1, 1, 1], [0], [0]>} : vector<2x8x8xf32>, vector<2x8x8xf32>, vector<2x8x8xf32> -> vector<2x8x8xf32>
    "tpu.trace_stop"() : () -> ()
    %cst_82 = arith.constant dense<0xFF800000> : vector<2x8xf32>
    %187 = vector.multi_reduction <maximumf>, %186, %cst_82 [2] : vector<2x8x8xf32> to vector<2x8xf32>
    %188 = vector.shape_cast %187 : vector<2x8xf32> to vector<2x8x1xf32>
    %189 = vector.broadcast %188 : vector<2x8x1xf32> to vector<2x8x8xf32>
    %190 = arith.subf %186, %189 : vector<2x8x8xf32>
    %191 = math.exp %190 : vector<2x8x8xf32>
    %cst_83 = arith.constant dense<0.000000e+00> : vector<2x8xf32>
    %192 = vector.multi_reduction <add>, %191, %cst_83 [2] : vector<2x8x8xf32> to vector<2x8xf32>
    %193 = vector.shape_cast %192 : vector<2x8xf32> to vector<2x8x1xf32>
    %194 = tpu.reciprocal %193 {approx = true} : vector<2x8x1xf32> -> vector<2x8x1xf32>
    %195 = vector.broadcast %194 : vector<2x8x1xf32> to vector<2x8x8xf32>
    %196 = arith.mulf %191, %195 : vector<2x8x8xf32>
    "tpu.trace_start"() <{level = 10 : i32, message = "bnm,bmd->bnd"}> : () -> ()
    %cst_84 = arith.constant dense<0.000000e+00> : vector<2x8x8xf32>
    %197 = tpu.matmul %196, %185, %cst_84 {dimension_numbers = #tpu.dot_dimension_numbers<[2], [1], [1], [2], [0, 0, 0, 1, 1, 2], [0], [0]>} : vector<2x8x8xf32>, vector<2x8x8xf32>, vector<2x8x8xf32> -> vector<2x8x8xf32>
    "tpu.trace_stop"() : () -> ()
    %198 = vector.extract_strided_slice %182 {offsets = [0, 0, 8], sizes = [2, 8, 8], strides = [1, 1, 1]} : vector<2x8x96xf32> to vector<2x8x8xf32>
    %199 = vector.extract_strided_slice %182 {offsets = [0, 0, 40], sizes = [2, 8, 8], strides = [1, 1, 1]} : vector<2x8x96xf32> to vector<2x8x8xf32>
    %200 = vector.extract_strided_slice %182 {offsets = [0, 0, 72], sizes = [2, 8, 8], strides = [1, 1, 1]} : vector<2x8x96xf32> to vector<2x8x8xf32>
    "tpu.trace_start"() <{level = 10 : i32, message = "bnd,bmd->bnm"}> : () -> ()
    %cst_85 = arith.constant dense<0.000000e+00> : vector<2x8x8xf32>
    %201 = tpu.matmul %198, %199, %cst_85 {dimension_numbers = #tpu.dot_dimension_numbers<[2], [2], [1], [1], [0, 0, 0, 1, 1, 1], [0], [0]>} : vector<2x8x8xf32>, vector<2x8x8xf32>, vector<2x8x8xf32> -> vector<2x8x8xf32>
    "tpu.trace_stop"() : () -> ()
    %cst_86 = arith.constant dense<0xFF800000> : vector<2x8xf32>
    %202 = vector.multi_reduction <maximumf>, %201, %cst_86 [2] : vector<2x8x8xf32> to vector<2x8xf32>
    %203 = vector.shape_cast %202 : vector<2x8xf32> to vector<2x8x1xf32>
    %204 = vector.broadcast %203 : vector<2x8x1xf32> to vector<2x8x8xf32>
    %205 = arith.subf %201, %204 : vector<2x8x8xf32>
    %206 = math.exp %205 : vector<2x8x8xf32>
    %cst_87 = arith.constant dense<0.000000e+00> : vector<2x8xf32>
    %207 = vector.multi_reduction <add>, %206, %cst_87 [2] : vector<2x8x8xf32> to vector<2x8xf32>
    %208 = vector.shape_cast %207 : vector<2x8xf32> to vector<2x8x1xf32>
    %209 = tpu.reciprocal %208 {approx = true} : vector<2x8x1xf32> -> vector<2x8x1xf32>
    %210 = vector.broadcast %209 : vector<2x8x1xf32> to vector<2x8x8xf32>
    %211 = arith.mulf %206, %210 : vector<2x8x8xf32>
    "tpu.trace_start"() <{level = 10 : i32, message = "bnm,bmd->bnd"}> : () -> ()
    %cst_88 = arith.constant dense<0.000000e+00> : vector<2x8x8xf32>
    %212 = tpu.matmul %211, %200, %cst_88 {dimension_numbers = #tpu.dot_dimension_numbers<[2], [1], [1], [2], [0, 0, 0, 1, 1, 2], [0], [0]>} : vector<2x8x8xf32>, vector<2x8x8xf32>, vector<2x8x8xf32> -> vector<2x8x8xf32>
    "tpu.trace_stop"() : () -> ()
    %213 = vector.extract_strided_slice %182 {offsets = [0, 0, 16], sizes = [2, 8, 8], strides = [1, 1, 1]} : vector<2x8x96xf32> to vector<2x8x8xf32>
    %214 = vector.extract_strided_slice %182 {offsets = [0, 0, 48], sizes = [2, 8, 8], strides = [1, 1, 1]} : vector<2x8x96xf32> to vector<2x8x8xf32>
    %215 = vector.extract_strided_slice %182 {offsets = [0, 0, 80], sizes = [2, 8, 8], strides = [1, 1, 1]} : vector<2x8x96xf32> to vector<2x8x8xf32>
    "tpu.trace_start"() <{level = 10 : i32, message = "bnd,bmd->bnm"}> : () -> ()
    %cst_89 = arith.constant dense<0.000000e+00> : vector<2x8x8xf32>
    %216 = tpu.matmul %213, %214, %cst_89 {dimension_numbers = #tpu.dot_dimension_numbers<[2], [2], [1], [1], [0, 0, 0, 1, 1, 1], [0], [0]>} : vector<2x8x8xf32>, vector<2x8x8xf32>, vector<2x8x8xf32> -> vector<2x8x8xf32>
    "tpu.trace_stop"() : () -> ()
    %cst_90 = arith.constant dense<0xFF800000> : vector<2x8xf32>
    %217 = vector.multi_reduction <maximumf>, %216, %cst_90 [2] : vector<2x8x8xf32> to vector<2x8xf32>
    %218 = vector.shape_cast %217 : vector<2x8xf32> to vector<2x8x1xf32>
    %219 = vector.broadcast %218 : vector<2x8x1xf32> to vector<2x8x8xf32>
    %220 = arith.subf %216, %219 : vector<2x8x8xf32>
    %221 = math.exp %220 : vector<2x8x8xf32>
    %cst_91 = arith.constant dense<0.000000e+00> : vector<2x8xf32>
    %222 = vector.multi_reduction <add>, %221, %cst_91 [2] : vector<2x8x8xf32> to vector<2x8xf32>
    %223 = vector.shape_cast %222 : vector<2x8xf32> to vector<2x8x1xf32>
    %224 = tpu.reciprocal %223 {approx = true} : vector<2x8x1xf32> -> vector<2x8x1xf32>
    %225 = vector.broadcast %224 : vector<2x8x1xf32> to vector<2x8x8xf32>
    %226 = arith.mulf %221, %225 : vector<2x8x8xf32>
    "tpu.trace_start"() <{level = 10 : i32, message = "bnm,bmd->bnd"}> : () -> ()
    %cst_92 = arith.constant dense<0.000000e+00> : vector<2x8x8xf32>
    %227 = tpu.matmul %226, %215, %cst_92 {dimension_numbers = #tpu.dot_dimension_numbers<[2], [1], [1], [2], [0, 0, 0, 1, 1, 2], [0], [0]>} : vector<2x8x8xf32>, vector<2x8x8xf32>, vector<2x8x8xf32> -> vector<2x8x8xf32>
    "tpu.trace_stop"() : () -> ()
    %228 = vector.extract_strided_slice %182 {offsets = [0, 0, 24], sizes = [2, 8, 8], strides = [1, 1, 1]} : vector<2x8x96xf32> to vector<2x8x8xf32>
    %229 = vector.extract_strided_slice %182 {offsets = [0, 0, 56], sizes = [2, 8, 8], strides = [1, 1, 1]} : vector<2x8x96xf32> to vector<2x8x8xf32>
    %230 = vector.extract_strided_slice %182 {offsets = [0, 0, 88], sizes = [2, 8, 8], strides = [1, 1, 1]} : vector<2x8x96xf32> to vector<2x8x8xf32>
    "tpu.trace_start"() <{level = 10 : i32, message = "bnd,bmd->bnm"}> : () -> ()
    %cst_93 = arith.constant dense<0.000000e+00> : vector<2x8x8xf32>
    %231 = tpu.matmul %228, %229, %cst_93 {dimension_numbers = #tpu.dot_dimension_numbers<[2], [2], [1], [1], [0, 0, 0, 1, 1, 1], [0], [0]>} : vector<2x8x8xf32>, vector<2x8x8xf32>, vector<2x8x8xf32> -> vector<2x8x8xf32>
    "tpu.trace_stop"() : () -> ()
    %cst_94 = arith.constant dense<0xFF800000> : vector<2x8xf32>
    %232 = vector.multi_reduction <maximumf>, %231, %cst_94 [2] : vector<2x8x8xf32> to vector<2x8xf32>
    %233 = vector.shape_cast %232 : vector<2x8xf32> to vector<2x8x1xf32>
    %234 = vector.broadcast %233 : vector<2x8x1xf32> to vector<2x8x8xf32>
    %235 = arith.subf %231, %234 : vector<2x8x8xf32>
    %236 = math.exp %235 : vector<2x8x8xf32>
    %cst_95 = arith.constant dense<0.000000e+00> : vector<2x8xf32>
    %237 = vector.multi_reduction <add>, %236, %cst_95 [2] : vector<2x8x8xf32> to vector<2x8xf32>
    %238 = vector.shape_cast %237 : vector<2x8xf32> to vector<2x8x1xf32>
    %239 = tpu.reciprocal %238 {approx = true} : vector<2x8x1xf32> -> vector<2x8x1xf32>
    %240 = vector.broadcast %239 : vector<2x8x1xf32> to vector<2x8x8xf32>
    %241 = arith.mulf %236, %240 : vector<2x8x8xf32>
    "tpu.trace_start"() <{level = 10 : i32, message = "bnm,bmd->bnd"}> : () -> ()
    %cst_96 = arith.constant dense<0.000000e+00> : vector<2x8x8xf32>
    %242 = tpu.matmul %241, %230, %cst_96 {dimension_numbers = #tpu.dot_dimension_numbers<[2], [1], [1], [2], [0, 0, 0, 1, 1, 2], [0], [0]>} : vector<2x8x8xf32>, vector<2x8x8xf32>, vector<2x8x8xf32> -> vector<2x8x8xf32>
    "tpu.trace_stop"() : () -> ()
    %243 = tpu.concatenate %197, %212, %227, %242 in 2 : vector<2x8x8xf32>, vector<2x8x8xf32>, vector<2x8x8xf32>, vector<2x8x8xf32> -> vector<2x8x32xf32>
    %244 = vector.shape_cast %243 : vector<2x8x32xf32> to vector<16x32xf32>
    %c1_97 = arith.constant 1 : index
    %c0_98 = arith.constant 0 : index
    %c0_99 = arith.constant 0 : index
    %245 = vector.load %arg4[%c1_97, %c0_98, %c0_99] : memref<2x32x32xf32, #tpu.memory_space<vmem>>, vector<1x32x32xf32>
    %246 = vector.shape_cast %245 : vector<1x32x32xf32> to vector<32x32xf32>
    %cst_100 = arith.constant dense<0.000000e+00> : vector<16x32xf32>
    %247 = tpu.matmul %244, %246, %cst_100 {dimension_numbers = #tpu.dot_dimension_numbers<[1], [0], [0], [1], [0, 0, 1, 1], [], []>} : vector<16x32xf32>, vector<32x32xf32>, vector<16x32xf32> -> vector<16x32xf32>
    %248 = arith.addf %150, %247 : vector<16x32xf32>
    %c1_101 = arith.constant 1 : index
    %c0_102 = arith.constant 0 : index
    %c0_103 = arith.constant 0 : index
    %249 = vector.load %arg5[%c1_101, %c0_102, %c0_103] : memref<2x1x32xf32, #tpu.memory_space<vmem>>, vector<1x1x32xf32>
    %250 = vector.shape_cast %249 : vector<1x1x32xf32> to vector<1x32xf32>
    %c1_104 = arith.constant 1 : index
    %c0_105 = arith.constant 0 : index
    %c0_106 = arith.constant 0 : index
    %251 = vector.load %arg6[%c1_104, %c0_105, %c0_106] : memref<2x1x32xf32, #tpu.memory_space<vmem>>, vector<1x1x32xf32>
    %252 = vector.shape_cast %251 : vector<1x1x32xf32> to vector<1x32xf32>
    %cst_107 = arith.constant dense<0.000000e+00> : vector<16xf32>
    %253 = vector.multi_reduction <add>, %248, %cst_107 [1] : vector<16x32xf32> to vector<16xf32>
    %254 = vector.shape_cast %253 : vector<16xf32> to vector<16x1xf32>
    %cst_108 = arith.constant 3.200000e+01 : f32
    %255 = vector.broadcast %cst_108 : f32 to vector<16x1xf32>
    %256 = arith.divf %254, %255 : vector<16x1xf32>
    %257 = arith.mulf %248, %248 : vector<16x32xf32>
    %cst_109 = arith.constant dense<0.000000e+00> : vector<16xf32>
    %258 = vector.multi_reduction <add>, %257, %cst_109 [1] : vector<16x32xf32> to vector<16xf32>
    %259 = vector.shape_cast %258 : vector<16xf32> to vector<16x1xf32>
    %cst_110 = arith.constant 3.200000e+01 : f32
    %260 = vector.broadcast %cst_110 : f32 to vector<16x1xf32>
    %261 = arith.divf %259, %260 : vector<16x1xf32>
    %262 = arith.mulf %256, %256 : vector<16x1xf32>
    %263 = arith.subf %261, %262 : vector<16x1xf32>
    %cst_111 = arith.constant 0.000000e+00 : f32
    %264 = vector.broadcast %cst_111 : f32 to vector<16x1xf32>
    %265 = arith.maximumf %263, %264 : vector<16x1xf32>
    %266 = vector.broadcast %256 : vector<16x1xf32> to vector<16x32xf32>
    %267 = arith.subf %248, %266 : vector<16x32xf32>
    %cst_112 = arith.constant 9.99999974E-6 : f32
    %268 = vector.broadcast %cst_112 : f32 to vector<16x1xf32>
    %269 = arith.addf %265, %268 : vector<16x1xf32>
    %270 = math.rsqrt %269 : vector<16x1xf32>
    %271 = vector.broadcast %270 : vector<16x1xf32> to vector<16x32xf32>
    %272 = arith.mulf %267, %271 : vector<16x32xf32>
    %273 = vector.broadcast %250 : vector<1x32xf32> to vector<16x32xf32>
    %274 = arith.mulf %272, %273 : vector<16x32xf32>
    %275 = vector.broadcast %252 : vector<1x32xf32> to vector<16x32xf32>
    %276 = arith.addf %274, %275 : vector<16x32xf32>
    %c1_113 = arith.constant 1 : index
    %c0_114 = arith.constant 0 : index
    %c0_115 = arith.constant 0 : index
    %277 = vector.load %arg7[%c1_113, %c0_114, %c0_115] : memref<2x32x64xf32, #tpu.memory_space<vmem>>, vector<1x32x64xf32>
    %278 = vector.shape_cast %277 : vector<1x32x64xf32> to vector<32x64xf32>
    %cst_116 = arith.constant dense<0.000000e+00> : vector<16x64xf32>
    %279 = tpu.matmul %276, %278, %cst_116 {dimension_numbers = #tpu.dot_dimension_numbers<[1], [0], [0], [1], [0, 0, 1, 1], [], []>} : vector<16x32xf32>, vector<32x64xf32>, vector<16x64xf32> -> vector<16x64xf32>
    %c1_117 = arith.constant 1 : index
    %c0_118 = arith.constant 0 : index
    %c0_119 = arith.constant 0 : index
    %280 = vector.load %arg8[%c1_117, %c0_118, %c0_119] : memref<2x1x64xf32, #tpu.memory_space<vmem>>, vector<1x1x64xf32>
    %281 = vector.shape_cast %280 : vector<1x1x64xf32> to vector<1x64xf32>
    %282 = vector.broadcast %281 : vector<1x64xf32> to vector<16x64xf32>
    %283 = arith.addf %279, %282 : vector<16x64xf32>
    %cst_120 = arith.constant 5.000000e-01 : f32
    %284 = vector.broadcast %cst_120 : f32 to vector<16x64xf32>
    %285 = arith.mulf %284, %283 : vector<16x64xf32>
    %cst_121 = arith.constant 0.707106769 : f32
    %286 = vector.broadcast %cst_121 : f32 to vector<16x64xf32>
    %287 = arith.mulf %283, %286 : vector<16x64xf32>
    %288 = math.erf %287 : vector<16x64xf32>
    %cst_122 = arith.constant 1.000000e+00 : f32
    %289 = vector.broadcast %cst_122 : f32 to vector<16x64xf32>
    %290 = arith.addf %289, %288 : vector<16x64xf32>
    %291 = arith.mulf %285, %290 : vector<16x64xf32>
    %c1_123 = arith.constant 1 : index
    %c0_124 = arith.constant 0 : index
    %c0_125 = arith.constant 0 : index
    %292 = vector.load %arg9[%c1_123, %c0_124, %c0_125] : memref<2x64x32xf32, #tpu.memory_space<vmem>>, vector<1x64x32xf32>
    %293 = vector.shape_cast %292 : vector<1x64x32xf32> to vector<64x32xf32>
    %cst_126 = arith.constant dense<0.000000e+00> : vector<16x32xf32>
    %294 = tpu.matmul %291, %293, %cst_126 {dimension_numbers = #tpu.dot_dimension_numbers<[1], [0], [0], [1], [0, 0, 1, 1], [], []>} : vector<16x64xf32>, vector<64x32xf32>, vector<16x32xf32> -> vector<16x32xf32>
    %295 = arith.addf %248, %294 : vector<16x32xf32>
    %c1_127 = arith.constant 1 : index
    %c0_128 = arith.constant 0 : index
    %c0_129 = arith.constant 0 : index
    %296 = vector.load %arg10[%c1_127, %c0_128, %c0_129] : memref<2x1x32xf32, #tpu.memory_space<vmem>>, vector<1x1x32xf32>
    %297 = vector.shape_cast %296 : vector<1x1x32xf32> to vector<1x32xf32>
    %298 = vector.broadcast %297 : vector<1x32xf32> to vector<16x32xf32>
    %299 = arith.addf %295, %298 : vector<16x32xf32>
    %300 = vector.shape_cast %299 : vector<16x32xf32> to vector<2x8x32xf32>
    %c0_130 = arith.constant 0 : index
    %c0_131 = arith.constant 0 : index
    %c0_132 = arith.constant 0 : index
    %301 = vector.load %arg11[%c0_130, %c0_131, %c0_132] : memref<2x8x32xf32, #tpu.memory_space<vmem>>, vector<2x8x32xf32>
    tpu.vector_store %arg11[%c0_130, %c0_131, %c0_132], %300 {strides = array<i32>} : memref<2x8x32xf32, #tpu.memory_space<vmem>>, vector<2x8x32xf32>,
    return
  }
}

</mosaic_0001>

<llo_original>
// kernel: tpu_custom_call.1
$region0: #{tpu_custom_call.1}
  #allocation0 [shape = 'u32[]', space=smem, size = 0x4, offset = 0x4, fixed_abs, tag = 'smem constant byte address 0x4 - core index']
  #allocation1 [shape = 'u32[144,128]{1,0:T(1,128)}', space=vmem, size = 0x12000, scoped, tag = 'internal scratch']
  %s0 = inlined_call_operand.hbm [shape: f32[2,8,32], index: 0, kind: input, shape index: {}]
  %s1 = inlined_call_operand.vmem [shape: f32[2,1,32], index: 1, kind: input, shape index: {}]
  %s2 = inlined_call_operand.vmem [shape: f32[2,1,32], index: 2, kind: input, shape index: {}]
  %s3 = inlined_call_operand.vmem [shape: f32[2,32,96], index: 3, kind: input, shape index: {}]
  %s4 = inlined_call_operand.vmem [shape: f32[2,32,32], index: 4, kind: input, shape index: {}]
  %s5 = inlined_call_operand.vmem [shape: f32[2,1,32], index: 5, kind: input, shape index: {}]
  %s6 = inlined_call_operand.vmem [shape: f32[2,1,32], index: 6, kind: input, shape index: {}]
  %s7 = inlined_call_operand.vmem [shape: f32[2,32,64], index: 7, kind: input, shape index: {}]
  %s8 = inlined_call_operand.vmem [shape: f32[2,1,64], index: 8, kind: input, shape index: {}]
  %s9 = inlined_call_operand.vmem [shape: f32[2,64,32], index: 9, kind: input, shape index: {}]
  %s10 = inlined_call_operand.vmem [shape: f32[2,1,32], index: 10, kind: input, shape index: {}]
  %s11 = inlined_call_operand.hbm [shape: f32[2,8,32], index: 11, kind: output, shape index: {}]
  %s12 = sld [smem:[#allocation0]]
  $region58: #{tpu_custom_call.1} parent=0
    _
  %s14 = ssub.s32 1, %s12
  %s15 = scalar_select 0, %s14, %s12
  $region1: #{tpu_custom_call.1} parent=0
    #allocation2 [shape = 'u8[8192]{0}', space=vmem, size = 0x2000, scoped, tag = 'input window, operand 0, single buffered']
    #allocation3 [shape = 's32[1]{0}', space=sflag, size = 0x4, scoped, tag = 'scoped memory for tpu_custom_call.1']
    #allocation4 [shape = 's32[1]{0}', space=sflag, size = 0x4, scoped, tag = 'scoped memory for tpu_custom_call.1']
    #allocation5 [shape = 'u8[8192]{0}', space=vmem, size = 0x2000, scoped, tag = 'output window, operand 0, single buffered']
    %16 = vsyncpa [#allocation3], 0
    %17 = vsyncpa [#allocation4], 0
    // Predicated region
    $region2: #{tpu_custom_call.1} parent=1 // pred_check
      _
    $region3: #{tpu_custom_call.1} parent=1 // pred_check_branch
      %19 = sbr.rel (0) target = $region5
    $region4: #{tpu_custom_call.1} parent=1 // pred_region
      %s21 = ssub.s32 256, 256
      %22 = vsyncadd [#allocation3], %s21
      %s23 = sshll.u32 [#allocation2], 4
      %s24 = int_to_ptr.vmem [resolvable:$true] %s23
      %29 = dma.hbm_to_vmem [thread:$0]  %s0, 256, %s24, [#allocation3], 128, 128, 8
    $region5: #{tpu_custom_call.1} parent=1 // pred_fallthru
      _
    // Predicated region
    $region6: #{tpu_custom_call.1} parent=1 // pred_check
      _
    $region7: #{tpu_custom_call.1} parent=1 // pred_check_branch
      %31 = sbr.rel (0) target = $region9
    $region8: #{tpu_custom_call.1} parent=1 // pred_region
      _
    $region9: #{tpu_custom_call.1} parent=1 // pred_fallthru
      _
    // Predicated region
    $region10: #{tpu_custom_call.1} parent=1 // pred_check
      _
    $region11: #{tpu_custom_call.1} parent=1 // pred_check_branch
      %33 = sbr.rel (0) target = $region13
    $region12: #{tpu_custom_call.1} parent=1 // pred_region
      _
    $region13: #{tpu_custom_call.1} parent=1 // pred_fallthru
      _
    // Predicated region
    $region14: #{tpu_custom_call.1} parent=1 // pred_check
      _
    $region15: #{tpu_custom_call.1} parent=1 // pred_check_branch
      %35 = sbr.rel (0) target = $region17
    $region16: #{tpu_custom_call.1} parent=1 // pred_region
      _
    $region17: #{tpu_custom_call.1} parent=1 // pred_fallthru
      _
    // Predicated region
    $region18: #{tpu_custom_call.1} parent=1 // pred_check
      _
    $region19: #{tpu_custom_call.1} parent=1 // pred_check_branch
      %37 = sbr.rel (0) target = $region21
    $region20: #{tpu_custom_call.1} parent=1 // pred_region
      _
    $region21: #{tpu_custom_call.1} parent=1 // pred_fallthru
      _
    // Predicated region
    $region22: #{tpu_custom_call.1} parent=1 // pred_check
      _
    $region23: #{tpu_custom_call.1} parent=1 // pred_check_branch
      %39 = sbr.rel (0) target = $region25
    $region24: #{tpu_custom_call.1} parent=1 // pred_region
      _
    $region25: #{tpu_custom_call.1} parent=1 // pred_fallthru
      _
    // Predicated region
    $region26: #{tpu_custom_call.1} parent=1 // pred_check
      _
    $region27: #{tpu_custom_call.1} parent=1 // pred_check_branch
      %41 = sbr.rel (0) target = $region29
    $region28: #{tpu_custom_call.1} parent=1 // pred_region
      _
    $region29: #{tpu_custom_call.1} parent=1 // pred_fallthru
      _
    // Predicated region
    $region30: #{tpu_custom_call.1} parent=1 // pred_check
      _
    $region31: #{tpu_custom_call.1} parent=1 // pred_check_branch
      %43 = sbr.rel (0) target = $region33
    $region32: #{tpu_custom_call.1} parent=1 // pred_region
      _
    $region33: #{tpu_custom_call.1} parent=1 // pred_fallthru
      _
    // Predicated region
    $region34: #{tpu_custom_call.1} parent=1 // pred_check
      _
    $region35: #{tpu_custom_call.1} parent=1 // pred_check_branch
      %45 = sbr.rel (0) target = $region37
    $region36: #{tpu_custom_call.1} parent=1 // pred_region
      _
    $region37: #{tpu_custom_call.1} parent=1 // pred_fallthru
      _
    // Predicated region
    $region38: #{tpu_custom_call.1} parent=1 // pred_check
      _
    $region39: #{tpu_custom_call.1} parent=1 // pred_check_branch
      %47 = sbr.rel (0) target = $region41
    $region40: #{tpu_custom_call.1} parent=1 // pred_region
      _
    $region41: #{tpu_custom_call.1} parent=1 // pred_fallthru
      _
    // Predicated region
    $region42: #{tpu_custom_call.1} parent=1 // pred_check
      _
    $region43: #{tpu_custom_call.1} parent=1 // pred_check_branch
      %49 = sbr.rel (0) target = $region45
    $region44: #{tpu_custom_call.1} parent=1 // pred_region
      _
    $region45: #{tpu_custom_call.1} parent=1 // pred_fallthru
      _
    // Predicated region
    $region46: #{tpu_custom_call.1} parent=1 // pred_check
      _
    $region47: #{tpu_custom_call.1} parent=1 // pred_check_branch
      %51 = sbr.rel (0) target = $region49
    $region48: #{tpu_custom_call.1} parent=1 // pred_region
      %52 = dma.done [#allocation3], 256
    $region49: #{tpu_custom_call.1} parent=1 // pred_fallthru
      _
    %v53 = vld [vmem:[#allocation2] sm:$0xff]
    %v54 = vld [vmem:[#allocation2 + $0x8] sm:$0xff]
    %v55 = vld [vmem:[%s1] sm:$0x1]
    %v56 = vld [vmem:[%s2] sm:$0x1]
    %vm57 = vcmask 261120
    %v58 = vsel %vm57, %v53, 0.0
    %59 = vadd.xlane.f32.xlu0 %v58
    %v60 = vpop.xlane.xlu0 %59
    %v61 = vsel %vm57, %v54, 0.0
    %62 = vadd.xlane.f32.xlu0 %v61
    %v63 = vpop.xlane.xlu0 %62
    %v64 = vrcp.pop 32.0
    %v65 = vmul.f32 %v60, %v64
    %v66 = vmul.f32 %v63, %v64
    %v67 = vmul.f32 %v53, %v53
    %v68 = vmul.f32 %v54, %v54
    %v69 = vsel %vm57, %v67, 0.0
    %70 = vadd.xlane.f32.xlu0 %v69
    %v71 = vpop.xlane.xlu0 %70
    %v72 = vsel %vm57, %v68, 0.0
    %73 = vadd.xlane.f32.xlu0 %v72
    %v74 = vpop.xlane.xlu0 %73
    %v75 = vmul.f32 %v71, %v64
    %v76 = vmul.f32 %v74, %v64
    %v77 = vmul.f32 %v65, %v65
    %v78 = vmul.f32 %v66, %v66
    %v79 = vsub.f32 %v75, %v77
    %v80 = vsub.f32 %v76, %v78
    %v81 = vmax.f32 %v79, 0.0
    %v82 = vmax.f32 %v80, 0.0
    %v83 = vsub.f32 %v53, %v65
    %v84 = vsub.f32 %v54, %v66
    %v85 = vadd.f32 %v81, 1e-05
    %v86 = vadd.f32 %v82, 1e-05
    %v87 = vrsqrt.pop %v85
    %v88 = vrsqrt.pop %v86
    %v89 = vmul.f32 %v83, %v87
    %v90 = vmul.f32 %v84, %v88
    %v92 = vlaneseq
    %v93 = vshrl.u32 %v92, 7
    %v94 = vsub.s32 0, %v93
    %v95 = vrot.slane %v55, %v94
    %v97 = vmul.f32 %v89, %v95
    %v98 = vmul.f32 %v90, %v95
    %v100 = vlaneseq
    %v101 = vshrl.u32 %v100, 7
    %v102 = vsub.s32 0, %v101
    %v103 = vrot.slane %v56, %v102
    %v105 = vadd.f32 %v97, %v103
    %v106 = vadd.f32 %v98, %v103
    %v107 = vld [vmem:[%s3] sm:$0xff]
    %v108 = vld [vmem:[%s3 + $0x8] sm:$0xff]
    %v109 = vld [vmem:[%s3 + $0x10] sm:$0xff]
    %v110 = vld [vmem:[%s3 + $0x18] sm:$0xff]
    %v112 = vsel %vm57, %v105, 0
    %v115 = vsel %vm57, %v106, 0
    %117 = vmatprep.subr.mxu0 0.0
    %118 = vmatpush1.msra.mxu0 %v107
    %119 = vmatprep.subr.mxu0 0.0
    %120 = vmatpush1.msra.mxu0 %v108
    %121 = vmatprep.subr.mxu0 0.0
    %122 = vmatpush1.msra.mxu0 %v109
    %123 = vmatprep.subr.mxu0 0.0
    %124 = vmatpush1.msra.mxu0 %v110
    %125 = vmatprep.subr.mxu0 0.0
    %126 = vmatpush1.msra.mxu0 0.0
    %127 = vmatprep.subr.mxu0 0.0
    %128 = vmatpush1.msra.mxu0 0.0
    %129 = vmatprep.subr.mxu0 0.0
    %130 = vmatpush1.msra.mxu0 0.0
    %131 = vmatprep.subr.mxu0 0.0
    %132 = vmatpush1.msra.mxu0 0.0
    %133 = vmatprep.subr.mxu0 0.0
    %134 = vmatpush1.msra.mxu0 0.0
    %135 = vmatprep.subr.mxu0 0.0
    %136 = vmatpush1.msra.mxu0 0.0
    %137 = vmatprep.subr.mxu0 0.0
    %138 = vmatpush1.msra.mxu0 0.0
    %139 = vmatprep.subr.mxu0 0.0
    %140 = vmatpush1.msra.mxu0 0.0
    %141 = vmatprep.subr.mxu0 0.0
    %142 = vmatpush1.msra.mxu0 0.0
    %143 = vmatprep.subr.mxu0 0.0
    %144 = vmatpush1.msra.mxu0 0.0
    %145 = vmatprep.subr.mxu0 0.0
    %146 = vmatpush1.msra.mxu0 0.0
    %147 = vmatprep.subr.mxu0 0.0
    %148 = vmatpush1.msra.mxu0 0.0
    %149 = vmatprep.subr.mxu0 0.0
    %150 = vmatpush1.msra.mxu0 0.0
    %151 = vmatprep.subr.mxu0 0.0
    %152 = vmatpush1.msra.mxu0 0.0
    %153 = vmatprep.subr.mxu0 0.0
    %154 = vmatpush1.msra.mxu0 0.0
    %155 = vmatprep.subr.mxu0 0.0
    %156 = vmatpush1.msra.mxu0 0.0
    %157 = vmatprep.subr.mxu0 0.0
    %158 = vmatpush1.msra.mxu0 0.0
    %159 = vmatprep.subr.mxu0 0.0
    %160 = vmatpush1.msra.mxu0 0.0
    %161 = vmatprep.subr.mxu0 0.0
    %162 = vmatpush1.msra.mxu0 0.0
    %163 = vmatprep.subr.mxu0 0.0
    %164 = vmatpush1.msra.mxu0 0.0
    %165 = vmatprep.subr.mxu0 0.0
    %166 = vmatpush1.msra.mxu0 0.0
    %167 = vmatprep.subr.mxu0 0.0
    %168 = vmatpush1.msra.mxu0 0.0
    %169 = vmatprep.subr.mxu0 0.0
    %170 = vmatpush1.msra.mxu0 0.0
    %171 = vmatprep.subr.mxu0 0.0
    %172 = vmatpush1.msra.mxu0 0.0
    %173 = vmatprep.subr.mxu0 0.0
    %174 = vmatpush1.msra.mxu0 0.0
    %175 = vmatprep.subr.mxu0 0.0
    %176 = vmatpush1.msra.mxu0 0.0
    %177 = vmatprep.subr.mxu0 0.0
    %178 = vmatpush1.msra.mxu0 0.0
    %179 = vmatprep.subr.mxu0 0.0
    %180 = vmatpush1.msra.mxu0 0.0
    %181 = vmatprep.mubr.f32.mxu0 0.0
    %182 = vmatmul.mubr.f32.gmra.mrb[0].mxu0 %v112
    %v183 = vpop.f32.mrb[0].mxu0
    %v184 = vadd.f32 0.0, %v183
    %v185 = vpop.f32.mrb[0].mxu0
    %186 = vmatprep.mubr.f32.mxu0 0.0
    %187 = vmatmul.mubr.f32.gmra.mrb[0].mxu0 %v115
    %v188 = vpop.f32.mrb[0].mxu0
    %v189 = vadd.f32 0.0, %v188
    %v190 = vpop.f32.mrb[0].mxu0
    %191 = vdwg.mxu0
    %193 = vrot.lane.b32.xlu0 %v184, 96
    %v194 = vpop.permute.xlu0 %193
    %vm195 = vcmask 64512
    %v196 = vsel %vm195, %v184, 0
    %v198 = vsel %vm195, %v194, 0
    %200 = vmatprep.subr.mxu0 0.0
    %201 = vmatpush1.xpose.msra.mxu0 %v198
    %202 = vmatprep.subr.mxu0 0.0
    %203 = vmatpush1.xpose.msra.mxu0 0.0
    %204 = vmatprep.subr.mxu0 0.0
    %205 = vmatpush1.xpose.msra.mxu0 0.0
    %206 = vmatprep.subr.mxu0 0.0
    %207 = vmatpush1.xpose.msra.mxu0 0.0
    %208 = vmatprep.subr.mxu0 0.0
    %209 = vmatpush1.xpose.msra.mxu0 0.0
    %210 = vmatprep.subr.mxu0 0.0
    %211 = vmatpush1.xpose.msra.mxu0 0.0
    %212 = vmatprep.subr.mxu0 0.0
    %213 = vmatpush1.xpose.msra.mxu0 0.0
    %214 = vmatprep.subr.mxu0 0.0
    %215 = vmatpush1.xpose.msra.mxu0 0.0
    %216 = vmatprep.subr.mxu0 0.0
    %217 = vmatpush1.xpose.msra.mxu0 0.0
    %218 = vmatprep.subr.mxu0 0.0
    %219 = vmatpush1.xpose.msra.mxu0 0.0
    %220 = vmatprep.subr.mxu0 0.0
    %221 = vmatpush1.xpose.msra.mxu0 0.0
    %222 = vmatprep.subr.mxu0 0.0
    %223 = vmatpush1.xpose.msra.mxu0 0.0
    %224 = vmatprep.subr.mxu0 0.0
    %225 = vmatpush1.xpose.msra.mxu0 0.0
    %226 = vmatprep.subr.mxu0 0.0
    %227 = vmatpush1.xpose.msra.mxu0 0.0
    %228 = vmatprep.subr.mxu0 0.0
    %229 = vmatpush1.xpose.msra.mxu0 0.0
    %230 = vmatprep.subr.mxu0 0.0
    %231 = vmatpush1.xpose.msra.mxu0 0.0
    %232 = vmatprep.subr.mxu0 0.0
    %233 = vmatpush1.xpose.msra.mxu0 0.0
    %234 = vmatprep.subr.mxu0 0.0
    %235 = vmatpush1.xpose.msra.mxu0 0.0
    %236 = vmatprep.subr.mxu0 0.0
    %237 = vmatpush1.xpose.msra.mxu0 0.0
    %238 = vmatprep.subr.mxu0 0.0
    %239 = vmatpush1.xpose.msra.mxu0 0.0
    %240 = vmatprep.subr.mxu0 0.0
    %241 = vmatpush1.xpose.msra.mxu0 0.0
    %242 = vmatprep.subr.mxu0 0.0
    %243 = vmatpush1.xpose.msra.mxu0 0.0
    %244 = vmatprep.subr.mxu0 0.0
    %245 = vmatpush1.xpose.msra.mxu0 0.0
    %246 = vmatprep.subr.mxu0 0.0
    %247 = vmatpush1.xpose.msra.mxu0 0.0
    %248 = vmatprep.subr.mxu0 0.0
    %249 = vmatpush1.xpose.msra.mxu0 0.0
    %250 = vmatprep.subr.mxu0 0.0
    %251 = vmatpush1.xpose.msra.mxu0 0.0
    %252 = vmatprep.subr.mxu0 0.0
    %253 = vmatpush1.xpose.msra.mxu0 0.0
    %254 = vmatprep.subr.mxu0 0.0
    %255 = vmatpush1.xpose.msra.mxu0 0.0
    %256 = vmatprep.subr.mxu0 0.0
    %257 = vmatpush1.xpose.msra.mxu0 0.0
    %258 = vmatprep.subr.mxu0 0.0
    %259 = vmatpush1.xpose.msra.mxu0 0.0
    %260 = vmatprep.subr.mxu0 0.0
    %261 = vmatpush1.xpose.msra.mxu0 0.0
    %262 = vmatprep.subr.mxu0 0.0
    %263 = vmatpush1.xpose.msra.mxu0 0.0
    %264 = vmatprep.mubr.f32.mxu0 0.0
    %265 = vmatmul.mubr.f32.gmra.mrb[0].mxu0 %v196
    %v266 = vpop.f32.mrb[0].mxu0
    %v267 = vadd.f32 0.0, %v266
    %v268 = vpop.f32.mrb[0].mxu0
    %269 = vdwg.mxu0
    %271 = vrot.lane.b32.xlu0 %v189, 96
    %v272 = vpop.permute.xlu0 %271
    %v273 = vsel %vm195, %v189, 0
    %v275 = vsel %vm195, %v272, 0
    %277 = vmatprep.subr.mxu0 0.0
    %278 = vmatpush1.xpose.msra.mxu0 %v275
    %279 = vmatprep.subr.mxu0 0.0
    %280 = vmatpush1.xpose.msra.mxu0 0.0
    %281 = vmatprep.subr.mxu0 0.0
    %282 = vmatpush1.xpose.msra.mxu0 0.0
    %283 = vmatprep.subr.mxu0 0.0
    %284 = vmatpush1.xpose.msra.mxu0 0.0
    %285 = vmatprep.subr.mxu0 0.0
    %286 = vmatpush1.xpose.msra.mxu0 0.0
    %287 = vmatprep.subr.mxu0 0.0
    %288 = vmatpush1.xpose.msra.mxu0 0.0
    %289 = vmatprep.subr.mxu0 0.0
    %290 = vmatpush1.xpose.msra.mxu0 0.0
    %291 = vmatprep.subr.mxu0 0.0
    %292 = vmatpush1.xpose.msra.mxu0 0.0
    %293 = vmatprep.subr.mxu0 0.0
    %294 = vmatpush1.xpose.msra.mxu0 0.0
    %295 = vmatprep.subr.mxu0 0.0
    %296 = vmatpush1.xpose.msra.mxu0 0.0
    %297 = vmatprep.subr.mxu0 0.0
    %298 = vmatpush1.xpose.msra.mxu0 0.0
    %299 = vmatprep.subr.mxu0 0.0
    %300 = vmatpush1.xpose.msra.mxu0 0.0
    %301 = vmatprep.subr.mxu0 0.0
    %302 = vmatpush1.xpose.msra.mxu0 0.0
    %303 = vmatprep.subr.mxu0 0.0
    %304 = vmatpush1.xpose.msra.mxu0 0.0
    %305 = vmatprep.subr.mxu0 0.0
    %306 = vmatpush1.xpose.msra.mxu0 0.0
    %307 = vmatprep.subr.mxu0 0.0
    %308 = vmatpush1.xpose.msra.mxu0 0.0
    %309 = vmatprep.subr.mxu0 0.0
    %310 = vmatpush1.xpose.msra.mxu0 0.0
    %311 = vmatprep.subr.mxu0 0.0
    %312 = vmatpush1.xpose.msra.mxu0 0.0
    %313 = vmatprep.subr.mxu0 0.0
    %314 = vmatpush1.xpose.msra.mxu0 0.0
    %315 = vmatprep.subr.mxu0 0.0
    %316 = vmatpush1.xpose.msra.mxu0 0.0
    %317 = vmatprep.subr.mxu0 0.0
    %318 = vmatpush1.xpose.msra.mxu0 0.0
    %319 = vmatprep.subr.mxu0 0.0
    %320 = vmatpush1.xpose.msra.mxu0 0.0
    %321 = vmatprep.subr.mxu0 0.0
    %322 = vmatpush1.xpose.msra.mxu0 0.0
    %323 = vmatprep.subr.mxu0 0.0
    %324 = vmatpush1.xpose.msra.mxu0 0.0
    %325 = vmatprep.subr.mxu0 0.0
    %326 = vmatpush1.xpose.msra.mxu0 0.0
    %327 = vmatprep.subr.mxu0 0.0
    %328 = vmatpush1.xpose.msra.mxu0 0.0
    %329 = vmatprep.subr.mxu0 0.0
    %330 = vmatpush1.xpose.msra.mxu0 0.0
    %331 = vmatprep.subr.mxu0 0.0
    %332 = vmatpush1.xpose.msra.mxu0 0.0
    %333 = vmatprep.subr.mxu0 0.0
    %334 = vmatpush1.xpose.msra.mxu0 0.0
    %335 = vmatprep.subr.mxu0 0.0
    %336 = vmatpush1.xpose.msra.mxu0 0.0
    %337 = vmatprep.subr.mxu0 0.0
    %338 = vmatpush1.xpose.msra.mxu0 0.0
    %339 = vmatprep.subr.mxu0 0.0
    %340 = vmatpush1.xpose.msra.mxu0 0.0
    %341 = vmatprep.mubr.f32.mxu0 0.0
    %342 = vmatmul.mubr.f32.gmra.mrb[0].mxu0 %v273
    %v343 = vpop.f32.mrb[0].mxu0
    %v344 = vadd.f32 0.0, %v343
    %v345 = vpop.f32.mrb[0].mxu0
    %346 = vdwg.mxu0
    %v347 = vsel %vm195, %v267, -inf
    %348 = vmax.xlane.f32.xlu0 %v347
    %v349 = vpop.xlane.xlu0 %348
    %v350 = vsel %vm195, %v344, -inf
    %351 = vmax.xlane.f32.xlu0 %v350
    %v352 = vpop.xlane.xlu0 %351
    %v353 = vsub.f32 %v267, %v349
    %v354 = vsub.f32 %v344, %v352
    %v355 = vmul.f32 %v353, 1.442695
    %v356 = vpow.pop %v355
    %v357 = vmul.f32 %v354, 1.442695
    %v358 = vpow.pop %v357
    %v359 = vsel %vm195, %v356, 0.0
    %360 = vadd.xlane.f32.xlu0 %v359
    %v361 = vpop.xlane.xlu0 %360
    %v362 = vsel %vm195, %v358, 0.0
    %363 = vadd.xlane.f32.xlu0 %v362
    %v364 = vpop.xlane.xlu0 %363
    %v365 = vrcp.pop %v361
    %v366 = vrcp.pop %v364
    %v367 = vmul.f32 %v356, %v365
    %v368 = vmul.f32 %v358, %v366
    %369 = vrot.lane.b32.xlu0 %v184, 64
    %v370 = vpop.permute.xlu0 %369
    %v373 = vsel %vm195, %v367, 0
    %375 = vmatprep.subr.mxu0 0.0
    %376 = vmatpush1.msra.mxu0 %v370
    %377 = vmatprep.subr.mxu0 0.0
    %378 = vmatpush1.msra.mxu0 0.0
    %379 = vmatprep.subr.mxu0 0.0
    %380 = vmatpush1.msra.mxu0 0.0
    %381 = vmatprep.subr.mxu0 0.0
    %382 = vmatpush1.msra.mxu0 0.0
    %383 = vmatprep.subr.mxu0 0.0
    %384 = vmatpush1.msra.mxu0 0.0
    %385 = vmatprep.subr.mxu0 0.0
    %386 = vmatpush1.msra.mxu0 0.0
    %387 = vmatprep.subr.mxu0 0.0
    %388 = vmatpush1.msra.mxu0 0.0
    %389 = vmatprep.subr.mxu0 0.0
    %390 = vmatpush1.msra.mxu0 0.0
    %391 = vmatprep.subr.mxu0 0.0
    %392 = vmatpush1.msra.mxu0 0.0
    %393 = vmatprep.subr.mxu0 0.0
    %394 = vmatpush1.msra.mxu0 0.0
    %395 = vmatprep.subr.mxu0 0.0
    %396 = vmatpush1.msra.mxu0 0.0
    %397 = vmatprep.subr.mxu0 0.0
    %398 = vmatpush1.msra.mxu0 0.0
    %399 = vmatprep.subr.mxu0 0.0
    %400 = vmatpush1.msra.mxu0 0.0
    %401 = vmatprep.subr.mxu0 0.0
    %402 = vmatpush1.msra.mxu0 0.0
    %403 = vmatprep.subr.mxu0 0.0
    %404 = vmatpush1.msra.mxu0 0.0
    %405 = vmatprep.subr.mxu0 0.0
    %406 = vmatpush1.msra.mxu0 0.0
    %407 = vmatprep.subr.mxu0 0.0
    %408 = vmatpush1.msra.mxu0 0.0
    %409 = vmatprep.subr.mxu0 0.0
    %410 = vmatpush1.msra.mxu0 0.0
    %411 = vmatprep.subr.mxu0 0.0
    %412 = vmatpush1.msra.mxu0 0.0
    %413 = vmatprep.subr.mxu0 0.0
    %414 = vmatpush1.msra.mxu0 0.0
    %415 = vmatprep.subr.mxu0 0.0
    %416 = vmatpush1.msra.mxu0 0.0
    %417 = vmatprep.subr.mxu0 0.0
    %418 = vmatpush1.msra.mxu0 0.0
    %419 = vmatprep.subr.mxu0 0.0
    %420 = vmatpush1.msra.mxu0 0.0
    %421 = vmatprep.subr.mxu0 0.0
    %422 = vmatpush1.msra.mxu0 0.0
    %423 = vmatprep.subr.mxu0 0.0
    %424 = vmatpush1.msra.mxu0 0.0
    %425 = vmatprep.subr.mxu0 0.0
    %426 = vmatpush1.msra.mxu0 0.0
    %427 = vmatprep.subr.mxu0 0.0
    %428 = vmatpush1.msra.mxu0 0.0
    %429 = vmatprep.subr.mxu0 0.0
    %430 = vmatpush1.msra.mxu0 0.0
    %431 = vmatprep.subr.mxu0 0.0
    %432 = vmatpush1.msra.mxu0 0.0
    %433 = vmatprep.subr.mxu0 0.0
    %434 = vmatpush1.msra.mxu0 0.0
    %435 = vmatprep.subr.mxu0 0.0
    %436 = vmatpush1.msra.mxu0 0.0
    %437 = vmatprep.subr.mxu0 0.0
    %438 = vmatpush1.msra.mxu0 0.0
    %439 = vmatprep.mubr.f32.mxu0 0.0
    %440 = vmatmul.mubr.f32.gmra.mrb[0].mxu0 %v373
    %v441 = vpop.f32.mrb[0].mxu0
    %v442 = vadd.f32 0.0, %v441
    %v443 = vpop.f32.mrb[0].mxu0
    %444 = vdwg.mxu0
    %445 = vrot.lane.b32.xlu0 %v189, 64
    %v446 = vpop.permute.xlu0 %445
    %v449 = vsel %vm195, %v368, 0
    %451 = vmatprep.subr.mxu0 0.0
    %452 = vmatpush1.msra.mxu0 %v446
    %453 = vmatprep.subr.mxu0 0.0
    %454 = vmatpush1.msra.mxu0 0.0
    %455 = vmatprep.subr.mxu0 0.0
    %456 = vmatpush1.msra.mxu0 0.0
    %457 = vmatprep.subr.mxu0 0.0
    %458 = vmatpush1.msra.mxu0 0.0
    %459 = vmatprep.subr.mxu0 0.0
    %460 = vmatpush1.msra.mxu0 0.0
    %461 = vmatprep.subr.mxu0 0.0
    %462 = vmatpush1.msra.mxu0 0.0
    %463 = vmatprep.subr.mxu0 0.0
    %464 = vmatpush1.msra.mxu0 0.0
    %465 = vmatprep.subr.mxu0 0.0
    %466 = vmatpush1.msra.mxu0 0.0
    %467 = vmatprep.subr.mxu0 0.0
    %468 = vmatpush1.msra.mxu0 0.0
    %469 = vmatprep.subr.mxu0 0.0
    %470 = vmatpush1.msra.mxu0 0.0
    %471 = vmatprep.subr.mxu0 0.0
    %472 = vmatpush1.msra.mxu0 0.0
    %473 = vmatprep.subr.mxu0 0.0
    %474 = vmatpush1.msra.mxu0 0.0
    %475 = vmatprep.subr.mxu0 0.0
    %476 = vmatpush1.msra.mxu0 0.0
    %477 = vmatprep.subr.mxu0 0.0
    %478 = vmatpush1.msra.mxu0 0.0
    %479 = vmatprep.subr.mxu0 0.0
    %480 = vmatpush1.msra.mxu0 0.0
    %481 = vmatprep.subr.mxu0 0.0
    %482 = vmatpush1.msra.mxu0 0.0
    %483 = vmatprep.subr.mxu0 0.0
    %484 = vmatpush1.msra.mxu0 0.0
    %485 = vmatprep.subr.mxu0 0.0
    %486 = vmatpush1.msra.mxu0 0.0
    %487 = vmatprep.subr.mxu0 0.0
    %488 = vmatpush1.msra.mxu0 0.0
    %489 = vmatprep.subr.mxu0 0.0
    %490 = vmatpush1.msra.mxu0 0.0
    %491 = vmatprep.subr.mxu0 0.0
    %492 = vmatpush1.msra.mxu0 0.0
    %493 = vmatprep.subr.mxu0 0.0
    %494 = vmatpush1.msra.mxu0 0.0
    %495 = vmatprep.subr.mxu0 0.0
    %496 = vmatpush1.msra.mxu0 0.0
    %497 = vmatprep.subr.mxu0 0.0
    %498 = vmatpush1.msra.mxu0 0.0
    %499 = vmatprep.subr.mxu0 0.0
    %500 = vmatpush1.msra.mxu0 0.0
    %501 = vmatprep.subr.mxu0 0.0
    %502 = vmatpush1.msra.mxu0 0.0
    %503 = vmatprep.subr.mxu0 0.0
    %504 = vmatpush1.msra.mxu0 0.0
    %505 = vmatprep.subr.mxu0 0.0
    %506 = vmatpush1.msra.mxu0 0.0
    %507 = vmatprep.subr.mxu0 0.0
    %508 = vmatpush1.msra.mxu0 0.0
    %509 = vmatprep.subr.mxu0 0.0
    %510 = vmatpush1.msra.mxu0 0.0
    %511 = vmatprep.subr.mxu0 0.0
    %512 = vmatpush1.msra.mxu0 0.0
    %513 = vmatprep.subr.mxu0 0.0
    %514 = vmatpush1.msra.mxu0 0.0
    %515 = vmatprep.mubr.f32.mxu0 0.0
    %516 = vmatmul.mubr.f32.gmra.mrb[0].mxu0 %v449
    %v517 = vpop.f32.mrb[0].mxu0
    %v518 = vadd.f32 0.0, %v517
    %v519 = vpop.f32.mrb[0].mxu0
    %520 = vdwg.mxu0
    %521 = vrot.lane.b32.xlu0 %v184, 120
    %v522 = vpop.permute.xlu0 %521
    %523 = vrot.lane.b32.xlu0 %v184, 88
    %v524 = vpop.permute.xlu0 %523
    %v525 = vsel %vm195, %v522, 0
    %v527 = vsel %vm195, %v524, 0
    %529 = vmatprep.subr.mxu0 0.0
    %530 = vmatpush1.xpose.msra.mxu0 %v527
    %531 = vmatprep.subr.mxu0 0.0
    %532 = vmatpush1.xpose.msra.mxu0 0.0
    %533 = vmatprep.subr.mxu0 0.0
    %534 = vmatpush1.xpose.msra.mxu0 0.0
    %535 = vmatprep.subr.mxu0 0.0
    %536 = vmatpush1.xpose.msra.mxu0 0.0
    %537 = vmatprep.subr.mxu0 0.0
    %538 = vmatpush1.xpose.msra.mxu0 0.0
    %539 = vmatprep.subr.mxu0 0.0
    %540 = vmatpush1.xpose.msra.mxu0 0.0
    %541 = vmatprep.subr.mxu0 0.0
    %542 = vmatpush1.xpose.msra.mxu0 0.0
    %543 = vmatprep.subr.mxu0 0.0
    %544 = vmatpush1.xpose.msra.mxu0 0.0
    %545 = vmatprep.subr.mxu0 0.0
    %546 = vmatpush1.xpose.msra.mxu0 0.0
    %547 = vmatprep.subr.mxu0 0.0
    %548 = vmatpush1.xpose.msra.mxu0 0.0
    %549 = vmatprep.subr.mxu0 0.0
    %550 = vmatpush1.xpose.msra.mxu0 0.0
    %551 = vmatprep.subr.mxu0 0.0
    %552 = vmatpush1.xpose.msra.mxu0 0.0
    %553 = vmatprep.subr.mxu0 0.0
    %554 = vmatpush1.xpose.msra.mxu0 0.0
    %555 = vmatprep.subr.mxu0 0.0
    %556 = vmatpush1.xpose.msra.mxu0 0.0
    %557 = vmatprep.subr.mxu0 0.0
    %558 = vmatpush1.xpose.msra.mxu0 0.0
    %559 = vmatprep.subr.mxu0 0.0
    %560 = vmatpush1.xpose.msra.mxu0 0.0
    %561 = vmatprep.subr.mxu0 0.0
    %562 = vmatpush1.xpose.msra.mxu0 0.0
    %563 = vmatprep.subr.mxu0 0.0
    %564 = vmatpush1.xpose.msra.mxu0 0.0
    %565 = vmatprep.subr.mxu0 0.0
    %566 = vmatpush1.xpose.msra.mxu0 0.0
    %567 = vmatprep.subr.mxu0 0.0
    %568 = vmatpush1.xpose.msra.mxu0 0.0
    %569 = vmatprep.subr.mxu0 0.0
    %570 = vmatpush1.xpose.msra.mxu0 0.0
    %571 = vmatprep.subr.mxu0 0.0
    %572 = vmatpush1.xpose.msra.mxu0 0.0
    %573 = vmatprep.subr.mxu0 0.0
    %574 = vmatpush1.xpose.msra.mxu0 0.0
    %575 = vmatprep.subr.mxu0 0.0
    %576 = vmatpush1.xpose.msra.mxu0 0.0
    %577 = vmatprep.subr.mxu0 0.0
    %578 = vmatpush1.xpose.msra.mxu0 0.0
    %579 = vmatprep.subr.mxu0 0.0
    %580 = vmatpush1.xpose.msra.mxu0 0.0
    %581 = vmatprep.subr.mxu0 0.0
    %582 = vmatpush1.xpose.msra.mxu0 0.0
    %583 = vmatprep.subr.mxu0 0.0
    %584 = vmatpush1.xpose.msra.mxu0 0.0
    %585 = vmatprep.subr.mxu0 0.0
    %586 = vmatpush1.xpose.msra.mxu0 0.0
    %587 = vmatprep.subr.mxu0 0.0
    %588 = vmatpush1.xpose.msra.mxu0 0.0
    %589 = vmatprep.subr.mxu0 0.0
    %590 = vmatpush1.xpose.msra.mxu0 0.0
    %591 = vmatprep.subr.mxu0 0.0
    %592 = vmatpush1.xpose.msra.mxu0 0.0
    %593 = vmatprep.mubr.f32.mxu0 0.0
    %594 = vmatmul.mubr.f32.gmra.mrb[0].mxu0 %v525
    %v595 = vpop.f32.mrb[0].mxu0
    %v596 = vadd.f32 0.0, %v595
    %v597 = vpop.f32.mrb[0].mxu0
    %598 = vdwg.mxu0
    %599 = vrot.lane.b32.xlu0 %v189, 120
    %v600 = vpop.permute.xlu0 %599
    %601 = vrot.lane.b32.xlu0 %v189, 88
    %v602 = vpop.permute.xlu0 %601
    %v603 = vsel %vm195, %v600, 0
    %v605 = vsel %vm195, %v602, 0
    %607 = vmatprep.subr.mxu0 0.0
    %608 = vmatpush1.xpose.msra.mxu0 %v605
    %609 = vmatprep.subr.mxu0 0.0
    %610 = vmatpush1.xpose.msra.mxu0 0.0
    %611 = vmatprep.subr.mxu0 0.0
    %612 = vmatpush1.xpose.msra.mxu0 0.0
    %613 = vmatprep.subr.mxu0 0.0
    %614 = vmatpush1.xpose.msra.mxu0 0.0
    %615 = vmatprep.subr.mxu0 0.0
    %616 = vmatpush1.xpose.msra.mxu0 0.0
    %617 = vmatprep.subr.mxu0 0.0
    %618 = vmatpush1.xpose.msra.mxu0 0.0
    %619 = vmatprep.subr.mxu0 0.0
    %620 = vmatpush1.xpose.msra.mxu0 0.0
    %621 = vmatprep.subr.mxu0 0.0
    %622 = vmatpush1.xpose.msra.mxu0 0.0
    %623 = vmatprep.subr.mxu0 0.0
    %624 = vmatpush1.xpose.msra.mxu0 0.0
    %625 = vmatprep.subr.mxu0 0.0
    %626 = vmatpush1.xpose.msra.mxu0 0.0
    %627 = vmatprep.subr.mxu0 0.0
    %628 = vmatpush1.xpose.msra.mxu0 0.0
    %629 = vmatprep.subr.mxu0 0.0
    %630 = vmatpush1.xpose.msra.mxu0 0.0
    %631 = vmatprep.subr.mxu0 0.0
    %632 = vmatpush1.xpose.msra.mxu0 0.0
    %633 = vmatprep.subr.mxu0 0.0
    %634 = vmatpush1.xpose.msra.mxu0 0.0
    %635 = vmatprep.subr.mxu0 0.0
    %636 = vmatpush1.xpose.msra.mxu0 0.0
    %637 = vmatprep.subr.mxu0 0.0
    %638 = vmatpush1.xpose.msra.mxu0 0.0
    %639 = vmatprep.subr.mxu0 0.0
    %640 = vmatpush1.xpose.msra.mxu0 0.0
    %641 = vmatprep.subr.mxu0 0.0
    %642 = vmatpush1.xpose.msra.mxu0 0.0
    %643 = vmatprep.subr.mxu0 0.0
    %644 = vmatpush1.xpose.msra.mxu0 0.0
    %645 = vmatprep.subr.mxu0 0.0
    %646 = vmatpush1.xpose.msra.mxu0 0.0
    %647 = vmatprep.subr.mxu0 0.0
    %648 = vmatpush1.xpose.msra.mxu0 0.0
    %649 = vmatprep.subr.mxu0 0.0
    %650 = vmatpush1.xpose.msra.mxu0 0.0
    %651 = vmatprep.subr.mxu0 0.0
    %652 = vmatpush1.xpose.msra.mxu0 0.0
    %653 = vmatprep.subr.mxu0 0.0
    %654 = vmatpush1.xpose.msra.mxu0 0.0
    %655 = vmatprep.subr.mxu0 0.0
    %656 = vmatpush1.xpose.msra.mxu0 0.0
    %657 = vmatprep.subr.mxu0 0.0
    %658 = vmatpush1.xpose.msra.mxu0 0.0
    %659 = vmatprep.subr.mxu0 0.0
    %660 = vmatpush1.xpose.msra.mxu0 0.0
    %661 = vmatprep.subr.mxu0 0.0
    %662 = vmatpush1.xpose.msra.mxu0 0.0
    %663 = vmatprep.subr.mxu0 0.0
    %664 = vmatpush1.xpose.msra.mxu0 0.0
    %665 = vmatprep.subr.mxu0 0.0
    %666 = vmatpush1.xpose.msra.mxu0 0.0
    %667 = vmatprep.subr.mxu0 0.0
    %668 = vmatpush1.xpose.msra.mxu0 0.0
    %669 = vmatprep.subr.mxu0 0.0
    %670 = vmatpush1.xpose.msra.mxu0 0.0
    %671 = vmatprep.mubr.f32.mxu0 0.0
    %672 = vmatmul.mubr.f32.gmra.mrb[0].mxu0 %v603
    %v673 = vpop.f32.mrb[0].mxu0
    %v674 = vadd.f32 0.0, %v673
    %v675 = vpop.f32.mrb[0].mxu0
    %676 = vdwg.mxu0
    %v677 = vsel %vm195, %v596, -inf
    %678 = vmax.xlane.f32.xlu0 %v677
    %v679 = vpop.xlane.xlu0 %678
    %v680 = vsel %vm195, %v674, -inf
    %681 = vmax.xlane.f32.xlu0 %v680
    %v682 = vpop.xlane.xlu0 %681
    %v683 = vsub.f32 %v596, %v679
    %v684 = vsub.f32 %v674, %v682
    %v685 = vmul.f32 %v683, 1.442695
    %v686 = vpow.pop %v685
    %v687 = vmul.f32 %v684, 1.442695
    %v688 = vpow.pop %v687
    %v689 = vsel %vm195, %v686, 0.0
    %690 = vadd.xlane.f32.xlu0 %v689
    %v691 = vpop.xlane.xlu0 %690
    %v692 = vsel %vm195, %v688, 0.0
    %693 = vadd.xlane.f32.xlu0 %v692
    %v694 = vpop.xlane.xlu0 %693
    %v695 = vrcp.pop %v691
    %v696 = vrcp.pop %v694
    %v697 = vmul.f32 %v686, %v695
    %v698 = vmul.f32 %v688, %v696
    %699 = vrot.lane.b32.xlu0 %v184, 56
    %v700 = vpop.permute.xlu0 %699
    %v703 = vsel %vm195, %v697, 0
    %705 = vmatprep.subr.mxu0 0.0
    %706 = vmatpush1.msra.mxu0 %v700
    %707 = vmatprep.subr.mxu0 0.0
    %708 = vmatpush1.msra.mxu0 0.0
    %709 = vmatprep.subr.mxu0 0.0
    %710 = vmatpush1.msra.mxu0 0.0
    %711 = vmatprep.subr.mxu0 0.0
    %712 = vmatpush1.msra.mxu0 0.0
    %713 = vmatprep.subr.mxu0 0.0
    %714 = vmatpush1.msra.mxu0 0.0
    %715 = vmatprep.subr.mxu0 0.0
    %716 = vmatpush1.msra.mxu0 0.0
    %717 = vmatprep.subr.mxu0 0.0
    %718 = vmatpush1.msra.mxu0 0.0
    %719 = vmatprep.subr.mxu0 0.0
    %720 = vmatpush1.msra.mxu0 0.0
    %721 = vmatprep.subr.mxu0 0.0
    %722 = vmatpush1.msra.mxu0 0.0
    %723 = vmatprep.subr.mxu0 0.0
    %724 = vmatpush1.msra.mxu0 0.0
    %725 = vmatprep.subr.mxu0 0.0
    %726 = vmatpush1.msra.mxu0 0.0
    %727 = vmatprep.subr.mxu0 0.0
    %728 = vmatpush1.msra.mxu0 0.0
    %729 = vmatprep.subr.mxu0 0.0
    %730 = vmatpush1.msra.mxu0 0.0
    %731 = vmatprep.subr.mxu0 0.0
    %732 = vmatpush1.msra.mxu0 0.0
    %733 = vmatprep.subr.mxu0 0.0
    %734 = vmatpush1.msra.mxu0 0.0
    %735 = vmatprep.subr.mxu0 0.0
    %736 = vmatpush1.msra.mxu0 0.0
    %737 = vmatprep.subr.mxu0 0.0
    %738 = vmatpush1.msra.mxu0 0.0
    %739 = vmatprep.subr.mxu0 0.0
    %740 = vmatpush1.msra.mxu0 0.0
    %741 = vmatprep.subr.mxu0 0.0
    %742 = vmatpush1.msra.mxu0 0.0
    %743 = vmatprep.subr.mxu0 0.0
    %744 = vmatpush1.msra.mxu0 0.0
    %745 = vmatprep.subr.mxu0 0.0
    %746 = vmatpush1.msra.mxu0 0.0
    %747 = vmatprep.subr.mxu0 0.0
    %748 = vmatpush1.msra.mxu0 0.0
    %749 = vmatprep.subr.mxu0 0.0
    %750 = vmatpush1.msra.mxu0 0.0
    %751 = vmatprep.subr.mxu0 0.0
    %752 = vmatpush1.msra.mxu0 0.0
    %753 = vmatprep.subr.mxu0 0.0
    %754 = vmatpush1.msra.mxu0 0.0
    %755 = vmatprep.subr.mxu0 0.0
    %756 = vmatpush1.msra.mxu0 0.0
    %757 = vmatprep.subr.mxu0 0.0
    %758 = vmatpush1.msra.mxu0 0.0
    %759 = vmatprep.subr.mxu0 0.0
    %760 = vmatpush1.msra.mxu0 0.0
    %761 = vmatprep.subr.mxu0 0.0
    %762 = vmatpush1.msra.mxu0 0.0
    %763 = vmatprep.subr.mxu0 0.0
    %764 = vmatpush1.msra.mxu0 0.0
    %765 = vmatprep.subr.mxu0 0.0
    %766 = vmatpush1.msra.mxu0 0.0
    %767 = vmatprep.subr.mxu0 0.0
    %768 = vmatpush1.msra.mxu0 0.0
    %769 = vmatprep.mubr.f32.mxu0 0.0
    %770 = vmatmul.mubr.f32.gmra.mrb[0].mxu0 %v703
    %v771 = vpop.f32.mrb[0].mxu0
    %v772 = vadd.f32 0.0, %v771
    %v773 = vpop.f32.mrb[0].mxu0
    %774 = vdwg.mxu0
    %775 = vrot.lane.b32.xlu0 %v189, 56
    %v776 = vpop.permute.xlu0 %775
    %v779 = vsel %vm195, %v698, 0
    %781 = vmatprep.subr.mxu0 0.0
    %782 = vmatpush1.msra.mxu0 %v776
    %783 = vmatprep.subr.mxu0 0.0
    %784 = vmatpush1.msra.mxu0 0.0
    %785 = vmatprep.subr.mxu0 0.0
    %786 = vmatpush1.msra.mxu0 0.0
    %787 = vmatprep.subr.mxu0 0.0
    %788 = vmatpush1.msra.mxu0 0.0
    %789 = vmatprep.subr.mxu0 0.0
    %790 = vmatpush1.msra.mxu0 0.0
    %791 = vmatprep.subr.mxu0 0.0
    %792 = vmatpush1.msra.mxu0 0.0
    %793 = vmatprep.subr.mxu0 0.0
    %794 = vmatpush1.msra.mxu0 0.0
    %795 = vmatprep.subr.mxu0 0.0
    %796 = vmatpush1.msra.mxu0 0.0
    %797 = vmatprep.subr.mxu0 0.0
    %798 = vmatpush1.msra.mxu0 0.0
    %799 = vmatprep.subr.mxu0 0.0
    %800 = vmatpush1.msra.mxu0 0.0
    %801 = vmatprep.subr.mxu0 0.0
    %802 = vmatpush1.msra.mxu0 0.0
    %803 = vmatprep.subr.mxu0 0.0
    %804 = vmatpush1.msra.mxu0 0.0
    %805 = vmatprep.subr.mxu0 0.0
    %806 = vmatpush1.msra.mxu0 0.0
    %807 = vmatprep.subr.mxu0 0.0
    %808 = vmatpush1.msra.mxu0 0.0
    %809 = vmatprep.subr.mxu0 0.0
    %810 = vmatpush1.msra.mxu0 0.0
    %811 = vmatprep.subr.mxu0 0.0
    %812 = vmatpush1.msra.mxu0 0.0
    %813 = vmatprep.subr.mxu0 0.0
    %814 = vmatpush1.msra.mxu0 0.0
    %815 = vmatprep.subr.mxu0 0.0
    %816 = vmatpush1.msra.mxu0 0.0
    %817 = vmatprep.subr.mxu0 0.0
    %818 = vmatpush1.msra.mxu0 0.0
    %819 = vmatprep.subr.mxu0 0.0
    %820 = vmatpush1.msra.mxu0 0.0
    %821 = vmatprep.subr.mxu0 0.0
    %822 = vmatpush1.msra.mxu0 0.0
    %823 = vmatprep.subr.mxu0 0.0
    %824 = vmatpush1.msra.mxu0 0.0
    %825 = vmatprep.subr.mxu0 0.0
    %826 = vmatpush1.msra.mxu0 0.0
    %827 = vmatprep.subr.mxu0 0.0
    %828 = vmatpush1.msra.mxu0 0.0
    %829 = vmatprep.subr.mxu0 0.0
    %830 = vmatpush1.msra.mxu0 0.0
    %831 = vmatprep.subr.mxu0 0.0
    %832 = vmatpush1.msra.mxu0 0.0
    %833 = vmatprep.subr.mxu0 0.0
    %834 = vmatpush1.msra.mxu0 0.0
    %835 = vmatprep.subr.mxu0 0.0
    %836 = vmatpush1.msra.mxu0 0.0
    %837 = vmatprep.subr.mxu0 0.0
    %838 = vmatpush1.msra.mxu0 0.0
    %839 = vmatprep.subr.mxu0 0.0
    %840 = vmatpush1.msra.mxu0 0.0
    %841 = vmatprep.subr.mxu0 0.0
    %842 = vmatpush1.msra.mxu0 0.0
    %843 = vmatprep.subr.mxu0 0.0
    %844 = vmatpush1.msra.mxu0 0.0
    %845 = vmatprep.mubr.f32.mxu0 0.0
    %846 = vmatmul.mubr.f32.gmra.mrb[0].mxu0 %v779
    %v847 = vpop.f32.mrb[0].mxu0
    %v848 = vadd.f32 0.0, %v847
    %v849 = vpop.f32.mrb[0].mxu0
    %850 = vdwg.mxu0
    %851 = vrot.lane.b32.xlu0 %v184, 112
    %v852 = vpop.permute.xlu0 %851
    %853 = vrot.lane.b32.xlu0 %v184, 80
    %v854 = vpop.permute.xlu0 %853
    %v855 = vsel %vm195, %v852, 0
    %v857 = vsel %vm195, %v854, 0
    %859 = vmatprep.subr.mxu0 0.0
    %860 = vmatpush1.xpose.msra.mxu0 %v857
    %861 = vmatprep.subr.mxu0 0.0
    %862 = vmatpush1.xpose.msra.mxu0 0.0
    %863 = vmatprep.subr.mxu0 0.0
    %864 = vmatpush1.xpose.msra.mxu0 0.0
    %865 = vmatprep.subr.mxu0 0.0
    %866 = vmatpush1.xpose.msra.mxu0 0.0
    %867 = vmatprep.subr.mxu0 0.0
    %868 = vmatpush1.xpose.msra.mxu0 0.0
    %869 = vmatprep.subr.mxu0 0.0
    %870 = vmatpush1.xpose.msra.mxu0 0.0
    %871 = vmatprep.subr.mxu0 0.0
    %872 = vmatpush1.xpose.msra.mxu0 0.0
    %873 = vmatprep.subr.mxu0 0.0
    %874 = vmatpush1.xpose.msra.mxu0 0.0
    %875 = vmatprep.subr.mxu0 0.0
    %876 = vmatpush1.xpose.msra.mxu0 0.0
    %877 = vmatprep.subr.mxu0 0.0
    %878 = vmatpush1.xpose.msra.mxu0 0.0
    %879 = vmatprep.subr.mxu0 0.0
    %880 = vmatpush1.xpose.msra.mxu0 0.0
    %881 = vmatprep.subr.mxu0 0.0
    %882 = vmatpush1.xpose.msra.mxu0 0.0
    %883 = vmatprep.subr.mxu0 0.0
    %884 = vmatpush1.xpose.msra.mxu0 0.0
    %885 = vmatprep.subr.mxu0 0.0
    %886 = vmatpush1.xpose.msra.mxu0 0.0
    %887 = vmatprep.subr.mxu0 0.0
    %888 = vmatpush1.xpose.msra.mxu0 0.0
    %889 = vmatprep.subr.mxu0 0.0
    %890 = vmatpush1.xpose.msra.mxu0 0.0
    %891 = vmatprep.subr.mxu0 0.0
    %892 = vmatpush1.xpose.msra.mxu0 0.0
    %893 = vmatprep.subr.mxu0 0.0
    %894 = vmatpush1.xpose.msra.mxu0 0.0
    %895 = vmatprep.subr.mxu0 0.0
    %896 = vmatpush1.xpose.msra.mxu0 0.0
    %897 = vmatprep.subr.mxu0 0.0
    %898 = vmatpush1.xpose.msra.mxu0 0.0
    %899 = vmatprep.subr.mxu0 0.0
    %900 = vmatpush1.xpose.msra.mxu0 0.0
    %901 = vmatprep.subr.mxu0 0.0
    %902 = vmatpush1.xpose.msra.mxu0 0.0
    %903 = vmatprep.subr.mxu0 0.0
    %904 = vmatpush1.xpose.msra.mxu0 0.0
    %905 = vmatprep.subr.mxu0 0.0
    %906 = vmatpush1.xpose.msra.mxu0 0.0
    %907 = vmatprep.subr.mxu0 0.0
    %908 = vmatpush1.xpose.msra.mxu0 0.0
    %909 = vmatprep.subr.mxu0 0.0
    %910 = vmatpush1.xpose.msra.mxu0 0.0
    %911 = vmatprep.subr.mxu0 0.0
    %912 = vmatpush1.xpose.msra.mxu0 0.0
    %913 = vmatprep.subr.mxu0 0.0
    %914 = vmatpush1.xpose.msra.mxu0 0.0
    %915 = vmatprep.subr.mxu0 0.0
    %916 = vmatpush1.xpose.msra.mxu0 0.0
    %917 = vmatprep.subr.mxu0 0.0
    %918 = vmatpush1.xpose.msra.mxu0 0.0
    %919 = vmatprep.subr.mxu0 0.0
    %920 = vmatpush1.xpose.msra.mxu0 0.0
    %921 = vmatprep.subr.mxu0 0.0
    %922 = vmatpush1.xpose.msra.mxu0 0.0
    %923 = vmatprep.mubr.f32.mxu0 0.0
    %924 = vmatmul.mubr.f32.gmra.mrb[0].mxu0 %v855
    %v925 = vpop.f32.mrb[0].mxu0
    %v926 = vadd.f32 0.0, %v925
    %v927 = vpop.f32.mrb[0].mxu0
    %928 = vdwg.mxu0
    %929 = vrot.lane.b32.xlu0 %v189, 112
    %v930 = vpop.permute.xlu0 %929
    %931 = vrot.lane.b32.xlu0 %v189, 80
    %v932 = vpop.permute.xlu0 %931
    %v933 = vsel %vm195, %v930, 0
    %v935 = vsel %vm195, %v932, 0
    %937 = vmatprep.subr.mxu0 0.0
    %938 = vmatpush1.xpose.msra.mxu0 %v935
    %939 = vmatprep.subr.mxu0 0.0
    %940 = vmatpush1.xpose.msra.mxu0 0.0
    %941 = vmatprep.subr.mxu0 0.0
    %942 = vmatpush1.xpose.msra.mxu0 0.0
    %943 = vmatprep.subr.mxu0 0.0
    %944 = vmatpush1.xpose.msra.mxu0 0.0
    %945 = vmatprep.subr.mxu0 0.0
    %946 = vmatpush1.xpose.msra.mxu0 0.0
    %947 = vmatprep.subr.mxu0 0.0
    %948 = vmatpush1.xpose.msra.mxu0 0.0
    %949 = vmatprep.subr.mxu0 0.0
    %950 = vmatpush1.xpose.msra.mxu0 0.0
    %951 = vmatprep.subr.mxu0 0.0
    %952 = vmatpush1.xpose.msra.mxu0 0.0
    %953 = vmatprep.subr.mxu0 0.0
    %954 = vmatpush1.xpose.msra.mxu0 0.0
    %955 = vmatprep.subr.mxu0 0.0
    %956 = vmatpush1.xpose.msra.mxu0 0.0
    %957 = vmatprep.subr.mxu0 0.0
    %958 = vmatpush1.xpose.msra.mxu0 0.0
    %959 = vmatprep.subr.mxu0 0.0
    %960 = vmatpush1.xpose.msra.mxu0 0.0
    %961 = vmatprep.subr.mxu0 0.0
    %962 = vmatpush1.xpose.msra.mxu0 0.0
    %963 = vmatprep.subr.mxu0 0.0
    %964 = vmatpush1.xpose.msra.mxu0 0.0
    %965 = vmatprep.subr.mxu0 0.0
    %966 = vmatpush1.xpose.msra.mxu0 0.0
    %967 = vmatprep.subr.mxu0 0.0
    %968 = vmatpush1.xpose.msra.mxu0 0.0
    %969 = vmatprep.subr.mxu0 0.0
    %970 = vmatpush1.xpose.msra.mxu0 0.0
    %971 = vmatprep.subr.mxu0 0.0
    %972 = vmatpush1.xpose.msra.mxu0 0.0
    %973 = vmatprep.subr.mxu0 0.0
    %974 = vmatpush1.xpose.msra.mxu0 0.0
    %975 = vmatprep.subr.mxu0 0.0
    %976 = vmatpush1.xpose.msra.mxu0 0.0
    %977 = vmatprep.subr.mxu0 0.0
    %978 = vmatpush1.xpose.msra.mxu0 0.0
    %979 = vmatprep.subr.mxu0 0.0
    %980 = vmatpush1.xpose.msra.mxu0 0.0
    %981 = vmatprep.subr.mxu0 0.0
    %982 = vmatpush1.xpose.msra.mxu0 0.0
    %983 = vmatprep.subr.mxu0 0.0
    %984 = vmatpush1.xpose.msra.mxu0 0.0
    %985 = vmatprep.subr.mxu0 0.0
    %986 = vmatpush1.xpose.msra.mxu0 0.0
    %987 = vmatprep.subr.mxu0 0.0
    %988 = vmatpush1.xpose.msra.mxu0 0.0
    %989 = vmatprep.subr.mxu0 0.0
    %990 = vmatpush1.xpose.msra.mxu0 0.0
    %991 = vmatprep.subr.mxu0 0.0
    %992 = vmatpush1.xpose.msra.mxu0 0.0
    %993 = vmatprep.subr.mxu0 0.0
    %994 = vmatpush1.xpose.msra.mxu0 0.0
    %995 = vmatprep.subr.mxu0 0.0
    %996 = vmatpush1.xpose.msra.mxu0 0.0
    %997 = vmatprep.subr.mxu0 0.0
    %998 = vmatpush1.xpose.msra.mxu0 0.0
    %999 = vmatprep.subr.mxu0 0.0
    %1000 = vmatpush1.xpose.msra.mxu0 0.0
    %1001 = vmatprep.mubr.f32.mxu0 0.0
    %1002 = vmatmul.mubr.f32.gmra.mrb[0].mxu0 %v933
    %v1003 = vpop.f32.mrb[0].mxu0
    %v1004 = vadd.f32 0.0, %v1003
    %v1005 = vpop.f32.mrb[0].mxu0
    %1006 = vdwg.mxu0
    %v1007 = vsel %vm195, %v926, -inf
    %1008 = vmax.xlane.f32.xlu0 %v1007
    %v1009 = vpop.xlane.xlu0 %1008
    %v1010 = vsel %vm195, %v1004, -inf
    %1011 = vmax.xlane.f32.xlu0 %v1010
    %v1012 = vpop.xlane.xlu0 %1011
    %v1013 = vsub.f32 %v926, %v1009
    %v1014 = vsub.f32 %v1004, %v1012
    %v1015 = vmul.f32 %v1013, 1.442695
    %v1016 = vpow.pop %v1015
    %v1017 = vmul.f32 %v1014, 1.442695
    %v1018 = vpow.pop %v1017
    %v1019 = vsel %vm195, %v1016, 0.0
    %1020 = vadd.xlane.f32.xlu0 %v1019
    %v1021 = vpop.xlane.xlu0 %1020
    %v1022 = vsel %vm195, %v1018, 0.0
    %1023 = vadd.xlane.f32.xlu0 %v1022
    %v1024 = vpop.xlane.xlu0 %1023
    %v1025 = vrcp.pop %v1021
    %v1026 = vrcp.pop %v1024
    %v1027 = vmul.f32 %v1016, %v1025
    %v1028 = vmul.f32 %v1018, %v1026
    %1029 = vrot.lane.b32.xlu0 %v184, 48
    %v1030 = vpop.permute.xlu0 %1029
    %v1033 = vsel %vm195, %v1027, 0
    %1035 = vmatprep.subr.mxu0 0.0
    %1036 = vmatpush1.msra.mxu0 %v1030
    %1037 = vmatprep.subr.mxu0 0.0
    %1038 = vmatpush1.msra.mxu0 0.0
    %1039 = vmatprep.subr.mxu0 0.0
    %1040 = vmatpush1.msra.mxu0 0.0
    %1041 = vmatprep.subr.mxu0 0.0
    %1042 = vmatpush1.msra.mxu0 0.0
    %1043 = vmatprep.subr.mxu0 0.0
    %1044 = vmatpush1.msra.mxu0 0.0
    %1045 = vmatprep.subr.mxu0 0.0
    %1046 = vmatpush1.msra.mxu0 0.0
    %1047 = vmatprep.subr.mxu0 0.0
    %1048 = vmatpush1.msra.mxu0 0.0
    %1049 = vmatprep.subr.mxu0 0.0
    %1050 = vmatpush1.msra.mxu0 0.0
    %1051 = vmatprep.subr.mxu0 0.0
    %1052 = vmatpush1.msra.mxu0 0.0
    %1053 = vmatprep.subr.mxu0 0.0
    %1054 = vmatpush1.msra.mxu0 0.0
    %1055 = vmatprep.subr.mxu0 0.0
    %1056 = vmatpush1.msra.mxu0 0.0
    %1057 = vmatprep.subr.mxu0 0.0
    %1058 = vmatpush1.msra.mxu0 0.0
    %1059 = vmatprep.subr.mxu0 0.0
    %1060 = vmatpush1.msra.mxu0 0.0
    %1061 = vmatprep.subr.mxu0 0.0
    %1062 = vmatpush1.msra.mxu0 0.0
    %1063 = vmatprep.subr.mxu0 0.0
    %1064 = vmatpush1.msra.mxu0 0.0
    %1065 = vmatprep.subr.mxu0 0.0
    %1066 = vmatpush1.msra.mxu0 0.0
    %1067 = vmatprep.subr.mxu0 0.0
    %1068 = vmatpush1.msra.mxu0 0.0
    %1069 = vmatprep.subr.mxu0 0.0
    %1070 = vmatpush1.msra.mxu0 0.0
    %1071 = vmatprep.subr.mxu0 0.0
    %1072 = vmatpush1.msra.mxu0 0.0
    %1073 = vmatprep.subr.mxu0 0.0
    %1074 = vmatpush1.msra.mxu0 0.0
    %1075 = vmatprep.subr.mxu0 0.0
    %1076 = vmatpush1.msra.mxu0 0.0
    %1077 = vmatprep.subr.mxu0 0.0
    %1078 = vmatpush1.msra.mxu0 0.0
    %1079 = vmatprep.subr.mxu0 0.0
    %1080 = vmatpush1.msra.mxu0 0.0
    %1081 = vmatprep.subr.mxu0 0.0
    %1082 = vmatpush1.msra.mxu0 0.0
    %1083 = vmatprep.subr.mxu0 0.0
    %1084 = vmatpush1.msra.mxu0 0.0
    %1085 = vmatprep.subr.mxu0 0.0
    %1086 = vmatpush1.msra.mxu0 0.0
    %1087 = vmatprep.subr.mxu0 0.0
    %1088 = vmatpush1.msra.mxu0 0.0
    %1089 = vmatprep.subr.mxu0 0.0
    %1090 = vmatpush1.msra.mxu0 0.0
    %1091 = vmatprep.subr.mxu0 0.0
    %1092 = vmatpush1.msra.mxu0 0.0
    %1093 = vmatprep.subr.mxu0 0.0
    %1094 = vmatpush1.msra.mxu0 0.0
    %1095 = vmatprep.subr.mxu0 0.0
    %1096 = vmatpush1.msra.mxu0 0.0
    %1097 = vmatprep.subr.mxu0 0.0
    %1098 = vmatpush1.msra.mxu0 0.0
    %1099 = vmatprep.mubr.f32.mxu0 0.0
    %1100 = vmatmul.mubr.f32.gmra.mrb[0].mxu0 %v1033
    %v1101 = vpop.f32.mrb[0].mxu0
    %v1102 = vadd.f32 0.0, %v1101
    %v1103 = vpop.f32.mrb[0].mxu0
    %1104 = vdwg.mxu0
    %1105 = vrot.lane.b32.xlu0 %v189, 48
    %v1106 = vpop.permute.xlu0 %1105
    %v1109 = vsel %vm195, %v1028, 0
    %1111 = vmatprep.subr.mxu0 0.0
    %1112 = vmatpush1.msra.mxu0 %v1106
    %1113 = vmatprep.subr.mxu0 0.0
    %1114 = vmatpush1.msra.mxu0 0.0
    %1115 = vmatprep.subr.mxu0 0.0
    %1116 = vmatpush1.msra.mxu0 0.0
    %1117 = vmatprep.subr.mxu0 0.0
    %1118 = vmatpush1.msra.mxu0 0.0
    %1119 = vmatprep.subr.mxu0 0.0
    %1120 = vmatpush1.msra.mxu0 0.0
    %1121 = vmatprep.subr.mxu0 0.0
    %1122 = vmatpush1.msra.mxu0 0.0
    %1123 = vmatprep.subr.mxu0 0.0
    %1124 = vmatpush1.msra.mxu0 0.0
    %1125 = vmatprep.subr.mxu0 0.0
    %1126 = vmatpush1.msra.mxu0 0.0
    %1127 = vmatprep.subr.mxu0 0.0
    %1128 = vmatpush1.msra.mxu0 0.0
    %1129 = vmatprep.subr.mxu0 0.0
    %1130 = vmatpush1.msra.mxu0 0.0
    %1131 = vmatprep.subr.mxu0 0.0
    %1132 = vmatpush1.msra.mxu0 0.0
    %1133 = vmatprep.subr.mxu0 0.0
    %1134 = vmatpush1.msra.mxu0 0.0
    %1135 = vmatprep.subr.mxu0 0.0
    %1136 = vmatpush1.msra.mxu0 0.0
    %1137 = vmatprep.subr.mxu0 0.0
    %1138 = vmatpush1.msra.mxu0 0.0
    %1139 = vmatprep.subr.mxu0 0.0
    %1140 = vmatpush1.msra.mxu0 0.0
    %1141 = vmatprep.subr.mxu0 0.0
    %1142 = vmatpush1.msra.mxu0 0.0
    %1143 = vmatprep.subr.mxu0 0.0
    %1144 = vmatpush1.msra.mxu0 0.0
    %1145 = vmatprep.subr.mxu0 0.0
    %1146 = vmatpush1.msra.mxu0 0.0
    %1147 = vmatprep.subr.mxu0 0.0
    %1148 = vmatpush1.msra.mxu0 0.0
    %1149 = vmatprep.subr.mxu0 0.0
    %1150 = vmatpush1.msra.mxu0 0.0
    %1151 = vmatprep.subr.mxu0 0.0
    %1152 = vmatpush1.msra.mxu0 0.0
    %1153 = vmatprep.subr.mxu0 0.0
    %1154 = vmatpush1.msra.mxu0 0.0
    %1155 = vmatprep.subr.mxu0 0.0
    %1156 = vmatpush1.msra.mxu0 0.0
    %1157 = vmatprep.subr.mxu0 0.0
    %1158 = vmatpush1.msra.mxu0 0.0
    %1159 = vmatprep.subr.mxu0 0.0
    %1160 = vmatpush1.msra.mxu0 0.0
    %1161 = vmatprep.subr.mxu0 0.0
    %1162 = vmatpush1.msra.mxu0 0.0
    %1163 = vmatprep.subr.mxu0 0.0
    %1164 = vmatpush1.msra.mxu0 0.0
    %1165 = vmatprep.subr.mxu0 0.0
    %1166 = vmatpush1.msra.mxu0 0.0
    %1167 = vmatprep.subr.mxu0 0.0
    %1168 = vmatpush1.msra.mxu0 0.0
    %1169 = vmatprep.subr.mxu0 0.0
    %1170 = vmatpush1.msra.mxu0 0.0
    %1171 = vmatprep.subr.mxu0 0.0
    %1172 = vmatpush1.msra.mxu0 0.0
    %1173 = vmatprep.subr.mxu0 0.0
    %1174 = vmatpush1.msra.mxu0 0.0
    %1175 = vmatprep.mubr.f32.mxu0 0.0
    %1176 = vmatmul.mubr.f32.gmra.mrb[0].mxu0 %v1109
    %v1177 = vpop.f32.mrb[0].mxu0
    %v1178 = vadd.f32 0.0, %v1177
    %v1179 = vpop.f32.mrb[0].mxu0
    %1180 = vdwg.mxu0
    %1181 = vrot.lane.b32.xlu0 %v184, 104
    %v1182 = vpop.permute.xlu0 %1181
    %1183 = vrot.lane.b32.xlu0 %v184, 72
    %v1184 = vpop.permute.xlu0 %1183
    %v1185 = vsel %vm195, %v1182, 0
    %v1187 = vsel %vm195, %v1184, 0
    %1189 = vmatprep.subr.mxu0 0.0
    %1190 = vmatpush1.xpose.msra.mxu0 %v1187
    %1191 = vmatprep.subr.mxu0 0.0
    %1192 = vmatpush1.xpose.msra.mxu0 0.0
    %1193 = vmatprep.subr.mxu0 0.0
    %1194 = vmatpush1.xpose.msra.mxu0 0.0
    %1195 = vmatprep.subr.mxu0 0.0
    %1196 = vmatpush1.xpose.msra.mxu0 0.0
    %1197 = vmatprep.subr.mxu0 0.0
    %1198 = vmatpush1.xpose.msra.mxu0 0.0
    %1199 = vmatprep.subr.mxu0 0.0
    %1200 = vmatpush1.xpose.msra.mxu0 0.0
    %1201 = vmatprep.subr.mxu0 0.0
    %1202 = vmatpush1.xpose.msra.mxu0 0.0
    %1203 = vmatprep.subr.mxu0 0.0
    %1204 = vmatpush1.xpose.msra.mxu0 0.0
    %1205 = vmatprep.subr.mxu0 0.0
    %1206 = vmatpush1.xpose.msra.mxu0 0.0
    %1207 = vmatprep.subr.mxu0 0.0
    %1208 = vmatpush1.xpose.msra.mxu0 0.0
    %1209 = vmatprep.subr.mxu0 0.0
    %1210 = vmatpush1.xpose.msra.mxu0 0.0
    %1211 = vmatprep.subr.mxu0 0.0
    %1212 = vmatpush1.xpose.msra.mxu0 0.0
    %1213 = vmatprep.subr.mxu0 0.0
    %1214 = vmatpush1.xpose.msra.mxu0 0.0
    %1215 = vmatprep.subr.mxu0 0.0
    %1216 = vmatpush1.xpose.msra.mxu0 0.0
    %1217 = vmatprep.subr.mxu0 0.0
    %1218 = vmatpush1.xpose.msra.mxu0 0.0
    %1219 = vmatprep.subr.mxu0 0.0
    %1220 = vmatpush1.xpose.msra.mxu0 0.0
    %1221 = vmatprep.subr.mxu0 0.0
    %1222 = vmatpush1.xpose.msra.mxu0 0.0
    %1223 = vmatprep.subr.mxu0 0.0
    %1224 = vmatpush1.xpose.msra.mxu0 0.0
    %1225 = vmatprep.subr.mxu0 0.0
    %1226 = vmatpush1.xpose.msra.mxu0 0.0
    %1227 = vmatprep.subr.mxu0 0.0
    %1228 = vmatpush1.xpose.msra.mxu0 0.0
    %1229 = vmatprep.subr.mxu0 0.0
    %1230 = vmatpush1.xpose.msra.mxu0 0.0
    %1231 = vmatprep.subr.mxu0 0.0
    %1232 = vmatpush1.xpose.msra.mxu0 0.0
    %1233 = vmatprep.subr.mxu0 0.0
    %1234 = vmatpush1.xpose.msra.mxu0 0.0
    %1235 = vmatprep.subr.mxu0 0.0
    %1236 = vmatpush1.xpose.msra.mxu0 0.0
    %1237 = vmatprep.subr.mxu0 0.0
    %1238 = vmatpush1.xpose.msra.mxu0 0.0
    %1239 = vmatprep.subr.mxu0 0.0
    %1240 = vmatpush1.xpose.msra.mxu0 0.0
    %1241 = vmatprep.subr.mxu0 0.0
    %1242 = vmatpush1.xpose.msra.mxu0 0.0
    %1243 = vmatprep.subr.mxu0 0.0
    %1244 = vmatpush1.xpose.msra.mxu0 0.0
    %1245 = vmatprep.subr.mxu0 0.0
    %1246 = vmatpush1.xpose.msra.mxu0 0.0
    %1247 = vmatprep.subr.mxu0 0.0
    %1248 = vmatpush1.xpose.msra.mxu0 0.0
    %1249 = vmatprep.subr.mxu0 0.0
    %1250 = vmatpush1.xpose.msra.mxu0 0.0
    %1251 = vmatprep.subr.mxu0 0.0
    %1252 = vmatpush1.xpose.msra.mxu0 0.0
    %1253 = vmatprep.mubr.f32.mxu0 0.0
    %1254 = vmatmul.mubr.f32.gmra.mrb[0].mxu0 %v1185
    %v1255 = vpop.f32.mrb[0].mxu0
    %v1256 = vadd.f32 0.0, %v1255
    %v1257 = vpop.f32.mrb[0].mxu0
    %1258 = vdwg.mxu0
    %1259 = vrot.lane.b32.xlu0 %v189, 104
    %v1260 = vpop.permute.xlu0 %1259
    %1261 = vrot.lane.b32.xlu0 %v189, 72
    %v1262 = vpop.permute.xlu0 %1261
    %v1263 = vsel %vm195, %v1260, 0
    %v1265 = vsel %vm195, %v1262, 0
    %1267 = vmatprep.subr.mxu0 0.0
    %1268 = vmatpush1.xpose.msra.mxu0 %v1265
    %1269 = vmatprep.subr.mxu0 0.0
    %1270 = vmatpush1.xpose.msra.mxu0 0.0
    %1271 = vmatprep.subr.mxu0 0.0
    %1272 = vmatpush1.xpose.msra.mxu0 0.0
    %1273 = vmatprep.subr.mxu0 0.0
    %1274 = vmatpush1.xpose.msra.mxu0 0.0
    %1275 = vmatprep.subr.mxu0 0.0
    %1276 = vmatpush1.xpose.msra.mxu0 0.0
    %1277 = vmatprep.subr.mxu0 0.0
    %1278 = vmatpush1.xpose.msra.mxu0 0.0
    %1279 = vmatprep.subr.mxu0 0.0
    %1280 = vmatpush1.xpose.msra.mxu0 0.0
    %1281 = vmatprep.subr.mxu0 0.0
    %1282 = vmatpush1.xpose.msra.mxu0 0.0
    %1283 = vmatprep.subr.mxu0 0.0
    %1284 = vmatpush1.xpose.msra.mxu0 0.0
    %1285 = vmatprep.subr.mxu0 0.0
    %1286 = vmatpush1.xpose.msra.mxu0 0.0
    %1287 = vmatprep.subr.mxu0 0.0
    %1288 = vmatpush1.xpose.msra.mxu0 0.0
    %1289 = vmatprep.subr.mxu0 0.0
    %1290 = vmatpush1.xpose.msra.mxu0 0.0
    %1291 = vmatprep.subr.mxu0 0.0
    %1292 = vmatpush1.xpose.msra.mxu0 0.0
    %1293 = vmatprep.subr.mxu0 0.0
    %1294 = vmatpush1.xpose.msra.mxu0 0.0
    %1295 = vmatprep.subr.mxu0 0.0
    %1296 = vmatpush1.xpose.msra.mxu0 0.0
    %1297 = vmatprep.subr.mxu0 0.0
    %1298 = vmatpush1.xpose.msra.mxu0 0.0
    %1299 = vmatprep.subr.mxu0 0.0
    %1300 = vmatpush1.xpose.msra.mxu0 0.0
    %1301 = vmatprep.subr.mxu0 0.0
    %1302 = vmatpush1.xpose.msra.mxu0 0.0
    %1303 = vmatprep.subr.mxu0 0.0
    %1304 = vmatpush1.xpose.msra.mxu0 0.0
    %1305 = vmatprep.subr.mxu0 0.0
    %1306 = vmatpush1.xpose.msra.mxu0 0.0
    %1307 = vmatprep.subr.mxu0 0.0
    %1308 = vmatpush1.xpose.msra.mxu0 0.0
    %1309 = vmatprep.subr.mxu0 0.0
    %1310 = vmatpush1.xpose.msra.mxu0 0.0
    %1311 = vmatprep.subr.mxu0 0.0
    %1312 = vmatpush1.xpose.msra.mxu0 0.0
    %1313 = vmatprep.subr.mxu0 0.0
    %1314 = vmatpush1.xpose.msra.mxu0 0.0
    %1315 = vmatprep.subr.mxu0 0.0
    %1316 = vmatpush1.xpose.msra.mxu0 0.0
    %1317 = vmatprep.subr.mxu0 0.0
    %1318 = vmatpush1.xpose.msra.mxu0 0.0
    %1319 = vmatprep.subr.mxu0 0.0
    %1320 = vmatpush1.xpose.msra.mxu0 0.0
    %1321 = vmatprep.subr.mxu0 0.0
    %1322 = vmatpush1.xpose.msra.mxu0 0.0
    %1323 = vmatprep.subr.mxu0 0.0
    %1324 = vmatpush1.xpose.msra.mxu0 0.0
    %1325 = vmatprep.subr.mxu0 0.0
    %1326 = vmatpush1.xpose.msra.mxu0 0.0
    %1327 = vmatprep.subr.mxu0 0.0
    %1328 = vmatpush1.xpose.msra.mxu0 0.0
    %1329 = vmatprep.subr.mxu0 0.0
    %1330 = vmatpush1.xpose.msra.mxu0 0.0
    %1331 = vmatprep.mubr.f32.mxu0 0.0
    %1332 = vmatmul.mubr.f32.gmra.mrb[0].mxu0 %v1263
    %v1333 = vpop.f32.mrb[0].mxu0
    %v1334 = vadd.f32 0.0, %v1333
    %v1335 = vpop.f32.mrb[0].mxu0
    %1336 = vdwg.mxu0
    %v1337 = vsel %vm195, %v1256, -inf
    %1338 = vmax.xlane.f32.xlu0 %v1337
    %v1339 = vpop.xlane.xlu0 %1338
    %v1340 = vsel %vm195, %v1334, -inf
    %1341 = vmax.xlane.f32.xlu0 %v1340
    %v1342 = vpop.xlane.xlu0 %1341
    %v1343 = vsub.f32 %v1256, %v1339
    %v1344 = vsub.f32 %v1334, %v1342
    %v1345 = vmul.f32 %v1343, 1.442695
    %v1346 = vpow.pop %v1345
    %v1347 = vmul.f32 %v1344, 1.442695
    %v1348 = vpow.pop %v1347
    %v1349 = vsel %vm195, %v1346, 0.0
    %1350 = vadd.xlane.f32.xlu0 %v1349
    %v1351 = vpop.xlane.xlu0 %1350
    %v1352 = vsel %vm195, %v1348, 0.0
    %1353 = vadd.xlane.f32.xlu0 %v1352
    %v1354 = vpop.xlane.xlu0 %1353
    %v1355 = vrcp.pop %v1351
    %v1356 = vrcp.pop %v1354
    %v1357 = vmul.f32 %v1346, %v1355
    %v1358 = vmul.f32 %v1348, %v1356
    %1359 = vrot.lane.b32.xlu0 %v184, 40
    %v1360 = vpop.permute.xlu0 %1359
    %v1363 = vsel %vm195, %v1357, 0
    %1365 = vmatprep.subr.mxu0 0.0
    %1366 = vmatpush1.msra.mxu0 %v1360
    %1367 = vmatprep.subr.mxu0 0.0
    %1368 = vmatpush1.msra.mxu0 0.0
    %1369 = vmatprep.subr.mxu0 0.0
    %1370 = vmatpush1.msra.mxu0 0.0
    %1371 = vmatprep.subr.mxu0 0.0
    %1372 = vmatpush1.msra.mxu0 0.0
    %1373 = vmatprep.subr.mxu0 0.0
    %1374 = vmatpush1.msra.mxu0 0.0
    %1375 = vmatprep.subr.mxu0 0.0
    %1376 = vmatpush1.msra.mxu0 0.0
    %1377 = vmatprep.subr.mxu0 0.0
    %1378 = vmatpush1.msra.mxu0 0.0
    %1379 = vmatprep.subr.mxu0 0.0
    %1380 = vmatpush1.msra.mxu0 0.0
    %1381 = vmatprep.subr.mxu0 0.0
    %1382 = vmatpush1.msra.mxu0 0.0
    %1383 = vmatprep.subr.mxu0 0.0
    %1384 = vmatpush1.msra.mxu0 0.0
    %1385 = vmatprep.subr.mxu0 0.0
    %1386 = vmatpush1.msra.mxu0 0.0
    %1387 = vmatprep.subr.mxu0 0.0
    %1388 = vmatpush1.msra.mxu0 0.0
    %1389 = vmatprep.subr.mxu0 0.0
    %1390 = vmatpush1.msra.mxu0 0.0
    %1391 = vmatprep.subr.mxu0 0.0
    %1392 = vmatpush1.msra.mxu0 0.0
    %1393 = vmatprep.subr.mxu0 0.0
    %1394 = vmatpush1.msra.mxu0 0.0
    %1395 = vmatprep.subr.mxu0 0.0
    %1396 = vmatpush1.msra.mxu0 0.0
    %1397 = vmatprep.subr.mxu0 0.0
    %1398 = vmatpush1.msra.mxu0 0.0
    %1399 = vmatprep.subr.mxu0 0.0
    %1400 = vmatpush1.msra.mxu0 0.0
    %1401 = vmatprep.subr.mxu0 0.0
    %1402 = vmatpush1.msra.mxu0 0.0
    %1403 = vmatprep.subr.mxu0 0.0
    %1404 = vmatpush1.msra.mxu0 0.0
    %1405 = vmatprep.subr.mxu0 0.0
    %1406 = vmatpush1.msra.mxu0 0.0
    %1407 = vmatprep.subr.mxu0 0.0
    %1408 = vmatpush1.msra.mxu0 0.0
    %1409 = vmatprep.subr.mxu0 0.0
    %1410 = vmatpush1.msra.mxu0 0.0
    %1411 = vmatprep.subr.mxu0 0.0
    %1412 = vmatpush1.msra.mxu0 0.0
    %1413 = vmatprep.subr.mxu0 0.0
    %1414 = vmatpush1.msra.mxu0 0.0
    %1415 = vmatprep.subr.mxu0 0.0
    %1416 = vmatpush1.msra.mxu0 0.0
    %1417 = vmatprep.subr.mxu0 0.0
    %1418 = vmatpush1.msra.mxu0 0.0
    %1419 = vmatprep.subr.mxu0 0.0
    %1420 = vmatpush1.msra.mxu0 0.0
    %1421 = vmatprep.subr.mxu0 0.0
    %1422 = vmatpush1.msra.mxu0 0.0
    %1423 = vmatprep.subr.mxu0 0.0
    %1424 = vmatpush1.msra.mxu0 0.0
    %1425 = vmatprep.subr.mxu0 0.0
    %1426 = vmatpush1.msra.mxu0 0.0
    %1427 = vmatprep.subr.mxu0 0.0
    %1428 = vmatpush1.msra.mxu0 0.0
    %1429 = vmatprep.mubr.f32.mxu0 0.0
    %1430 = vmatmul.mubr.f32.gmra.mrb[0].mxu0 %v1363
    %v1431 = vpop.f32.mrb[0].mxu0
    %v1432 = vadd.f32 0.0, %v1431
    %v1433 = vpop.f32.mrb[0].mxu0
    %1434 = vdwg.mxu0
    %1435 = vrot.lane.b32.xlu0 %v189, 40
    %v1436 = vpop.permute.xlu0 %1435
    %v1439 = vsel %vm195, %v1358, 0
    %1441 = vmatprep.subr.mxu0 0.0
    %1442 = vmatpush1.msra.mxu0 %v1436
    %1443 = vmatprep.subr.mxu0 0.0
    %1444 = vmatpush1.msra.mxu0 0.0
    %1445 = vmatprep.subr.mxu0 0.0
    %1446 = vmatpush1.msra.mxu0 0.0
    %1447 = vmatprep.subr.mxu0 0.0
    %1448 = vmatpush1.msra.mxu0 0.0
    %1449 = vmatprep.subr.mxu0 0.0
    %1450 = vmatpush1.msra.mxu0 0.0
    %1451 = vmatprep.subr.mxu0 0.0
    %1452 = vmatpush1.msra.mxu0 0.0
    %1453 = vmatprep.subr.mxu0 0.0
    %1454 = vmatpush1.msra.mxu0 0.0
    %1455 = vmatprep.subr.mxu0 0.0
    %1456 = vmatpush1.msra.mxu0 0.0
    %1457 = vmatprep.subr.mxu0 0.0
    %1458 = vmatpush1.msra.mxu0 0.0
    %1459 = vmatprep.subr.mxu0 0.0
    %1460 = vmatpush1.msra.mxu0 0.0
    %1461 = vmatprep.subr.mxu0 0.0
    %1462 = vmatpush1.msra.mxu0 0.0
    %1463 = vmatprep.subr.mxu0 0.0
    %1464 = vmatpush1.msra.mxu0 0.0
    %1465 = vmatprep.subr.mxu0 0.0
    %1466 = vmatpush1.msra.mxu0 0.0
    %1467 = vmatprep.subr.mxu0 0.0
    %1468 = vmatpush1.msra.mxu0 0.0
    %1469 = vmatprep.subr.mxu0 0.0
    %1470 = vmatpush1.msra.mxu0 0.0
    %1471 = vmatprep.subr.mxu0 0.0
    %1472 = vmatpush1.msra.mxu0 0.0
    %1473 = vmatprep.subr.mxu0 0.0
    %1474 = vmatpush1.msra.mxu0 0.0
    %1475 = vmatprep.subr.mxu0 0.0
    %1476 = vmatpush1.msra.mxu0 0.0
    %1477 = vmatprep.subr.mxu0 0.0
    %1478 = vmatpush1.msra.mxu0 0.0
    %1479 = vmatprep.subr.mxu0 0.0
    %1480 = vmatpush1.msra.mxu0 0.0
    %1481 = vmatprep.subr.mxu0 0.0
    %1482 = vmatpush1.msra.mxu0 0.0
    %1483 = vmatprep.subr.mxu0 0.0
    %1484 = vmatpush1.msra.mxu0 0.0
    %1485 = vmatprep.subr.mxu0 0.0
    %1486 = vmatpush1.msra.mxu0 0.0
    %1487 = vmatprep.subr.mxu0 0.0
    %1488 = vmatpush1.msra.mxu0 0.0
    %1489 = vmatprep.subr.mxu0 0.0
    %1490 = vmatpush1.msra.mxu0 0.0
    %1491 = vmatprep.subr.mxu0 0.0
    %1492 = vmatpush1.msra.mxu0 0.0
    %1493 = vmatprep.subr.mxu0 0.0
    %1494 = vmatpush1.msra.mxu0 0.0
    %1495 = vmatprep.subr.mxu0 0.0
    %1496 = vmatpush1.msra.mxu0 0.0
    %1497 = vmatprep.subr.mxu0 0.0
    %1498 = vmatpush1.msra.mxu0 0.0
    %1499 = vmatprep.subr.mxu0 0.0
    %1500 = vmatpush1.msra.mxu0 0.0
    %1501 = vmatprep.subr.mxu0 0.0
    %1502 = vmatpush1.msra.mxu0 0.0
    %1503 = vmatprep.subr.mxu0 0.0
    %1504 = vmatpush1.msra.mxu0 0.0
    %1505 = vmatprep.mubr.f32.mxu0 0.0
    %1506 = vmatmul.mubr.f32.gmra.mrb[0].mxu0 %v1439
    %v1507 = vpop.f32.mrb[0].mxu0
    %v1508 = vadd.f32 0.0, %v1507
    %v1509 = vpop.f32.mrb[0].mxu0
    %1510 = vdwg.mxu0
    %1513 = vrot.lane.b32.xlu0 %v772, 8
    %v1514 = vpop.permute.xlu0 %1513
    %1515 = vrot.lane.b32.xlu0 %v848, 8
    %v1516 = vpop.permute.xlu0 %1515
    %1521 = vrot.lane.b32.xlu0 %v1102, 16
    %v1522 = vpop.permute.xlu0 %1521
    %1523 = vrot.lane.b32.xlu0 %v1178, 16
    %v1524 = vpop.permute.xlu0 %1523
    %1529 = vrot.lane.b32.xlu0 %v1432, 24
    %v1530 = vpop.permute.xlu0 %1529
    %1531 = vrot.lane.b32.xlu0 %v1508, 24
    %v1532 = vpop.permute.xlu0 %1531
    %v1535 = vsel %vm195, %v442, %v1514
    %v1536 = vsel %vm195, %v518, %v1516
    %vm1537 = vcmask 130048
    %v1538 = vsel %vm1537, %v1535, %v1522
    %v1539 = vsel %vm1537, %v1536, %v1524
    %vm1540 = vcmask 195584
    %v1541 = vsel %vm1540, %v1538, %v1530
    %v1542 = vsel %vm1540, %v1539, %v1532
    %v1543 = vld [vmem:[%s4] sm:$0xff]
    %v1544 = vld [vmem:[%s4 + $0x8] sm:$0xff]
    %v1545 = vld [vmem:[%s4 + $0x10] sm:$0xff]
    %v1546 = vld [vmem:[%s4 + $0x18] sm:$0xff]
    %v1548 = vsel %vm57, %v1541, 0
    %v1551 = vsel %vm57, %v1542, 0
    %1553 = vmatprep.subr.mxu0 0.0
    %1554 = vmatpush1.msra.mxu0 %v1543
    %1555 = vmatprep.subr.mxu0 0.0
    %1556 = vmatpush1.msra.mxu0 %v1544
    %1557 = vmatprep.subr.mxu0 0.0
    %1558 = vmatpush1.msra.mxu0 %v1545
    %1559 = vmatprep.subr.mxu0 0.0
    %1560 = vmatpush1.msra.mxu0 %v1546
    %1561 = vmatprep.subr.mxu0 0.0
    %1562 = vmatpush1.msra.mxu0 0.0
    %1563 = vmatprep.subr.mxu0 0.0
    %1564 = vmatpush1.msra.mxu0 0.0
    %1565 = vmatprep.subr.mxu0 0.0
    %1566 = vmatpush1.msra.mxu0 0.0
    %1567 = vmatprep.subr.mxu0 0.0
    %1568 = vmatpush1.msra.mxu0 0.0
    %1569 = vmatprep.subr.mxu0 0.0
    %1570 = vmatpush1.msra.mxu0 0.0
    %1571 = vmatprep.subr.mxu0 0.0
    %1572 = vmatpush1.msra.mxu0 0.0
    %1573 = vmatprep.subr.mxu0 0.0
    %1574 = vmatpush1.msra.mxu0 0.0
    %1575 = vmatprep.subr.mxu0 0.0
    %1576 = vmatpush1.msra.mxu0 0.0
    %1577 = vmatprep.subr.mxu0 0.0
    %1578 = vmatpush1.msra.mxu0 0.0
    %1579 = vmatprep.subr.mxu0 0.0
    %1580 = vmatpush1.msra.mxu0 0.0
    %1581 = vmatprep.subr.mxu0 0.0
    %1582 = vmatpush1.msra.mxu0 0.0
    %1583 = vmatprep.subr.mxu0 0.0
    %1584 = vmatpush1.msra.mxu0 0.0
    %1585 = vmatprep.subr.mxu0 0.0
    %1586 = vmatpush1.msra.mxu0 0.0
    %1587 = vmatprep.subr.mxu0 0.0
    %1588 = vmatpush1.msra.mxu0 0.0
    %1589 = vmatprep.subr.mxu0 0.0
    %1590 = vmatpush1.msra.mxu0 0.0
    %1591 = vmatprep.subr.mxu0 0.0
    %1592 = vmatpush1.msra.mxu0 0.0
    %1593 = vmatprep.subr.mxu0 0.0
    %1594 = vmatpush1.msra.mxu0 0.0
    %1595 = vmatprep.subr.mxu0 0.0
    %1596 = vmatpush1.msra.mxu0 0.0
    %1597 = vmatprep.subr.mxu0 0.0
    %1598 = vmatpush1.msra.mxu0 0.0
    %1599 = vmatprep.subr.mxu0 0.0
    %1600 = vmatpush1.msra.mxu0 0.0
    %1601 = vmatprep.subr.mxu0 0.0
    %1602 = vmatpush1.msra.mxu0 0.0
    %1603 = vmatprep.subr.mxu0 0.0
    %1604 = vmatpush1.msra.mxu0 0.0
    %1605 = vmatprep.subr.mxu0 0.0
    %1606 = vmatpush1.msra.mxu0 0.0
    %1607 = vmatprep.subr.mxu0 0.0
    %1608 = vmatpush1.msra.mxu0 0.0
    %1609 = vmatprep.subr.mxu0 0.0
    %1610 = vmatpush1.msra.mxu0 0.0
    %1611 = vmatprep.subr.mxu0 0.0
    %1612 = vmatpush1.msra.mxu0 0.0
    %1613 = vmatprep.subr.mxu0 0.0
    %1614 = vmatpush1.msra.mxu0 0.0
    %1615 = vmatprep.subr.mxu0 0.0
    %1616 = vmatpush1.msra.mxu0 0.0
    %1617 = vmatprep.mubr.f32.mxu0 0.0
    %1618 = vmatmul.mubr.f32.gmra.mrb[0].mxu0 %v1548
    %v1619 = vpop.f32.mrb[0].mxu0
    %v1620 = vadd.f32 0.0, %v1619
    %v1621 = vpop.f32.mrb[0].mxu0
    %1622 = vmatprep.mubr.f32.mxu0 0.0
    %1623 = vmatmul.mubr.f32.gmra.mrb[0].mxu0 %v1551
    %v1624 = vpop.f32.mrb[0].mxu0
    %v1625 = vadd.f32 0.0, %v1624
    %v1626 = vpop.f32.mrb[0].mxu0
    %1627 = vdwg.mxu0
    %v1628 = vadd.f32 %v53, %v1620
    %v1629 = vadd.f32 %v54, %v1625
    %v1630 = vld [vmem:[%s5] sm:$0x1]
    %v1631 = vld [vmem:[%s6] sm:$0x1]
    %v1632 = vsel %vm57, %v1628, 0.0
    %1633 = vadd.xlane.f32.xlu0 %v1632
    %v1634 = vpop.xlane.xlu0 %1633
    %v1635 = vsel %vm57, %v1629, 0.0
    %1636 = vadd.xlane.f32.xlu0 %v1635
    %v1637 = vpop.xlane.xlu0 %1636
    %v1638 = vmul.f32 %v1634, %v64
    %v1639 = vmul.f32 %v1637, %v64
    %v1640 = vmul.f32 %v1628, %v1628
    %v1641 = vmul.f32 %v1629, %v1629
    %v1642 = vsel %vm57, %v1640, 0.0
    %1643 = vadd.xlane.f32.xlu0 %v1642
    %v1644 = vpop.xlane.xlu0 %1643
    %v1645 = vsel %vm57, %v1641, 0.0
    %1646 = vadd.xlane.f32.xlu0 %v1645
    %v1647 = vpop.xlane.xlu0 %1646
    %v1648 = vmul.f32 %v1644, %v64
    %v1649 = vmul.f32 %v1647, %v64
    %v1650 = vmul.f32 %v1638, %v1638
    %v1651 = vmul.f32 %v1639, %v1639
    %v1652 = vsub.f32 %v1648, %v1650
    %v1653 = vsub.f32 %v1649, %v1651
    %v1654 = vmax.f32 %v1652, 0.0
    %v1655 = vmax.f32 %v1653, 0.0
    %v1656 = vsub.f32 %v1628, %v1638
    %v1657 = vsub.f32 %v1629, %v1639
    %v1658 = vadd.f32 %v1654, 1e-05
    %v1659 = vadd.f32 %v1655, 1e-05
    %v1660 = vrsqrt.pop %v1658
    %v1661 = vrsqrt.pop %v1659
    %v1662 = vmul.f32 %v1656, %v1660
    %v1663 = vmul.f32 %v1657, %v1661
    %v1665 = vlaneseq
    %v1666 = vshrl.u32 %v1665, 7
    %v1667 = vsub.s32 0, %v1666
    %v1668 = vrot.slane %v1630, %v1667
    %v1670 = vmul.f32 %v1662, %v1668
    %v1671 = vmul.f32 %v1663, %v1668
    %v1673 = vlaneseq
    %v1674 = vshrl.u32 %v1673, 7
    %v1675 = vsub.s32 0, %v1674
    %v1676 = vrot.slane %v1631, %v1675
    %v1678 = vadd.f32 %v1670, %v1676
    %v1679 = vadd.f32 %v1671, %v1676
    %v1680 = vld [vmem:[%s7] sm:$0xff]
    %v1681 = vld [vmem:[%s7 + $0x8] sm:$0xff]
    %v1682 = vld [vmem:[%s7 + $0x10] sm:$0xff]
    %v1683 = vld [vmem:[%s7 + $0x18] sm:$0xff]
    %v1684 = vld [vmem:[%s8] sm:$0x1]
    %v1686 = vlaneseq
    %v1687 = vshrl.u32 %v1686, 7
    %v1688 = vsub.s32 0, %v1687
    %v1689 = vrot.slane %v1684, %v1688
    %v1692 = vsel %vm57, %v1678, 0
    %v1695 = vsel %vm57, %v1679, 0
    %1697 = vmatprep.subr.mxu0 0.0
    %1698 = vmatpush1.msra.mxu0 %v1680
    %1699 = vmatprep.subr.mxu0 0.0
    %1700 = vmatpush1.msra.mxu0 %v1681
    %1701 = vmatprep.subr.mxu0 0.0
    %1702 = vmatpush1.msra.mxu0 %v1682
    %1703 = vmatprep.subr.mxu0 0.0
    %1704 = vmatpush1.msra.mxu0 %v1683
    %1705 = vmatprep.subr.mxu0 0.0
    %1706 = vmatpush1.msra.mxu0 0.0
    %1707 = vmatprep.subr.mxu0 0.0
    %1708 = vmatpush1.msra.mxu0 0.0
    %1709 = vmatprep.subr.mxu0 0.0
    %1710 = vmatpush1.msra.mxu0 0.0
    %1711 = vmatprep.subr.mxu0 0.0
    %1712 = vmatpush1.msra.mxu0 0.0
    %1713 = vmatprep.subr.mxu0 0.0
    %1714 = vmatpush1.msra.mxu0 0.0
    %1715 = vmatprep.subr.mxu0 0.0
    %1716 = vmatpush1.msra.mxu0 0.0
    %1717 = vmatprep.subr.mxu0 0.0
    %1718 = vmatpush1.msra.mxu0 0.0
    %1719 = vmatprep.subr.mxu0 0.0
    %1720 = vmatpush1.msra.mxu0 0.0
    %1721 = vmatprep.subr.mxu0 0.0
    %1722 = vmatpush1.msra.mxu0 0.0
    %1723 = vmatprep.subr.mxu0 0.0
    %1724 = vmatpush1.msra.mxu0 0.0
    %1725 = vmatprep.subr.mxu0 0.0
    %1726 = vmatpush1.msra.mxu0 0.0
    %1727 = vmatprep.subr.mxu0 0.0
    %1728 = vmatpush1.msra.mxu0 0.0
    %1729 = vmatprep.subr.mxu0 0.0
    %1730 = vmatpush1.msra.mxu0 0.0
    %1731 = vmatprep.subr.mxu0 0.0
    %1732 = vmatpush1.msra.mxu0 0.0
    %1733 = vmatprep.subr.mxu0 0.0
    %1734 = vmatpush1.msra.mxu0 0.0
    %1735 = vmatprep.subr.mxu0 0.0
    %1736 = vmatpush1.msra.mxu0 0.0
    %1737 = vmatprep.subr.mxu0 0.0
    %1738 = vmatpush1.msra.mxu0 0.0
    %1739 = vmatprep.subr.mxu0 0.0
    %1740 = vmatpush1.msra.mxu0 0.0
    %1741 = vmatprep.subr.mxu0 0.0
    %1742 = vmatpush1.msra.mxu0 0.0
    %1743 = vmatprep.subr.mxu0 0.0
    %1744 = vmatpush1.msra.mxu0 0.0
    %1745 = vmatprep.subr.mxu0 0.0
    %1746 = vmatpush1.msra.mxu0 0.0
    %1747 = vmatprep.subr.mxu0 0.0
    %1748 = vmatpush1.msra.mxu0 0.0
    %1749 = vmatprep.subr.mxu0 0.0
    %1750 = vmatpush1.msra.mxu0 0.0
    %1751 = vmatprep.subr.mxu0 0.0
    %1752 = vmatpush1.msra.mxu0 0.0
    %1753 = vmatprep.subr.mxu0 0.0
    %1754 = vmatpush1.msra.mxu0 0.0
    %1755 = vmatprep.subr.mxu0 0.0
    %1756 = vmatpush1.msra.mxu0 0.0
    %1757 = vmatprep.subr.mxu0 0.0
    %1758 = vmatpush1.msra.mxu0 0.0
    %1759 = vmatprep.subr.mxu0 0.0
    %1760 = vmatpush1.msra.mxu0 0.0
    %1761 = vmatprep.mubr.f32.mxu0 0.0
    %1762 = vmatmul.mubr.f32.gmra.mrb[0].mxu0 %v1692
    %v1763 = vpop.f32.mrb[0].mxu0
    %v1764 = vadd.f32 %v1689, %v1763
    %v1765 = vpop.f32.mrb[0].mxu0
    %1766 = vmatprep.mubr.f32.mxu0 0.0
    %1767 = vmatmul.mubr.f32.gmra.mrb[0].mxu0 %v1695
    %v1768 = vpop.f32.mrb[0].mxu0
    %v1769 = vadd.f32 %v1689, %v1768
    %v1770 = vpop.f32.mrb[0].mxu0
    %1771 = vdwg.mxu0
    %v1772 = vmul.f32 %v1764, 0.5
    %v1773 = vmul.f32 %v1769, 0.5
    %v1774 = vmul.f32 %v1764, 0.70710677
    %v1775 = vmul.f32 %v1769, 0.70710677
    %v1776 = verf.f32.pop %v1774
    %v1777 = verf.f32.pop %v1775
    %v1778 = vadd.f32 %v1776, 1.0
    %v1779 = vadd.f32 %v1777, 1.0
    %v1780 = vmul.f32 %v1772, %v1778
    %v1781 = vmul.f32 %v1773, %v1779
    %v1782 = vld [vmem:[%s9] sm:$0xff]
    %v1783 = vld [vmem:[%s9 + $0x8] sm:$0xff]
    %v1784 = vld [vmem:[%s9 + $0x10] sm:$0xff]
    %v1785 = vld [vmem:[%s9 + $0x18] sm:$0xff]
    %v1786 = vld [vmem:[%s9 + $0x20] sm:$0xff]
    %v1787 = vld [vmem:[%s9 + $0x28] sm:$0xff]
    %v1788 = vld [vmem:[%s9 + $0x30] sm:$0xff]
    %v1789 = vld [vmem:[%s9 + $0x38] sm:$0xff]
    %vm1790 = vcmask 523264
    %v1792 = vsel %vm1790, %v1780, 0
    %v1795 = vsel %vm1790, %v1781, 0
    %1797 = vmatprep.subr.mxu0 0.0
    %1798 = vmatpush1.msra.mxu0 %v1782
    %1799 = vmatprep.subr.mxu0 0.0
    %1800 = vmatpush1.msra.mxu0 %v1783
    %1801 = vmatprep.subr.mxu0 0.0
    %1802 = vmatpush1.msra.mxu0 %v1784
    %1803 = vmatprep.subr.mxu0 0.0
    %1804 = vmatpush1.msra.mxu0 %v1785
    %1805 = vmatprep.subr.mxu0 0.0
    %1806 = vmatpush1.msra.mxu0 %v1786
    %1807 = vmatprep.subr.mxu0 0.0
    %1808 = vmatpush1.msra.mxu0 %v1787
    %1809 = vmatprep.subr.mxu0 0.0
    %1810 = vmatpush1.msra.mxu0 %v1788
    %1811 = vmatprep.subr.mxu0 0.0
    %1812 = vmatpush1.msra.mxu0 %v1789
    %1813 = vmatprep.subr.mxu0 0.0
    %1814 = vmatpush1.msra.mxu0 0.0
    %1815 = vmatprep.subr.mxu0 0.0
    %1816 = vmatpush1.msra.mxu0 0.0
    %1817 = vmatprep.subr.mxu0 0.0
    %1818 = vmatpush1.msra.mxu0 0.0
    %1819 = vmatprep.subr.mxu0 0.0
    %1820 = vmatpush1.msra.mxu0 0.0
    %1821 = vmatprep.subr.mxu0 0.0
    %1822 = vmatpush1.msra.mxu0 0.0
    %1823 = vmatprep.subr.mxu0 0.0
    %1824 = vmatpush1.msra.mxu0 0.0
    %1825 = vmatprep.subr.mxu0 0.0
    %1826 = vmatpush1.msra.mxu0 0.0
    %1827 = vmatprep.subr.mxu0 0.0
    %1828 = vmatpush1.msra.mxu0 0.0
    %1829 = vmatprep.subr.mxu0 0.0
    %1830 = vmatpush1.msra.mxu0 0.0
    %1831 = vmatprep.subr.mxu0 0.0
    %1832 = vmatpush1.msra.mxu0 0.0
    %1833 = vmatprep.subr.mxu0 0.0
    %1834 = vmatpush1.msra.mxu0 0.0
    %1835 = vmatprep.subr.mxu0 0.0
    %1836 = vmatpush1.msra.mxu0 0.0
    %1837 = vmatprep.subr.mxu0 0.0
    %1838 = vmatpush1.msra.mxu0 0.0
    %1839 = vmatprep.subr.mxu0 0.0
    %1840 = vmatpush1.msra.mxu0 0.0
    %1841 = vmatprep.subr.mxu0 0.0
    %1842 = vmatpush1.msra.mxu0 0.0
    %1843 = vmatprep.subr.mxu0 0.0
    %1844 = vmatpush1.msra.mxu0 0.0
    %1845 = vmatprep.subr.mxu0 0.0
    %1846 = vmatpush1.msra.mxu0 0.0
    %1847 = vmatprep.subr.mxu0 0.0
    %1848 = vmatpush1.msra.mxu0 0.0
    %1849 = vmatprep.subr.mxu0 0.0
    %1850 = vmatpush1.msra.mxu0 0.0
    %1851 = vmatprep.subr.mxu0 0.0
    %1852 = vmatpush1.msra.mxu0 0.0
    %1853 = vmatprep.subr.mxu0 0.0
    %1854 = vmatpush1.msra.mxu0 0.0
    %1855 = vmatprep.subr.mxu0 0.0
    %1856 = vmatpush1.msra.mxu0 0.0
    %1857 = vmatprep.subr.mxu0 0.0
    %1858 = vmatpush1.msra.mxu0 0.0
    %1859 = vmatprep.subr.mxu0 0.0
    %1860 = vmatpush1.msra.mxu0 0.0
    %1861 = vmatprep.mubr.f32.mxu0 0.0
    %1862 = vmatmul.mubr.f32.gmra.mrb[0].mxu0 %v1792
    %v1863 = vpop.f32.mrb[0].mxu0
    %v1864 = vadd.f32 0.0, %v1863
    %v1865 = vpop.f32.mrb[0].mxu0
    %1866 = vmatprep.mubr.f32.mxu0 0.0
    %1867 = vmatmul.mubr.f32.gmra.mrb[0].mxu0 %v1795
    %v1868 = vpop.f32.mrb[0].mxu0
    %v1869 = vadd.f32 0.0, %v1868
    %v1870 = vpop.f32.mrb[0].mxu0
    %1871 = vdwg.mxu0
    %v1872 = vadd.f32 %v1628, %v1864
    %v1873 = vadd.f32 %v1629, %v1869
    %v1874 = vld [vmem:[%s10] sm:$0x1]
    %v1876 = vlaneseq
    %v1877 = vshrl.u32 %v1876, 7
    %v1878 = vsub.s32 0, %v1877
    %v1879 = vrot.slane %v1874, %v1878
    %v1881 = vadd.f32 %v1872, %v1879
    %v1882 = vadd.f32 %v1873, %v1879
    %s1883 = scalar_lea.vmem %s1, 1
    %v1884 = vld [vmem:[%s1883] sm:$0x1]
    %s1885 = scalar_lea.vmem %s2, 1
    %v1886 = vld [vmem:[%s1885] sm:$0x1]
    %v1887 = vsel %vm57, %v1881, 0.0
    %1888 = vadd.xlane.f32.xlu0 %v1887
    %v1889 = vpop.xlane.xlu0 %1888
    %v1890 = vsel %vm57, %v1882, 0.0
    %1891 = vadd.xlane.f32.xlu0 %v1890
    %v1892 = vpop.xlane.xlu0 %1891
    %v1893 = vmul.f32 %v1889, %v64
    %v1894 = vmul.f32 %v1892, %v64
    %v1895 = vmul.f32 %v1881, %v1881
    %v1896 = vmul.f32 %v1882, %v1882
    %v1897 = vsel %vm57, %v1895, 0.0
    %1898 = vadd.xlane.f32.xlu0 %v1897
    %v1899 = vpop.xlane.xlu0 %1898
    %v1900 = vsel %vm57, %v1896, 0.0
    %1901 = vadd.xlane.f32.xlu0 %v1900
    %v1902 = vpop.xlane.xlu0 %1901
    %v1903 = vmul.f32 %v1899, %v64
    %v1904 = vmul.f32 %v1902, %v64
    %v1905 = vmul.f32 %v1893, %v1893
    %v1906 = vmul.f32 %v1894, %v1894
    %v1907 = vsub.f32 %v1903, %v1905
    %v1908 = vsub.f32 %v1904, %v1906
    %v1909 = vmax.f32 %v1907, 0.0
    %v1910 = vmax.f32 %v1908, 0.0
    %v1911 = vsub.f32 %v1881, %v1893
    %v1912 = vsub.f32 %v1882, %v1894
    %v1913 = vadd.f32 %v1909, 1e-05
    %v1914 = vadd.f32 %v1910, 1e-05
    %v1915 = vrsqrt.pop %v1913
    %v1916 = vrsqrt.pop %v1914
    %v1917 = vmul.f32 %v1911, %v1915
    %v1918 = vmul.f32 %v1912, %v1916
    %v1920 = vlaneseq
    %v1921 = vshrl.u32 %v1920, 7
    %v1922 = vsub.s32 0, %v1921
    %v1923 = vrot.slane %v1884, %v1922
    %v1925 = vmul.f32 %v1917, %v1923
    %v1926 = vmul.f32 %v1918, %v1923
    %v1928 = vlaneseq
    %v1929 = vshrl.u32 %v1928, 7
    %v1930 = vsub.s32 0, %v1929
    %v1931 = vrot.slane %v1886, %v1930
    %v1933 = vadd.f32 %v1925, %v1931
    %v1934 = vadd.f32 %v1926, %v1931
    %s1935 = scalar_lea.vmem %s3, 32
    %v1936 = vld [vmem:[%s1935] sm:$0xff]
    %v1937 = vld [vmem:[%s1935 + $0x8] sm:$0xff]
    %v1938 = vld [vmem:[%s1935 + $0x10] sm:$0xff]
    %v1939 = vld [vmem:[%s1935 + $0x18] sm:$0xff]
    %v1941 = vsel %vm57, %v1933, 0
    %v1944 = vsel %vm57, %v1934, 0
    %1946 = vmatprep.subr.mxu0 0.0
    %1947 = vmatpush1.msra.mxu0 %v1936
    %1948 = vmatprep.subr.mxu0 0.0
    %1949 = vmatpush1.msra.mxu0 %v1937
    %1950 = vmatprep.subr.mxu0 0.0
    %1951 = vmatpush1.msra.mxu0 %v1938
    %1952 = vmatprep.subr.mxu0 0.0
    %1953 = vmatpush1.msra.mxu0 %v1939
    %1954 = vmatprep.subr.mxu0 0.0
    %1955 = vmatpush1.msra.mxu0 0.0
    %1956 = vmatprep.subr.mxu0 0.0
    %1957 = vmatpush1.msra.mxu0 0.0
    %1958 = vmatprep.subr.mxu0 0.0
    %1959 = vmatpush1.msra.mxu0 0.0
    %1960 = vmatprep.subr.mxu0 0.0
    %1961 = vmatpush1.msra.mxu0 0.0
    %1962 = vmatprep.subr.mxu0 0.0
    %1963 = vmatpush1.msra.mxu0 0.0
    %1964 = vmatprep.subr.mxu0 0.0
    %1965 = vmatpush1.msra.mxu0 0.0
    %1966 = vmatprep.subr.mxu0 0.0
    %1967 = vmatpush1.msra.mxu0 0.0
    %1968 = vmatprep.subr.mxu0 0.0
    %1969 = vmatpush1.msra.mxu0 0.0
    %1970 = vmatprep.subr.mxu0 0.0
    %1971 = vmatpush1.msra.mxu0 0.0
    %1972 = vmatprep.subr.mxu0 0.0
    %1973 = vmatpush1.msra.mxu0 0.0
    %1974 = vmatprep.subr.mxu0 0.0
    %1975 = vmatpush1.msra.mxu0 0.0
    %1976 = vmatprep.subr.mxu0 0.0
    %1977 = vmatpush1.msra.mxu0 0.0
    %1978 = vmatprep.subr.mxu0 0.0
    %1979 = vmatpush1.msra.mxu0 0.0
    %1980 = vmatprep.subr.mxu0 0.0
    %1981 = vmatpush1.msra.mxu0 0.0
    %1982 = vmatprep.subr.mxu0 0.0
    %1983 = vmatpush1.msra.mxu0 0.0
    %1984 = vmatprep.subr.mxu0 0.0
    %1985 = vmatpush1.msra.mxu0 0.0
    %1986 = vmatprep.subr.mxu0 0.0
    %1987 = vmatpush1.msra.mxu0 0.0
    %1988 = vmatprep.subr.mxu0 0.0
    %1989 = vmatpush1.msra.mxu0 0.0
    %1990 = vmatprep.subr.mxu0 0.0
    %1991 = vmatpush1.msra.mxu0 0.0
    %1992 = vmatprep.subr.mxu0 0.0
    %1993 = vmatpush1.msra.mxu0 0.0
    %1994 = vmatprep.subr.mxu0 0.0
    %1995 = vmatpush1.msra.mxu0 0.0
    %1996 = vmatprep.subr.mxu0 0.0
    %1997 = vmatpush1.msra.mxu0 0.0
    %1998 = vmatprep.subr.mxu0 0.0
    %1999 = vmatpush1.msra.mxu0 0.0
    %2000 = vmatprep.subr.mxu0 0.0
    %2001 = vmatpush1.msra.mxu0 0.0
    %2002 = vmatprep.subr.mxu0 0.0
    %2003 = vmatpush1.msra.mxu0 0.0
    %2004 = vmatprep.subr.mxu0 0.0
    %2005 = vmatpush1.msra.mxu0 0.0
    %2006 = vmatprep.subr.mxu0 0.0
    %2007 = vmatpush1.msra.mxu0 0.0
    %2008 = vmatprep.subr.mxu0 0.0
    %2009 = vmatpush1.msra.mxu0 0.0
    %2010 = vmatprep.mubr.f32.mxu0 0.0
    %2011 = vmatmul.mubr.f32.gmra.mrb[0].mxu0 %v1941
    %v2012 = vpop.f32.mrb[0].mxu0
    %v2013 = vadd.f32 0.0, %v2012
    %v2014 = vpop.f32.mrb[0].mxu0
    %2015 = vmatprep.mubr.f32.mxu0 0.0
    %2016 = vmatmul.mubr.f32.gmra.mrb[0].mxu0 %v1944
    %v2017 = vpop.f32.mrb[0].mxu0
    %v2018 = vadd.f32 0.0, %v2017
    %v2019 = vpop.f32.mrb[0].mxu0
    %2020 = vdwg.mxu0
    %2022 = vrot.lane.b32.xlu0 %v2013, 96
    %v2023 = vpop.permute.xlu0 %2022
    %v2024 = vsel %vm195, %v2013, 0
    %v2026 = vsel %vm195, %v2023, 0
    %2028 = vmatprep.subr.mxu0 0.0
    %2029 = vmatpush1.xpose.msra.mxu0 %v2026
    %2030 = vmatprep.subr.mxu0 0.0
    %2031 = vmatpush1.xpose.msra.mxu0 0.0
    %2032 = vmatprep.subr.mxu0 0.0
    %2033 = vmatpush1.xpose.msra.mxu0 0.0
    %2034 = vmatprep.subr.mxu0 0.0
    %2035 = vmatpush1.xpose.msra.mxu0 0.0
    %2036 = vmatprep.subr.mxu0 0.0
    %2037 = vmatpush1.xpose.msra.mxu0 0.0
    %2038 = vmatprep.subr.mxu0 0.0
    %2039 = vmatpush1.xpose.msra.mxu0 0.0
    %2040 = vmatprep.subr.mxu0 0.0
    %2041 = vmatpush1.xpose.msra.mxu0 0.0
    %2042 = vmatprep.subr.mxu0 0.0
    %2043 = vmatpush1.xpose.msra.mxu0 0.0
    %2044 = vmatprep.subr.mxu0 0.0
    %2045 = vmatpush1.xpose.msra.mxu0 0.0
    %2046 = vmatprep.subr.mxu0 0.0
    %2047 = vmatpush1.xpose.msra.mxu0 0.0
    %2048 = vmatprep.subr.mxu0 0.0
    %2049 = vmatpush1.xpose.msra.mxu0 0.0
    %2050 = vmatprep.subr.mxu0 0.0
    %2051 = vmatpush1.xpose.msra.mxu0 0.0
    %2052 = vmatprep.subr.mxu0 0.0
    %2053 = vmatpush1.xpose.msra.mxu0 0.0
    %2054 = vmatprep.subr.mxu0 0.0
    %2055 = vmatpush1.xpose.msra.mxu0 0.0
    %2056 = vmatprep.subr.mxu0 0.0
    %2057 = vmatpush1.xpose.msra.mxu0 0.0
    %2058 = vmatprep.subr.mxu0 0.0
    %2059 = vmatpush1.xpose.msra.mxu0 0.0
    %2060 = vmatprep.subr.mxu0 0.0
    %2061 = vmatpush1.xpose.msra.mxu0 0.0
    %2062 = vmatprep.subr.mxu0 0.0
    %2063 = vmatpush1.xpose.msra.mxu0 0.0
    %2064 = vmatprep.subr.mxu0 0.0
    %2065 = vmatpush1.xpose.msra.mxu0 0.0
    %2066 = vmatprep.subr.mxu0 0.0
    %2067 = vmatpush1.xpose.msra.mxu0 0.0
    %2068 = vmatprep.subr.mxu0 0.0
    %2069 = vmatpush1.xpose.msra.mxu0 0.0
    %2070 = vmatprep.subr.mxu0 0.0
    %2071 = vmatpush1.xpose.msra.mxu0 0.0
    %2072 = vmatprep.subr.mxu0 0.0
    %2073 = vmatpush1.xpose.msra.mxu0 0.0
    %2074 = vmatprep.subr.mxu0 0.0
    %2075 = vmatpush1.xpose.msra.mxu0 0.0
    %2076 = vmatprep.subr.mxu0 0.0
    %2077 = vmatpush1.xpose.msra.mxu0 0.0
    %2078 = vmatprep.subr.mxu0 0.0
    %2079 = vmatpush1.xpose.msra.mxu0 0.0
    %2080 = vmatprep.subr.mxu0 0.0
    %2081 = vmatpush1.xpose.msra.mxu0 0.0
    %2082 = vmatprep.subr.mxu0 0.0
    %2083 = vmatpush1.xpose.msra.mxu0 0.0
    %2084 = vmatprep.subr.mxu0 0.0
    %2085 = vmatpush1.xpose.msra.mxu0 0.0
    %2086 = vmatprep.subr.mxu0 0.0
    %2087 = vmatpush1.xpose.msra.mxu0 0.0
    %2088 = vmatprep.subr.mxu0 0.0
    %2089 = vmatpush1.xpose.msra.mxu0 0.0
    %2090 = vmatprep.subr.mxu0 0.0
    %2091 = vmatpush1.xpose.msra.mxu0 0.0
    %2092 = vmatprep.mubr.f32.mxu0 0.0
    %2093 = vmatmul.mubr.f32.gmra.mrb[0].mxu0 %v2024
    %v2094 = vpop.f32.mrb[0].mxu0
    %v2095 = vadd.f32 0.0, %v2094
    %v2096 = vpop.f32.mrb[0].mxu0
    %2097 = vdwg.mxu0
    %2099 = vrot.lane.b32.xlu0 %v2018, 96
    %v2100 = vpop.permute.xlu0 %2099
    %v2101 = vsel %vm195, %v2018, 0
    %v2103 = vsel %vm195, %v2100, 0
    %2105 = vmatprep.subr.mxu0 0.0
    %2106 = vmatpush1.xpose.msra.mxu0 %v2103
    %2107 = vmatprep.subr.mxu0 0.0
    %2108 = vmatpush1.xpose.msra.mxu0 0.0
    %2109 = vmatprep.subr.mxu0 0.0
    %2110 = vmatpush1.xpose.msra.mxu0 0.0
    %2111 = vmatprep.subr.mxu0 0.0
    %2112 = vmatpush1.xpose.msra.mxu0 0.0
    %2113 = vmatprep.subr.mxu0 0.0
    %2114 = vmatpush1.xpose.msra.mxu0 0.0
    %2115 = vmatprep.subr.mxu0 0.0
    %2116 = vmatpush1.xpose.msra.mxu0 0.0
    %2117 = vmatprep.subr.mxu0 0.0
    %2118 = vmatpush1.xpose.msra.mxu0 0.0
    %2119 = vmatprep.subr.mxu0 0.0
    %2120 = vmatpush1.xpose.msra.mxu0 0.0
    %2121 = vmatprep.subr.mxu0 0.0
    %2122 = vmatpush1.xpose.msra.mxu0 0.0
    %2123 = vmatprep.subr.mxu0 0.0
    %2124 = vmatpush1.xpose.msra.mxu0 0.0
    %2125 = vmatprep.subr.mxu0 0.0
    %2126 = vmatpush1.xpose.msra.mxu0 0.0
    %2127 = vmatprep.subr.mxu0 0.0
    %2128 = vmatpush1.xpose.msra.mxu0 0.0
    %2129 = vmatprep.subr.mxu0 0.0
    %2130 = vmatpush1.xpose.msra.mxu0 0.0
    %2131 = vmatprep.subr.mxu0 0.0
    %2132 = vmatpush1.xpose.msra.mxu0 0.0
    %2133 = vmatprep.subr.mxu0 0.0
    %2134 = vmatpush1.xpose.msra.mxu0 0.0
    %2135 = vmatprep.subr.mxu0 0.0
    %2136 = vmatpush1.xpose.msra.mxu0 0.0
    %2137 = vmatprep.subr.mxu0 0.0
    %2138 = vmatpush1.xpose.msra.mxu0 0.0
    %2139 = vmatprep.subr.mxu0 0.0
    %2140 = vmatpush1.xpose.msra.mxu0 0.0
    %2141 = vmatprep.subr.mxu0 0.0
    %2142 = vmatpush1.xpose.msra.mxu0 0.0
    %2143 = vmatprep.subr.mxu0 0.0
    %2144 = vmatpush1.xpose.msra.mxu0 0.0
    %2145 = vmatprep.subr.mxu0 0.0
    %2146 = vmatpush1.xpose.msra.mxu0 0.0
    %2147 = vmatprep.subr.mxu0 0.0
    %2148 = vmatpush1.xpose.msra.mxu0 0.0
    %2149 = vmatprep.subr.mxu0 0.0
    %2150 = vmatpush1.xpose.msra.mxu0 0.0
    %2151 = vmatprep.subr.mxu0 0.0
    %2152 = vmatpush1.xpose.msra.mxu0 0.0
    %2153 = vmatprep.subr.mxu0 0.0
    %2154 = vmatpush1.xpose.msra.mxu0 0.0
    %2155 = vmatprep.subr.mxu0 0.0
    %2156 = vmatpush1.xpose.msra.mxu0 0.0
    %2157 = vmatprep.subr.mxu0 0.0
    %2158 = vmatpush1.xpose.msra.mxu0 0.0
    %2159 = vmatprep.subr.mxu0 0.0
    %2160 = vmatpush1.xpose.msra.mxu0 0.0
    %2161 = vmatprep.subr.mxu0 0.0
    %2162 = vmatpush1.xpose.msra.mxu0 0.0
    %2163 = vmatprep.subr.mxu0 0.0
    %2164 = vmatpush1.xpose.msra.mxu0 0.0
    %2165 = vmatprep.subr.mxu0 0.0
    %2166 = vmatpush1.xpose.msra.mxu0 0.0
    %2167 = vmatprep.subr.mxu0 0.0
    %2168 = vmatpush1.xpose.msra.mxu0 0.0
    %2169 = vmatprep.mubr.f32.mxu0 0.0
    %2170 = vmatmul.mubr.f32.gmra.mrb[0].mxu0 %v2101
    %v2171 = vpop.f32.mrb[0].mxu0
    %v2172 = vadd.f32 0.0, %v2171
    %v2173 = vpop.f32.mrb[0].mxu0
    %2174 = vdwg.mxu0
    %v2175 = vsel %vm195, %v2095, -inf
    %2176 = vmax.xlane.f32.xlu0 %v2175
    %v2177 = vpop.xlane.xlu0 %2176
    %v2178 = vsel %vm195, %v2172, -inf
    %2179 = vmax.xlane.f32.xlu0 %v2178
    %v2180 = vpop.xlane.xlu0 %2179
    %v2181 = vsub.f32 %v2095, %v2177
    %v2182 = vsub.f32 %v2172, %v2180
    %v2183 = vmul.f32 %v2181, 1.442695
    %v2184 = vpow.pop %v2183
    %v2185 = vmul.f32 %v2182, 1.442695
    %v2186 = vpow.pop %v2185
    %v2187 = vsel %vm195, %v2184, 0.0
    %2188 = vadd.xlane.f32.xlu0 %v2187
    %v2189 = vpop.xlane.xlu0 %2188
    %v2190 = vsel %vm195, %v2186, 0.0
    %2191 = vadd.xlane.f32.xlu0 %v2190
    %v2192 = vpop.xlane.xlu0 %2191
    %v2193 = vrcp.pop %v2189
    %v2194 = vrcp.pop %v2192
    %v2195 = vmul.f32 %v2184, %v2193
    %v2196 = vmul.f32 %v2186, %v2194
    %2197 = vrot.lane.b32.xlu0 %v2013, 64
    %v2198 = vpop.permute.xlu0 %2197
    %v2201 = vsel %vm195, %v2195, 0
    %2203 = vmatprep.subr.mxu0 0.0
    %2204 = vmatpush1.msra.mxu0 %v2198
    %2205 = vmatprep.subr.mxu0 0.0
    %2206 = vmatpush1.msra.mxu0 0.0
    %2207 = vmatprep.subr.mxu0 0.0
    %2208 = vmatpush1.msra.mxu0 0.0
    %2209 = vmatprep.subr.mxu0 0.0
    %2210 = vmatpush1.msra.mxu0 0.0
    %2211 = vmatprep.subr.mxu0 0.0
    %2212 = vmatpush1.msra.mxu0 0.0
    %2213 = vmatprep.subr.mxu0 0.0
    %2214 = vmatpush1.msra.mxu0 0.0
    %2215 = vmatprep.subr.mxu0 0.0
    %2216 = vmatpush1.msra.mxu0 0.0
    %2217 = vmatprep.subr.mxu0 0.0
    %2218 = vmatpush1.msra.mxu0 0.0
    %2219 = vmatprep.subr.mxu0 0.0
    %2220 = vmatpush1.msra.mxu0 0.0
    %2221 = vmatprep.subr.mxu0 0.0
    %2222 = vmatpush1.msra.mxu0 0.0
    %2223 = vmatprep.subr.mxu0 0.0
    %2224 = vmatpush1.msra.mxu0 0.0
    %2225 = vmatprep.subr.mxu0 0.0
    %2226 = vmatpush1.msra.mxu0 0.0
    %2227 = vmatprep.subr.mxu0 0.0
    %2228 = vmatpush1.msra.mxu0 0.0
    %2229 = vmatprep.subr.mxu0 0.0
    %2230 = vmatpush1.msra.mxu0 0.0
    %2231 = vmatprep.subr.mxu0 0.0
    %2232 = vmatpush1.msra.mxu0 0.0
    %2233 = vmatprep.subr.mxu0 0.0
    %2234 = vmatpush1.msra.mxu0 0.0
    %2235 = vmatprep.subr.mxu0 0.0
    %2236 = vmatpush1.msra.mxu0 0.0
    %2237 = vmatprep.subr.mxu0 0.0
    %2238 = vmatpush1.msra.mxu0 0.0
    %2239 = vmatprep.subr.mxu0 0.0
    %2240 = vmatpush1.msra.mxu0 0.0
    %2241 = vmatprep.subr.mxu0 0.0
    %2242 = vmatpush1.msra.mxu0 0.0
    %2243 = vmatprep.subr.mxu0 0.0
    %2244 = vmatpush1.msra.mxu0 0.0
    %2245 = vmatprep.subr.mxu0 0.0
    %2246 = vmatpush1.msra.mxu0 0.0
    %2247 = vmatprep.subr.mxu0 0.0
    %2248 = vmatpush1.msra.mxu0 0.0
    %2249 = vmatprep.subr.mxu0 0.0
    %2250 = vmatpush1.msra.mxu0 0.0
    %2251 = vmatprep.subr.mxu0 0.0
    %2252 = vmatpush1.msra.mxu0 0.0
    %2253 = vmatprep.subr.mxu0 0.0
    %2254 = vmatpush1.msra.mxu0 0.0
    %2255 = vmatprep.subr.mxu0 0.0
    %2256 = vmatpush1.msra.mxu0 0.0
    %2257 = vmatprep.subr.mxu0 0.0
    %2258 = vmatpush1.msra.mxu0 0.0
    %2259 = vmatprep.subr.mxu0 0.0
    %2260 = vmatpush1.msra.mxu0 0.0
    %2261 = vmatprep.subr.mxu0 0.0
    %2262 = vmatpush1.msra.mxu0 0.0
    %2263 = vmatprep.subr.mxu0 0.0
    %2264 = vmatpush1.msra.mxu0 0.0
    %2265 = vmatprep.subr.mxu0 0.0
    %2266 = vmatpush1.msra.mxu0 0.0
    %2267 = vmatprep.mubr.f32.mxu0 0.0
    %2268 = vmatmul.mubr.f32.gmra.mrb[0].mxu0 %v2201
    %v2269 = vpop.f32.mrb[0].mxu0
    %v2270 = vadd.f32 0.0, %v2269
    %v2271 = vpop.f32.mrb[0].mxu0
    %2272 = vdwg.mxu0
    %2273 = vrot.lane.b32.xlu0 %v2018, 64
    %v2274 = vpop.permute.xlu0 %2273
    %v2277 = vsel %vm195, %v2196, 0
    %2279 = vmatprep.subr.mxu0 0.0
    %2280 = vmatpush1.msra.mxu0 %v2274
    %2281 = vmatprep.subr.mxu0 0.0
    %2282 = vmatpush1.msra.mxu0 0.0
    %2283 = vmatprep.subr.mxu0 0.0
    %2284 = vmatpush1.msra.mxu0 0.0
    %2285 = vmatprep.subr.mxu0 0.0
    %2286 = vmatpush1.msra.mxu0 0.0
    %2287 = vmatprep.subr.mxu0 0.0
    %2288 = vmatpush1.msra.mxu0 0.0
    %2289 = vmatprep.subr.mxu0 0.0
    %2290 = vmatpush1.msra.mxu0 0.0
    %2291 = vmatprep.subr.mxu0 0.0
    %2292 = vmatpush1.msra.mxu0 0.0
    %2293 = vmatprep.subr.mxu0 0.0
    %2294 = vmatpush1.msra.mxu0 0.0
    %2295 = vmatprep.subr.mxu0 0.0
    %2296 = vmatpush1.msra.mxu0 0.0
    %2297 = vmatprep.subr.mxu0 0.0
    %2298 = vmatpush1.msra.mxu0 0.0
    %2299 = vmatprep.subr.mxu0 0.0
    %2300 = vmatpush1.msra.mxu0 0.0
    %2301 = vmatprep.subr.mxu0 0.0
    %2302 = vmatpush1.msra.mxu0 0.0
    %2303 = vmatprep.subr.mxu0 0.0
    %2304 = vmatpush1.msra.mxu0 0.0
    %2305 = vmatprep.subr.mxu0 0.0
    %2306 = vmatpush1.msra.mxu0 0.0
    %2307 = vmatprep.subr.mxu0 0.0
    %2308 = vmatpush1.msra.mxu0 0.0
    %2309 = vmatprep.subr.mxu0 0.0
    %2310 = vmatpush1.msra.mxu0 0.0
    %2311 = vmatprep.subr.mxu0 0.0
    %2312 = vmatpush1.msra.mxu0 0.0
    %2313 = vmatprep.subr.mxu0 0.0
    %2314 = vmatpush1.msra.mxu0 0.0
    %2315 = vmatprep.subr.mxu0 0.0
    %2316 = vmatpush1.msra.mxu0 0.0
    %2317 = vmatprep.subr.mxu0 0.0
    %2318 = vmatpush1.msra.mxu0 0.0
    %2319 = vmatprep.subr.mxu0 0.0
    %2320 = vmatpush1.msra.mxu0 0.0
    %2321 = vmatprep.subr.mxu0 0.0
    %2322 = vmatpush1.msra.mxu0 0.0
    %2323 = vmatprep.subr.mxu0 0.0
    %2324 = vmatpush1.msra.mxu0 0.0
    %2325 = vmatprep.subr.mxu0 0.0
    %2326 = vmatpush1.msra.mxu0 0.0
    %2327 = vmatprep.subr.mxu0 0.0
    %2328 = vmatpush1.msra.mxu0 0.0
    %2329 = vmatprep.subr.mxu0 0.0
    %2330 = vmatpush1.msra.mxu0 0.0
    %2331 = vmatprep.subr.mxu0 0.0
    %2332 = vmatpush1.msra.mxu0 0.0
    %2333 = vmatprep.subr.mxu0 0.0
    %2334 = vmatpush1.msra.mxu0 0.0
    %2335 = vmatprep.subr.mxu0 0.0
    %2336 = vmatpush1.msra.mxu0 0.0
    %2337 = vmatprep.subr.mxu0 0.0
    %2338 = vmatpush1.msra.mxu0 0.0
    %2339 = vmatprep.subr.mxu0 0.0
    %2340 = vmatpush1.msra.mxu0 0.0
    %2341 = vmatprep.subr.mxu0 0.0
    %2342 = vmatpush1.msra.mxu0 0.0
    %2343 = vmatprep.mubr.f32.mxu0 0.0
    %2344 = vmatmul.mubr.f32.gmra.mrb[0].mxu0 %v2277
    %v2345 = vpop.f32.mrb[0].mxu0
    %v2346 = vadd.f32 0.0, %v2345
    %v2347 = vpop.f32.mrb[0].mxu0
    %2348 = vdwg.mxu0
    %2349 = vrot.lane.b32.xlu0 %v2013, 120
    %v2350 = vpop.permute.xlu0 %2349
    %2351 = vrot.lane.b32.xlu0 %v2013, 88
    %v2352 = vpop.permute.xlu0 %2351
    %v2353 = vsel %vm195, %v2350, 0
    %v2355 = vsel %vm195, %v2352, 0
    %2357 = vmatprep.subr.mxu0 0.0
    %2358 = vmatpush1.xpose.msra.mxu0 %v2355
    %2359 = vmatprep.subr.mxu0 0.0
    %2360 = vmatpush1.xpose.msra.mxu0 0.0
    %2361 = vmatprep.subr.mxu0 0.0
    %2362 = vmatpush1.xpose.msra.mxu0 0.0
    %2363 = vmatprep.subr.mxu0 0.0
    %2364 = vmatpush1.xpose.msra.mxu0 0.0
    %2365 = vmatprep.subr.mxu0 0.0
    %2366 = vmatpush1.xpose.msra.mxu0 0.0
    %2367 = vmatprep.subr.mxu0 0.0
    %2368 = vmatpush1.xpose.msra.mxu0 0.0
    %2369 = vmatprep.subr.mxu0 0.0
    %2370 = vmatpush1.xpose.msra.mxu0 0.0
    %2371 = vmatprep.subr.mxu0 0.0
    %2372 = vmatpush1.xpose.msra.mxu0 0.0
    %2373 = vmatprep.subr.mxu0 0.0
    %2374 = vmatpush1.xpose.msra.mxu0 0.0
    %2375 = vmatprep.subr.mxu0 0.0
    %2376 = vmatpush1.xpose.msra.mxu0 0.0
    %2377 = vmatprep.subr.mxu0 0.0
    %2378 = vmatpush1.xpose.msra.mxu0 0.0
    %2379 = vmatprep.subr.mxu0 0.0
    %2380 = vmatpush1.xpose.msra.mxu0 0.0
    %2381 = vmatprep.subr.mxu0 0.0
    %2382 = vmatpush1.xpose.msra.mxu0 0.0
    %2383 = vmatprep.subr.mxu0 0.0
    %2384 = vmatpush1.xpose.msra.mxu0 0.0
    %2385 = vmatprep.subr.mxu0 0.0
    %2386 = vmatpush1.xpose.msra.mxu0 0.0
    %2387 = vmatprep.subr.mxu0 0.0
    %2388 = vmatpush1.xpose.msra.mxu0 0.0
    %2389 = vmatprep.subr.mxu0 0.0
    %2390 = vmatpush1.xpose.msra.mxu0 0.0
    %2391 = vmatprep.subr.mxu0 0.0
    %2392 = vmatpush1.xpose.msra.mxu0 0.0
    %2393 = vmatprep.subr.mxu0 0.0
    %2394 = vmatpush1.xpose.msra.mxu0 0.0
    %2395 = vmatprep.subr.mxu0 0.0
    %2396 = vmatpush1.xpose.msra.mxu0 0.0
    %2397 = vmatprep.subr.mxu0 0.0
    %2398 = vmatpush1.xpose.msra.mxu0 0.0
    %2399 = vmatprep.subr.mxu0 0.0
    %2400 = vmatpush1.xpose.msra.mxu0 0.0
    %2401 = vmatprep.subr.mxu0 0.0
    %2402 = vmatpush1.xpose.msra.mxu0 0.0
    %2403 = vmatprep.subr.mxu0 0.0
    %2404 = vmatpush1.xpose.msra.mxu0 0.0
    %2405 = vmatprep.subr.mxu0 0.0
    %2406 = vmatpush1.xpose.msra.mxu0 0.0
    %2407 = vmatprep.subr.mxu0 0.0
    %2408 = vmatpush1.xpose.msra.mxu0 0.0
    %2409 = vmatprep.subr.mxu0 0.0
    %2410 = vmatpush1.xpose.msra.mxu0 0.0
    %2411 = vmatprep.subr.mxu0 0.0
    %2412 = vmatpush1.xpose.msra.mxu0 0.0
    %2413 = vmatprep.subr.mxu0 0.0
    %2414 = vmatpush1.xpose.msra.mxu0 0.0
    %2415 = vmatprep.subr.mxu0 0.0
    %2416 = vmatpush1.xpose.msra.mxu0 0.0
    %2417 = vmatprep.subr.mxu0 0.0
    %2418 = vmatpush1.xpose.msra.mxu0 0.0
    %2419 = vmatprep.subr.mxu0 0.0
    %2420 = vmatpush1.xpose.msra.mxu0 0.0
    %2421 = vmatprep.mubr.f32.mxu0 0.0
    %2422 = vmatmul.mubr.f32.gmra.mrb[0].mxu0 %v2353
    %v2423 = vpop.f32.mrb[0].mxu0
    %v2424 = vadd.f32 0.0, %v2423
    %v2425 = vpop.f32.mrb[0].mxu0
    %2426 = vdwg.mxu0
    %2427 = vrot.lane.b32.xlu0 %v2018, 120
    %v2428 = vpop.permute.xlu0 %2427
    %2429 = vrot.lane.b32.xlu0 %v2018, 88
    %v2430 = vpop.permute.xlu0 %2429
    %v2431 = vsel %vm195, %v2428, 0
    %v2433 = vsel %vm195, %v2430, 0
    %2435 = vmatprep.subr.mxu0 0.0
    %2436 = vmatpush1.xpose.msra.mxu0 %v2433
    %2437 = vmatprep.subr.mxu0 0.0
    %2438 = vmatpush1.xpose.msra.mxu0 0.0
    %2439 = vmatprep.subr.mxu0 0.0
    %2440 = vmatpush1.xpose.msra.mxu0 0.0
    %2441 = vmatprep.subr.mxu0 0.0
    %2442 = vmatpush1.xpose.msra.mxu0 0.0
    %2443 = vmatprep.subr.mxu0 0.0
    %2444 = vmatpush1.xpose.msra.mxu0 0.0
    %2445 = vmatprep.subr.mxu0 0.0
    %2446 = vmatpush1.xpose.msra.mxu0 0.0
    %2447 = vmatprep.subr.mxu0 0.0
    %2448 = vmatpush1.xpose.msra.mxu0 0.0
    %2449 = vmatprep.subr.mxu0 0.0
    %2450 = vmatpush1.xpose.msra.mxu0 0.0
    %2451 = vmatprep.subr.mxu0 0.0
    %2452 = vmatpush1.xpose.msra.mxu0 0.0
    %2453 = vmatprep.subr.mxu0 0.0
    %2454 = vmatpush1.xpose.msra.mxu0 0.0
    %2455 = vmatprep.subr.mxu0 0.0
    %2456 = vmatpush1.xpose.msra.mxu0 0.0
    %2457 = vmatprep.subr.mxu0 0.0
    %2458 = vmatpush1.xpose.msra.mxu0 0.0
    %2459 = vmatprep.subr.mxu0 0.0
    %2460 = vmatpush1.xpose.msra.mxu0 0.0
    %2461 = vmatprep.subr.mxu0 0.0
    %2462 = vmatpush1.xpose.msra.mxu0 0.0
    %2463 = vmatprep.subr.mxu0 0.0
    %2464 = vmatpush1.xpose.msra.mxu0 0.0
    %2465 = vmatprep.subr.mxu0 0.0
    %2466 = vmatpush1.xpose.msra.mxu0 0.0
    %2467 = vmatprep.subr.mxu0 0.0
    %2468 = vmatpush1.xpose.msra.mxu0 0.0
    %2469 = vmatprep.subr.mxu0 0.0
    %2470 = vmatpush1.xpose.msra.mxu0 0.0
    %2471 = vmatprep.subr.mxu0 0.0
    %2472 = vmatpush1.xpose.msra.mxu0 0.0
    %2473 = vmatprep.subr.mxu0 0.0
    %2474 = vmatpush1.xpose.msra.mxu0 0.0
    %2475 = vmatprep.subr.mxu0 0.0
    %2476 = vmatpush1.xpose.msra.mxu0 0.0
    %2477 = vmatprep.subr.mxu0 0.0
    %2478 = vmatpush1.xpose.msra.mxu0 0.0
    %2479 = vmatprep.subr.mxu0 0.0
    %2480 = vmatpush1.xpose.msra.mxu0 0.0
    %2481 = vmatprep.subr.mxu0 0.0
    %2482 = vmatpush1.xpose.msra.mxu0 0.0
    %2483 = vmatprep.subr.mxu0 0.0
    %2484 = vmatpush1.xpose.msra.mxu0 0.0
    %2485 = vmatprep.subr.mxu0 0.0
    %2486 = vmatpush1.xpose.msra.mxu0 0.0
    %2487 = vmatprep.subr.mxu0 0.0
    %2488 = vmatpush1.xpose.msra.mxu0 0.0
    %2489 = vmatprep.subr.mxu0 0.0
    %2490 = vmatpush1.xpose.msra.mxu0 0.0
    %2491 = vmatprep.subr.mxu0 0.0
    %2492 = vmatpush1.xpose.msra.mxu0 0.0
    %2493 = vmatprep.subr.mxu0 0.0
    %2494 = vmatpush1.xpose.msra.mxu0 0.0
    %2495 = vmatprep.subr.mxu0 0.0
    %2496 = vmatpush1.xpose.msra.mxu0 0.0
    %2497 = vmatprep.subr.mxu0 0.0
    %2498 = vmatpush1.xpose.msra.mxu0 0.0
    %2499 = vmatprep.mubr.f32.mxu0 0.0
    %2500 = vmatmul.mubr.f32.gmra.mrb[0].mxu0 %v2431
    %v2501 = vpop.f32.mrb[0].mxu0
    %v2502 = vadd.f32 0.0, %v2501
    %v2503 = vpop.f32.mrb[0].mxu0
    %2504 = vdwg.mxu0
    %v2505 = vsel %vm195, %v2424, -inf
    %2506 = vmax.xlane.f32.xlu0 %v2505
    %v2507 = vpop.xlane.xlu0 %2506
    %v2508 = vsel %vm195, %v2502, -inf
    %2509 = vmax.xlane.f32.xlu0 %v2508
    %v2510 = vpop.xlane.xlu0 %2509
    %v2511 = vsub.f32 %v2424, %v2507
    %v2512 = vsub.f32 %v2502, %v2510
    %v2513 = vmul.f32 %v2511, 1.442695
    %v2514 = vpow.pop %v2513
    %v2515 = vmul.f32 %v2512, 1.442695
    %v2516 = vpow.pop %v2515
    %v2517 = vsel %vm195, %v2514, 0.0
    %2518 = vadd.xlane.f32.xlu0 %v2517
    %v2519 = vpop.xlane.xlu0 %2518
    %v2520 = vsel %vm195, %v2516, 0.0
    %2521 = vadd.xlane.f32.xlu0 %v2520
    %v2522 = vpop.xlane.xlu0 %2521
    %v2523 = vrcp.pop %v2519
    %v2524 = vrcp.pop %v2522
    %v2525 = vmul.f32 %v2514, %v2523
    %v2526 = vmul.f32 %v2516, %v2524
    %2527 = vrot.lane.b32.xlu0 %v2013, 56
    %v2528 = vpop.permute.xlu0 %2527
    %v2531 = vsel %vm195, %v2525, 0
    %2533 = vmatprep.subr.mxu0 0.0
    %2534 = vmatpush1.msra.mxu0 %v2528
    %2535 = vmatprep.subr.mxu0 0.0
    %2536 = vmatpush1.msra.mxu0 0.0
    %2537 = vmatprep.subr.mxu0 0.0
    %2538 = vmatpush1.msra.mxu0 0.0
    %2539 = vmatprep.subr.mxu0 0.0
    %2540 = vmatpush1.msra.mxu0 0.0
    %2541 = vmatprep.subr.mxu0 0.0
    %2542 = vmatpush1.msra.mxu0 0.0
    %2543 = vmatprep.subr.mxu0 0.0
    %2544 = vmatpush1.msra.mxu0 0.0
    %2545 = vmatprep.subr.mxu0 0.0
    %2546 = vmatpush1.msra.mxu0 0.0
    %2547 = vmatprep.subr.mxu0 0.0
    %2548 = vmatpush1.msra.mxu0 0.0
    %2549 = vmatprep.subr.mxu0 0.0
    %2550 = vmatpush1.msra.mxu0 0.0
    %2551 = vmatprep.subr.mxu0 0.0
    %2552 = vmatpush1.msra.mxu0 0.0
    %2553 = vmatprep.subr.mxu0 0.0
    %2554 = vmatpush1.msra.mxu0 0.0
    %2555 = vmatprep.subr.mxu0 0.0
    %2556 = vmatpush1.msra.mxu0 0.0
    %2557 = vmatprep.subr.mxu0 0.0
    %2558 = vmatpush1.msra.mxu0 0.0
    %2559 = vmatprep.subr.mxu0 0.0
    %2560 = vmatpush1.msra.mxu0 0.0
    %2561 = vmatprep.subr.mxu0 0.0
    %2562 = vmatpush1.msra.mxu0 0.0
    %2563 = vmatprep.subr.mxu0 0.0
    %2564 = vmatpush1.msra.mxu0 0.0
    %2565 = vmatprep.subr.mxu0 0.0
    %2566 = vmatpush1.msra.mxu0 0.0
    %2567 = vmatprep.subr.mxu0 0.0
    %2568 = vmatpush1.msra.mxu0 0.0
    %2569 = vmatprep.subr.mxu0 0.0
    %2570 = vmatpush1.msra.mxu0 0.0
    %2571 = vmatprep.subr.mxu0 0.0
    %2572 = vmatpush1.msra.mxu0 0.0
    %2573 = vmatprep.subr.mxu0 0.0
    %2574 = vmatpush1.msra.mxu0 0.0
    %2575 = vmatprep.subr.mxu0 0.0
    %2576 = vmatpush1.msra.mxu0 0.0
    %2577 = vmatprep.subr.mxu0 0.0
    %2578 = vmatpush1.msra.mxu0 0.0
    %2579 = vmatprep.subr.mxu0 0.0
    %2580 = vmatpush1.msra.mxu0 0.0
    %2581 = vmatprep.subr.mxu0 0.0
    %2582 = vmatpush1.msra.mxu0 0.0
    %2583 = vmatprep.subr.mxu0 0.0
    %2584 = vmatpush1.msra.mxu0 0.0
    %2585 = vmatprep.subr.mxu0 0.0
    %2586 = vmatpush1.msra.mxu0 0.0
    %2587 = vmatprep.subr.mxu0 0.0
    %2588 = vmatpush1.msra.mxu0 0.0
    %2589 = vmatprep.subr.mxu0 0.0
    %2590 = vmatpush1.msra.mxu0 0.0
    %2591 = vmatprep.subr.mxu0 0.0
    %2592 = vmatpush1.msra.mxu0 0.0
    %2593 = vmatprep.subr.mxu0 0.0
    %2594 = vmatpush1.msra.mxu0 0.0
    %2595 = vmatprep.subr.mxu0 0.0
    %2596 = vmatpush1.msra.mxu0 0.0
    %2597 = vmatprep.mubr.f32.mxu0 0.0
    %2598 = vmatmul.mubr.f32.gmra.mrb[0].mxu0 %v2531
    %v2599 = vpop.f32.mrb[0].mxu0
    %v2600 = vadd.f32 0.0, %v2599
    %v2601 = vpop.f32.mrb[0].mxu0
    %2602 = vdwg.mxu0
    %2603 = vrot.lane.b32.xlu0 %v2018, 56
    %v2604 = vpop.permute.xlu0 %2603
    %v2607 = vsel %vm195, %v2526, 0
    %2609 = vmatprep.subr.mxu0 0.0
    %2610 = vmatpush1.msra.mxu0 %v2604
    %2611 = vmatprep.subr.mxu0 0.0
    %2612 = vmatpush1.msra.mxu0 0.0
    %2613 = vmatprep.subr.mxu0 0.0
    %2614 = vmatpush1.msra.mxu0 0.0
    %2615 = vmatprep.subr.mxu0 0.0
    %2616 = vmatpush1.msra.mxu0 0.0
    %2617 = vmatprep.subr.mxu0 0.0
    %2618 = vmatpush1.msra.mxu0 0.0
    %2619 = vmatprep.subr.mxu0 0.0
    %2620 = vmatpush1.msra.mxu0 0.0
    %2621 = vmatprep.subr.mxu0 0.0
    %2622 = vmatpush1.msra.mxu0 0.0
    %2623 = vmatprep.subr.mxu0 0.0
    %2624 = vmatpush1.msra.mxu0 0.0
    %2625 = vmatprep.subr.mxu0 0.0
    %2626 = vmatpush1.msra.mxu0 0.0
    %2627 = vmatprep.subr.mxu0 0.0
    %2628 = vmatpush1.msra.mxu0 0.0
    %2629 = vmatprep.subr.mxu0 0.0
    %2630 = vmatpush1.msra.mxu0 0.0
    %2631 = vmatprep.subr.mxu0 0.0
    %2632 = vmatpush1.msra.mxu0 0.0
    %2633 = vmatprep.subr.mxu0 0.0
    %2634 = vmatpush1.msra.mxu0 0.0
    %2635 = vmatprep.subr.mxu0 0.0
    %2636 = vmatpush1.msra.mxu0 0.0
    %2637 = vmatprep.subr.mxu0 0.0
    %2638 = vmatpush1.msra.mxu0 0.0
    %2639 = vmatprep.subr.mxu0 0.0
    %2640 = vmatpush1.msra.mxu0 0.0
    %2641 = vmatprep.subr.mxu0 0.0
    %2642 = vmatpush1.msra.mxu0 0.0
    %2643 = vmatprep.subr.mxu0 0.0
    %2644 = vmatpush1.msra.mxu0 0.0
    %2645 = vmatprep.subr.mxu0 0.0
    %2646 = vmatpush1.msra.mxu0 0.0
    %2647 = vmatprep.subr.mxu0 0.0
    %2648 = vmatpush1.msra.mxu0 0.0
    %2649 = vmatprep.subr.mxu0 0.0
    %2650 = vmatpush1.msra.mxu0 0.0
    %2651 = vmatprep.subr.mxu0 0.0
    %2652 = vmatpush1.msra.mxu0 0.0
    %2653 = vmatprep.subr.mxu0 0.0
    %2654 = vmatpush1.msra.mxu0 0.0
    %2655 = vmatprep.subr.mxu0 0.0
    %2656 = vmatpush1.msra.mxu0 0.0
    %2657 = vmatprep.subr.mxu0 0.0
    %2658 = vmatpush1.msra.mxu0 0.0
    %2659 = vmatprep.subr.mxu0 0.0
    %2660 = vmatpush1.msra.mxu0 0.0
    %2661 = vmatprep.subr.mxu0 0.0
    %2662 = vmatpush1.msra.mxu0 0.0
    %2663 = vmatprep.subr.mxu0 0.0
    %2664 = vmatpush1.msra.mxu0 0.0
    %2665 = vmatprep.subr.mxu0 0.0
    %2666 = vmatpush1.msra.mxu0 0.0
    %2667 = vmatprep.subr.mxu0 0.0
    %2668 = vmatpush1.msra.mxu0 0.0
    %2669 = vmatprep.subr.mxu0 0.0
    %2670 = vmatpush1.msra.mxu0 0.0
    %2671 = vmatprep.subr.mxu0 0.0
    %2672 = vmatpush1.msra.mxu0 0.0
    %2673 = vmatprep.mubr.f32.mxu0 0.0
    %2674 = vmatmul.mubr.f32.gmra.mrb[0].mxu0 %v2607
    %v2675 = vpop.f32.mrb[0].mxu0
    %v2676 = vadd.f32 0.0, %v2675
    %v2677 = vpop.f32.mrb[0].mxu0
    %2678 = vdwg.mxu0
    %2679 = vrot.lane.b32.xlu0 %v2013, 112
    %v2680 = vpop.permute.xlu0 %2679
    %2681 = vrot.lane.b32.xlu0 %v2013, 80
    %v2682 = vpop.permute.xlu0 %2681
    %v2683 = vsel %vm195, %v2680, 0
    %v2685 = vsel %vm195, %v2682, 0
    %2687 = vmatprep.subr.mxu0 0.0
    %2688 = vmatpush1.xpose.msra.mxu0 %v2685
    %2689 = vmatprep.subr.mxu0 0.0
    %2690 = vmatpush1.xpose.msra.mxu0 0.0
    %2691 = vmatprep.subr.mxu0 0.0
    %2692 = vmatpush1.xpose.msra.mxu0 0.0
    %2693 = vmatprep.subr.mxu0 0.0
    %2694 = vmatpush1.xpose.msra.mxu0 0.0
    %2695 = vmatprep.subr.mxu0 0.0
    %2696 = vmatpush1.xpose.msra.mxu0 0.0
    %2697 = vmatprep.subr.mxu0 0.0
    %2698 = vmatpush1.xpose.msra.mxu0 0.0
    %2699 = vmatprep.subr.mxu0 0.0
    %2700 = vmatpush1.xpose.msra.mxu0 0.0
    %2701 = vmatprep.subr.mxu0 0.0
    %2702 = vmatpush1.xpose.msra.mxu0 0.0
    %2703 = vmatprep.subr.mxu0 0.0
    %2704 = vmatpush1.xpose.msra.mxu0 0.0
    %2705 = vmatprep.subr.mxu0 0.0
    %2706 = vmatpush1.xpose.msra.mxu0 0.0
    %2707 = vmatprep.subr.mxu0 0.0
    %2708 = vmatpush1.xpose.msra.mxu0 0.0
    %2709 = vmatprep.subr.mxu0 0.0
    %2710 = vmatpush1.xpose.msra.mxu0 0.0
    %2711 = vmatprep.subr.mxu0 0.0
    %2712 = vmatpush1.xpose.msra.mxu0 0.0
    %2713 = vmatprep.subr.mxu0 0.0
    %2714 = vmatpush1.xpose.msra.mxu0 0.0
    %2715 = vmatprep.subr.mxu0 0.0
    %2716 = vmatpush1.xpose.msra.mxu0 0.0
    %2717 = vmatprep.subr.mxu0 0.0
    %2718 = vmatpush1.xpose.msra.mxu0 0.0
    %2719 = vmatprep.subr.mxu0 0.0
    %2720 = vmatpush1.xpose.msra.mxu0 0.0
    %2721 = vmatprep.subr.mxu0 0.0
    %2722 = vmatpush1.xpose.msra.mxu0 0.0
    %2723 = vmatprep.subr.mxu0 0.0
    %2724 = vmatpush1.xpose.msra.mxu0 0.0
    %2725 = vmatprep.subr.mxu0 0.0
    %2726 = vmatpush1.xpose.msra.mxu0 0.0
    %2727 = vmatprep.subr.mxu0 0.0
    %2728 = vmatpush1.xpose.msra.mxu0 0.0
    %2729 = vmatprep.subr.mxu0 0.0
    %2730 = vmatpush1.xpose.msra.mxu0 0.0
    %2731 = vmatprep.subr.mxu0 0.0
    %2732 = vmatpush1.xpose.msra.mxu0 0.0
    %2733 = vmatprep.subr.mxu0 0.0
    %2734 = vmatpush1.xpose.msra.mxu0 0.0
    %2735 = vmatprep.subr.mxu0 0.0
    %2736 = vmatpush1.xpose.msra.mxu0 0.0
    %2737 = vmatprep.subr.mxu0 0.0
    %2738 = vmatpush1.xpose.msra.mxu0 0.0
    %2739 = vmatprep.subr.mxu0 0.0
    %2740 = vmatpush1.xpose.msra.mxu0 0.0
    %2741 = vmatprep.subr.mxu0 0.0
    %2742 = vmatpush1.xpose.msra.mxu0 0.0
    %2743 = vmatprep.subr.mxu0 0.0
    %2744 = vmatpush1.xpose.msra.mxu0 0.0
    %2745 = vmatprep.subr.mxu0 0.0
    %2746 = vmatpush1.xpose.msra.mxu0 0.0
    %2747 = vmatprep.subr.mxu0 0.0
    %2748 = vmatpush1.xpose.msra.mxu0 0.0
    %2749 = vmatprep.subr.mxu0 0.0
    %2750 = vmatpush1.xpose.msra.mxu0 0.0
    %2751 = vmatprep.mubr.f32.mxu0 0.0
    %2752 = vmatmul.mubr.f32.gmra.mrb[0].mxu0 %v2683
    %v2753 = vpop.f32.mrb[0].mxu0
    %v2754 = vadd.f32 0.0, %v2753
    %v2755 = vpop.f32.mrb[0].mxu0
    %2756 = vdwg.mxu0
    %2757 = vrot.lane.b32.xlu0 %v2018, 112
    %v2758 = vpop.permute.xlu0 %2757
    %2759 = vrot.lane.b32.xlu0 %v2018, 80
    %v2760 = vpop.permute.xlu0 %2759
    %v2761 = vsel %vm195, %v2758, 0
    %v2763 = vsel %vm195, %v2760, 0
    %2765 = vmatprep.subr.mxu0 0.0
    %2766 = vmatpush1.xpose.msra.mxu0 %v2763
    %2767 = vmatprep.subr.mxu0 0.0
    %2768 = vmatpush1.xpose.msra.mxu0 0.0
    %2769 = vmatprep.subr.mxu0 0.0
    %2770 = vmatpush1.xpose.msra.mxu0 0.0
    %2771 = vmatprep.subr.mxu0 0.0
    %2772 = vmatpush1.xpose.msra.mxu0 0.0
    %2773 = vmatprep.subr.mxu0 0.0
    %2774 = vmatpush1.xpose.msra.mxu0 0.0
    %2775 = vmatprep.subr.mxu0 0.0
    %2776 = vmatpush1.xpose.msra.mxu0 0.0
    %2777 = vmatprep.subr.mxu0 0.0
    %2778 = vmatpush1.xpose.msra.mxu0 0.0
    %2779 = vmatprep.subr.mxu0 0.0
    %2780 = vmatpush1.xpose.msra.mxu0 0.0
    %2781 = vmatprep.subr.mxu0 0.0
    %2782 = vmatpush1.xpose.msra.mxu0 0.0
    %2783 = vmatprep.subr.mxu0 0.0
    %2784 = vmatpush1.xpose.msra.mxu0 0.0
    %2785 = vmatprep.subr.mxu0 0.0
    %2786 = vmatpush1.xpose.msra.mxu0 0.0
    %2787 = vmatprep.subr.mxu0 0.0
    %2788 = vmatpush1.xpose.msra.mxu0 0.0
    %2789 = vmatprep.subr.mxu0 0.0
    %2790 = vmatpush1.xpose.msra.mxu0 0.0
    %2791 = vmatprep.subr.mxu0 0.0
    %2792 = vmatpush1.xpose.msra.mxu0 0.0
    %2793 = vmatprep.subr.mxu0 0.0
    %2794 = vmatpush1.xpose.msra.mxu0 0.0
    %2795 = vmatprep.subr.mxu0 0.0
    %2796 = vmatpush1.xpose.msra.mxu0 0.0
    %2797 = vmatprep.subr.mxu0 0.0
    %2798 = vmatpush1.xpose.msra.mxu0 0.0
    %2799 = vmatprep.subr.mxu0 0.0
    %2800 = vmatpush1.xpose.msra.mxu0 0.0
    %2801 = vmatprep.subr.mxu0 0.0
    %2802 = vmatpush1.xpose.msra.mxu0 0.0
    %2803 = vmatprep.subr.mxu0 0.0
    %2804 = vmatpush1.xpose.msra.mxu0 0.0
    %2805 = vmatprep.subr.mxu0 0.0
    %2806 = vmatpush1.xpose.msra.mxu0 0.0
    %2807 = vmatprep.subr.mxu0 0.0
    %2808 = vmatpush1.xpose.msra.mxu0 0.0
    %2809 = vmatprep.subr.mxu0 0.0
    %2810 = vmatpush1.xpose.msra.mxu0 0.0
    %2811 = vmatprep.subr.mxu0 0.0
    %2812 = vmatpush1.xpose.msra.mxu0 0.0
    %2813 = vmatprep.subr.mxu0 0.0
    %2814 = vmatpush1.xpose.msra.mxu0 0.0
    %2815 = vmatprep.subr.mxu0 0.0
    %2816 = vmatpush1.xpose.msra.mxu0 0.0
    %2817 = vmatprep.subr.mxu0 0.0
    %2818 = vmatpush1.xpose.msra.mxu0 0.0
    %2819 = vmatprep.subr.mxu0 0.0
    %2820 = vmatpush1.xpose.msra.mxu0 0.0
    %2821 = vmatprep.subr.mxu0 0.0
    %2822 = vmatpush1.xpose.msra.mxu0 0.0
    %2823 = vmatprep.subr.mxu0 0.0
    %2824 = vmatpush1.xpose.msra.mxu0 0.0
    %2825 = vmatprep.subr.mxu0 0.0
    %2826 = vmatpush1.xpose.msra.mxu0 0.0
    %2827 = vmatprep.subr.mxu0 0.0
    %2828 = vmatpush1.xpose.msra.mxu0 0.0
    %2829 = vmatprep.mubr.f32.mxu0 0.0
    %2830 = vmatmul.mubr.f32.gmra.mrb[0].mxu0 %v2761
    %v2831 = vpop.f32.mrb[0].mxu0
    %v2832 = vadd.f32 0.0, %v2831
    %v2833 = vpop.f32.mrb[0].mxu0
    %2834 = vdwg.mxu0
    %v2835 = vsel %vm195, %v2754, -inf
    %2836 = vmax.xlane.f32.xlu0 %v2835
    %v2837 = vpop.xlane.xlu0 %2836
    %v2838 = vsel %vm195, %v2832, -inf
    %2839 = vmax.xlane.f32.xlu0 %v2838
    %v2840 = vpop.xlane.xlu0 %2839
    %v2841 = vsub.f32 %v2754, %v2837
    %v2842 = vsub.f32 %v2832, %v2840
    %v2843 = vmul.f32 %v2841, 1.442695
    %v2844 = vpow.pop %v2843
    %v2845 = vmul.f32 %v2842, 1.442695
    %v2846 = vpow.pop %v2845
    %v2847 = vsel %vm195, %v2844, 0.0
    %2848 = vadd.xlane.f32.xlu0 %v2847
    %v2849 = vpop.xlane.xlu0 %2848
    %v2850 = vsel %vm195, %v2846, 0.0
    %2851 = vadd.xlane.f32.xlu0 %v2850
    %v2852 = vpop.xlane.xlu0 %2851
    %v2853 = vrcp.pop %v2849
    %v2854 = vrcp.pop %v2852
    %v2855 = vmul.f32 %v2844, %v2853
    %v2856 = vmul.f32 %v2846, %v2854
    %2857 = vrot.lane.b32.xlu0 %v2013, 48
    %v2858 = vpop.permute.xlu0 %2857
    %v2861 = vsel %vm195, %v2855, 0
    %2863 = vmatprep.subr.mxu0 0.0
    %2864 = vmatpush1.msra.mxu0 %v2858
    %2865 = vmatprep.subr.mxu0 0.0
    %2866 = vmatpush1.msra.mxu0 0.0
    %2867 = vmatprep.subr.mxu0 0.0
    %2868 = vmatpush1.msra.mxu0 0.0
    %2869 = vmatprep.subr.mxu0 0.0
    %2870 = vmatpush1.msra.mxu0 0.0
    %2871 = vmatprep.subr.mxu0 0.0
    %2872 = vmatpush1.msra.mxu0 0.0
    %2873 = vmatprep.subr.mxu0 0.0
    %2874 = vmatpush1.msra.mxu0 0.0
    %2875 = vmatprep.subr.mxu0 0.0
    %2876 = vmatpush1.msra.mxu0 0.0
    %2877 = vmatprep.subr.mxu0 0.0
    %2878 = vmatpush1.msra.mxu0 0.0
    %2879 = vmatprep.subr.mxu0 0.0
    %2880 = vmatpush1.msra.mxu0 0.0
    %2881 = vmatprep.subr.mxu0 0.0
    %2882 = vmatpush1.msra.mxu0 0.0
    %2883 = vmatprep.subr.mxu0 0.0
    %2884 = vmatpush1.msra.mxu0 0.0
    %2885 = vmatprep.subr.mxu0 0.0
    %2886 = vmatpush1.msra.mxu0 0.0
    %2887 = vmatprep.subr.mxu0 0.0
    %2888 = vmatpush1.msra.mxu0 0.0
    %2889 = vmatprep.subr.mxu0 0.0
    %2890 = vmatpush1.msra.mxu0 0.0
    %2891 = vmatprep.subr.mxu0 0.0
    %2892 = vmatpush1.msra.mxu0 0.0
    %2893 = vmatprep.subr.mxu0 0.0
    %2894 = vmatpush1.msra.mxu0 0.0
    %2895 = vmatprep.subr.mxu0 0.0
    %2896 = vmatpush1.msra.mxu0 0.0
    %2897 = vmatprep.subr.mxu0 0.0
    %2898 = vmatpush1.msra.mxu0 0.0
    %2899 = vmatprep.subr.mxu0 0.0
    %2900 = vmatpush1.msra.mxu0 0.0
    %2901 = vmatprep.subr.mxu0 0.0
    %2902 = vmatpush1.msra.mxu0 0.0
    %2903 = vmatprep.subr.mxu0 0.0
    %2904 = vmatpush1.msra.mxu0 0.0
    %2905 = vmatprep.subr.mxu0 0.0
    %2906 = vmatpush1.msra.mxu0 0.0
    %2907 = vmatprep.subr.mxu0 0.0
    %2908 = vmatpush1.msra.mxu0 0.0
    %2909 = vmatprep.subr.mxu0 0.0
    %2910 = vmatpush1.msra.mxu0 0.0
    %2911 = vmatprep.subr.mxu0 0.0
    %2912 = vmatpush1.msra.mxu0 0.0
    %2913 = vmatprep.subr.mxu0 0.0
    %2914 = vmatpush1.msra.mxu0 0.0
    %2915 = vmatprep.subr.mxu0 0.0
    %2916 = vmatpush1.msra.mxu0 0.0
    %2917 = vmatprep.subr.mxu0 0.0
    %2918 = vmatpush1.msra.mxu0 0.0
    %2919 = vmatprep.subr.mxu0 0.0
    %2920 = vmatpush1.msra.mxu0 0.0
    %2921 = vmatprep.subr.mxu0 0.0
    %2922 = vmatpush1.msra.mxu0 0.0
    %2923 = vmatprep.subr.mxu0 0.0
    %2924 = vmatpush1.msra.mxu0 0.0
    %2925 = vmatprep.subr.mxu0 0.0
    %2926 = vmatpush1.msra.mxu0 0.0
    %2927 = vmatprep.mubr.f32.mxu0 0.0
    %2928 = vmatmul.mubr.f32.gmra.mrb[0].mxu0 %v2861
    %v2929 = vpop.f32.mrb[0].mxu0
    %v2930 = vadd.f32 0.0, %v2929
    %v2931 = vpop.f32.mrb[0].mxu0
    %2932 = vdwg.mxu0
    %2933 = vrot.lane.b32.xlu0 %v2018, 48
    %v2934 = vpop.permute.xlu0 %2933
    %v2937 = vsel %vm195, %v2856, 0
    %2939 = vmatprep.subr.mxu0 0.0
    %2940 = vmatpush1.msra.mxu0 %v2934
    %2941 = vmatprep.subr.mxu0 0.0
    %2942 = vmatpush1.msra.mxu0 0.0
    %2943 = vmatprep.subr.mxu0 0.0
    %2944 = vmatpush1.msra.mxu0 0.0
    %2945 = vmatprep.subr.mxu0 0.0
    %2946 = vmatpush1.msra.mxu0 0.0
    %2947 = vmatprep.subr.mxu0 0.0
    %2948 = vmatpush1.msra.mxu0 0.0
    %2949 = vmatprep.subr.mxu0 0.0
    %2950 = vmatpush1.msra.mxu0 0.0
    %2951 = vmatprep.subr.mxu0 0.0
    %2952 = vmatpush1.msra.mxu0 0.0
    %2953 = vmatprep.subr.mxu0 0.0
    %2954 = vmatpush1.msra.mxu0 0.0
    %2955 = vmatprep.subr.mxu0 0.0
    %2956 = vmatpush1.msra.mxu0 0.0
    %2957 = vmatprep.subr.mxu0 0.0
    %2958 = vmatpush1.msra.mxu0 0.0
    %2959 = vmatprep.subr.mxu0 0.0
    %2960 = vmatpush1.msra.mxu0 0.0
    %2961 = vmatprep.subr.mxu0 0.0
    %2962 = vmatpush1.msra.mxu0 0.0
    %2963 = vmatprep.subr.mxu0 0.0
    %2964 = vmatpush1.msra.mxu0 0.0
    %2965 = vmatprep.subr.mxu0 0.0
    %2966 = vmatpush1.msra.mxu0 0.0
    %2967 = vmatprep.subr.mxu0 0.0
    %2968 = vmatpush1.msra.mxu0 0.0
    %2969 = vmatprep.subr.mxu0 0.0
    %2970 = vmatpush1.msra.mxu0 0.0
    %2971 = vmatprep.subr.mxu0 0.0
    %2972 = vmatpush1.msra.mxu0 0.0
    %2973 = vmatprep.subr.mxu0 0.0
    %2974 = vmatpush1.msra.mxu0 0.0
    %2975 = vmatprep.subr.mxu0 0.0
    %2976 = vmatpush1.msra.mxu0 0.0
    %2977 = vmatprep.subr.mxu0 0.0
    %2978 = vmatpush1.msra.mxu0 0.0
    %2979 = vmatprep.subr.mxu0 0.0
    %2980 = vmatpush1.msra.mxu0 0.0
    %2981 = vmatprep.subr.mxu0 0.0
    %2982 = vmatpush1.msra.mxu0 0.0
    %2983 = vmatprep.subr.mxu0 0.0
    %2984 = vmatpush1.msra.mxu0 0.0
    %2985 = vmatprep.subr.mxu0 0.0
    %2986 = vmatpush1.msra.mxu0 0.0
    %2987 = vmatprep.subr.mxu0 0.0
    %2988 = vmatpush1.msra.mxu0 0.0
    %2989 = vmatprep.subr.mxu0 0.0
    %2990 = vmatpush1.msra.mxu0 0.0
    %2991 = vmatprep.subr.mxu0 0.0
    %2992 = vmatpush1.msra.mxu0 0.0
    %2993 = vmatprep.subr.mxu0 0.0
    %2994 = vmatpush1.msra.mxu0 0.0
    %2995 = vmatprep.subr.mxu0 0.0
    %2996 = vmatpush1.msra.mxu0 0.0
    %2997 = vmatprep.subr.mxu0 0.0
    %2998 = vmatpush1.msra.mxu0 0.0
    %2999 = vmatprep.subr.mxu0 0.0
    %3000 = vmatpush1.msra.mxu0 0.0
    %3001 = vmatprep.subr.mxu0 0.0
    %3002 = vmatpush1.msra.mxu0 0.0
    %3003 = vmatprep.mubr.f32.mxu0 0.0
    %3004 = vmatmul.mubr.f32.gmra.mrb[0].mxu0 %v2937
    %v3005 = vpop.f32.mrb[0].mxu0
    %v3006 = vadd.f32 0.0, %v3005
    %v3007 = vpop.f32.mrb[0].mxu0
    %3008 = vdwg.mxu0
    %3009 = vrot.lane.b32.xlu0 %v2013, 104
    %v3010 = vpop.permute.xlu0 %3009
    %3011 = vrot.lane.b32.xlu0 %v2013, 72
    %v3012 = vpop.permute.xlu0 %3011
    %v3013 = vsel %vm195, %v3010, 0
    %v3015 = vsel %vm195, %v3012, 0
    %3017 = vmatprep.subr.mxu0 0.0
    %3018 = vmatpush1.xpose.msra.mxu0 %v3015
    %3019 = vmatprep.subr.mxu0 0.0
    %3020 = vmatpush1.xpose.msra.mxu0 0.0
    %3021 = vmatprep.subr.mxu0 0.0
    %3022 = vmatpush1.xpose.msra.mxu0 0.0
    %3023 = vmatprep.subr.mxu0 0.0
    %3024 = vmatpush1.xpose.msra.mxu0 0.0
    %3025 = vmatprep.subr.mxu0 0.0
    %3026 = vmatpush1.xpose.msra.mxu0 0.0
    %3027 = vmatprep.subr.mxu0 0.0
    %3028 = vmatpush1.xpose.msra.mxu0 0.0
    %3029 = vmatprep.subr.mxu0 0.0
    %3030 = vmatpush1.xpose.msra.mxu0 0.0
    %3031 = vmatprep.subr.mxu0 0.0
    %3032 = vmatpush1.xpose.msra.mxu0 0.0
    %3033 = vmatprep.subr.mxu0 0.0
    %3034 = vmatpush1.xpose.msra.mxu0 0.0
    %3035 = vmatprep.subr.mxu0 0.0
    %3036 = vmatpush1.xpose.msra.mxu0 0.0
    %3037 = vmatprep.subr.mxu0 0.0
    %3038 = vmatpush1.xpose.msra.mxu0 0.0
    %3039 = vmatprep.subr.mxu0 0.0
    %3040 = vmatpush1.xpose.msra.mxu0 0.0
    %3041 = vmatprep.subr.mxu0 0.0
    %3042 = vmatpush1.xpose.msra.mxu0 0.0
    %3043 = vmatprep.subr.mxu0 0.0
    %3044 = vmatpush1.xpose.msra.mxu0 0.0
    %3045 = vmatprep.subr.mxu0 0.0
    %3046 = vmatpush1.xpose.msra.mxu0 0.0
    %3047 = vmatprep.subr.mxu0 0.0
    %3048 = vmatpush1.xpose.msra.mxu0 0.0
    %3049 = vmatprep.subr.mxu0 0.0
    %3050 = vmatpush1.xpose.msra.mxu0 0.0
    %3051 = vmatprep.subr.mxu0 0.0
    %3052 = vmatpush1.xpose.msra.mxu0 0.0
    %3053 = vmatprep.subr.mxu0 0.0
    %3054 = vmatpush1.xpose.msra.mxu0 0.0
    %3055 = vmatprep.subr.mxu0 0.0
    %3056 = vmatpush1.xpose.msra.mxu0 0.0
    %3057 = vmatprep.subr.mxu0 0.0
    %3058 = vmatpush1.xpose.msra.mxu0 0.0
    %3059 = vmatprep.subr.mxu0 0.0
    %3060 = vmatpush1.xpose.msra.mxu0 0.0
    %3061 = vmatprep.subr.mxu0 0.0
    %3062 = vmatpush1.xpose.msra.mxu0 0.0
    %3063 = vmatprep.subr.mxu0 0.0
    %3064 = vmatpush1.xpose.msra.mxu0 0.0
    %3065 = vmatprep.subr.mxu0 0.0
    %3066 = vmatpush1.xpose.msra.mxu0 0.0
    %3067 = vmatprep.subr.mxu0 0.0
    %3068 = vmatpush1.xpose.msra.mxu0 0.0
    %3069 = vmatprep.subr.mxu0 0.0
    %3070 = vmatpush1.xpose.msra.mxu0 0.0
    %3071 = vmatprep.subr.mxu0 0.0
    %3072 = vmatpush1.xpose.msra.mxu0 0.0
    %3073 = vmatprep.subr.mxu0 0.0
    %3074 = vmatpush1.xpose.msra.mxu0 0.0
    %3075 = vmatprep.subr.mxu0 0.0
    %3076 = vmatpush1.xpose.msra.mxu0 0.0
    %3077 = vmatprep.subr.mxu0 0.0
    %3078 = vmatpush1.xpose.msra.mxu0 0.0
    %3079 = vmatprep.subr.mxu0 0.0
    %3080 = vmatpush1.xpose.msra.mxu0 0.0
    %3081 = vmatprep.mubr.f32.mxu0 0.0
    %3082 = vmatmul.mubr.f32.gmra.mrb[0].mxu0 %v3013
    %v3083 = vpop.f32.mrb[0].mxu0
    %v3084 = vadd.f32 0.0, %v3083
    %v3085 = vpop.f32.mrb[0].mxu0
    %3086 = vdwg.mxu0
    %3087 = vrot.lane.b32.xlu0 %v2018, 104
    %v3088 = vpop.permute.xlu0 %3087
    %3089 = vrot.lane.b32.xlu0 %v2018, 72
    %v3090 = vpop.permute.xlu0 %3089
    %v3091 = vsel %vm195, %v3088, 0
    %v3093 = vsel %vm195, %v3090, 0
    %3095 = vmatprep.subr.mxu0 0.0
    %3096 = vmatpush1.xpose.msra.mxu0 %v3093
    %3097 = vmatprep.subr.mxu0 0.0
    %3098 = vmatpush1.xpose.msra.mxu0 0.0
    %3099 = vmatprep.subr.mxu0 0.0
    %3100 = vmatpush1.xpose.msra.mxu0 0.0
    %3101 = vmatprep.subr.mxu0 0.0
    %3102 = vmatpush1.xpose.msra.mxu0 0.0
    %3103 = vmatprep.subr.mxu0 0.0
    %3104 = vmatpush1.xpose.msra.mxu0 0.0
    %3105 = vmatprep.subr.mxu0 0.0
    %3106 = vmatpush1.xpose.msra.mxu0 0.0
    %3107 = vmatprep.subr.mxu0 0.0
    %3108 = vmatpush1.xpose.msra.mxu0 0.0
    %3109 = vmatprep.subr.mxu0 0.0
    %3110 = vmatpush1.xpose.msra.mxu0 0.0
    %3111 = vmatprep.subr.mxu0 0.0
    %3112 = vmatpush1.xpose.msra.mxu0 0.0
    %3113 = vmatprep.subr.mxu0 0.0
    %3114 = vmatpush1.xpose.msra.mxu0 0.0
    %3115 = vmatprep.subr.mxu0 0.0
    %3116 = vmatpush1.xpose.msra.mxu0 0.0
    %3117 = vmatprep.subr.mxu0 0.0
    %3118 = vmatpush1.xpose.msra.mxu0 0.0
    %3119 = vmatprep.subr.mxu0 0.0
    %3120 = vmatpush1.xpose.msra.mxu0 0.0
    %3121 = vmatprep.subr.mxu0 0.0
    %3122 = vmatpush1.xpose.msra.mxu0 0.0
    %3123 = vmatprep.subr.mxu0 0.0
    %3124 = vmatpush1.xpose.msra.mxu0 0.0
    %3125 = vmatprep.subr.mxu0 0.0
    %3126 = vmatpush1.xpose.msra.mxu0 0.0
    %3127 = vmatprep.subr.mxu0 0.0
    %3128 = vmatpush1.xpose.msra.mxu0 0.0
    %3129 = vmatprep.subr.mxu0 0.0
    %3130 = vmatpush1.xpose.msra.mxu0 0.0
    %3131 = vmatprep.subr.mxu0 0.0
    %3132 = vmatpush1.xpose.msra.mxu0 0.0
    %3133 = vmatprep.subr.mxu0 0.0
    %3134 = vmatpush1.xpose.msra.mxu0 0.0
    %3135 = vmatprep.subr.mxu0 0.0
    %3136 = vmatpush1.xpose.msra.mxu0 0.0
    %3137 = vmatprep.subr.mxu0 0.0
    %3138 = vmatpush1.xpose.msra.mxu0 0.0
    %3139 = vmatprep.subr.mxu0 0.0
    %3140 = vmatpush1.xpose.msra.mxu0 0.0
    %3141 = vmatprep.subr.mxu0 0.0
    %3142 = vmatpush1.xpose.msra.mxu0 0.0
    %3143 = vmatprep.subr.mxu0 0.0
    %3144 = vmatpush1.xpose.msra.mxu0 0.0
    %3145 = vmatprep.subr.mxu0 0.0
    %3146 = vmatpush1.xpose.msra.mxu0 0.0
    %3147 = vmatprep.subr.mxu0 0.0
    %3148 = vmatpush1.xpose.msra.mxu0 0.0
    %3149 = vmatprep.subr.mxu0 0.0
    %3150 = vmatpush1.xpose.msra.mxu0 0.0
    %3151 = vmatprep.subr.mxu0 0.0
    %3152 = vmatpush1.xpose.msra.mxu0 0.0
    %3153 = vmatprep.subr.mxu0 0.0
    %3154 = vmatpush1.xpose.msra.mxu0 0.0
    %3155 = vmatprep.subr.mxu0 0.0
    %3156 = vmatpush1.xpose.msra.mxu0 0.0
    %3157 = vmatprep.subr.mxu0 0.0
    %3158 = vmatpush1.xpose.msra.mxu0 0.0
    %3159 = vmatprep.mubr.f32.mxu0 0.0
    %3160 = vmatmul.mubr.f32.gmra.mrb[0].mxu0 %v3091
    %v3161 = vpop.f32.mrb[0].mxu0
    %v3162 = vadd.f32 0.0, %v3161
    %v3163 = vpop.f32.mrb[0].mxu0
    %3164 = vdwg.mxu0
    %v3165 = vsel %vm195, %v3084, -inf
    %3166 = vmax.xlane.f32.xlu0 %v3165
    %v3167 = vpop.xlane.xlu0 %3166
    %v3168 = vsel %vm195, %v3162, -inf
    %3169 = vmax.xlane.f32.xlu0 %v3168
    %v3170 = vpop.xlane.xlu0 %3169
    %v3171 = vsub.f32 %v3084, %v3167
    %v3172 = vsub.f32 %v3162, %v3170
    %v3173 = vmul.f32 %v3171, 1.442695
    %v3174 = vpow.pop %v3173
    %v3175 = vmul.f32 %v3172, 1.442695
    %v3176 = vpow.pop %v3175
    %v3177 = vsel %vm195, %v3174, 0.0
    %3178 = vadd.xlane.f32.xlu0 %v3177
    %v3179 = vpop.xlane.xlu0 %3178
    %v3180 = vsel %vm195, %v3176, 0.0
    %3181 = vadd.xlane.f32.xlu0 %v3180
    %v3182 = vpop.xlane.xlu0 %3181
    %v3183 = vrcp.pop %v3179
    %v3184 = vrcp.pop %v3182
    %v3185 = vmul.f32 %v3174, %v3183
    %v3186 = vmul.f32 %v3176, %v3184
    %3187 = vrot.lane.b32.xlu0 %v2013, 40
    %v3188 = vpop.permute.xlu0 %3187
    %v3191 = vsel %vm195, %v3185, 0
    %3193 = vmatprep.subr.mxu0 0.0
    %3194 = vmatpush1.msra.mxu0 %v3188
    %3195 = vmatprep.subr.mxu0 0.0
    %3196 = vmatpush1.msra.mxu0 0.0
    %3197 = vmatprep.subr.mxu0 0.0
    %3198 = vmatpush1.msra.mxu0 0.0
    %3199 = vmatprep.subr.mxu0 0.0
    %3200 = vmatpush1.msra.mxu0 0.0
    %3201 = vmatprep.subr.mxu0 0.0
    %3202 = vmatpush1.msra.mxu0 0.0
    %3203 = vmatprep.subr.mxu0 0.0
    %3204 = vmatpush1.msra.mxu0 0.0
    %3205 = vmatprep.subr.mxu0 0.0
    %3206 = vmatpush1.msra.mxu0 0.0
    %3207 = vmatprep.subr.mxu0 0.0
    %3208 = vmatpush1.msra.mxu0 0.0
    %3209 = vmatprep.subr.mxu0 0.0
    %3210 = vmatpush1.msra.mxu0 0.0
    %3211 = vmatprep.subr.mxu0 0.0
    %3212 = vmatpush1.msra.mxu0 0.0
    %3213 = vmatprep.subr.mxu0 0.0
    %3214 = vmatpush1.msra.mxu0 0.0
    %3215 = vmatprep.subr.mxu0 0.0
    %3216 = vmatpush1.msra.mxu0 0.0
    %3217 = vmatprep.subr.mxu0 0.0
    %3218 = vmatpush1.msra.mxu0 0.0
    %3219 = vmatprep.subr.mxu0 0.0
    %3220 = vmatpush1.msra.mxu0 0.0
    %3221 = vmatprep.subr.mxu0 0.0
    %3222 = vmatpush1.msra.mxu0 0.0
    %3223 = vmatprep.subr.mxu0 0.0
    %3224 = vmatpush1.msra.mxu0 0.0
    %3225 = vmatprep.subr.mxu0 0.0
    %3226 = vmatpush1.msra.mxu0 0.0
    %3227 = vmatprep.subr.mxu0 0.0
    %3228 = vmatpush1.msra.mxu0 0.0
    %3229 = vmatprep.subr.mxu0 0.0
    %3230 = vmatpush1.msra.mxu0 0.0
    %3231 = vmatprep.subr.mxu0 0.0
    %3232 = vmatpush1.msra.mxu0 0.0
    %3233 = vmatprep.subr.mxu0 0.0
    %3234 = vmatpush1.msra.mxu0 0.0
    %3235 = vmatprep.subr.mxu0 0.0
    %3236 = vmatpush1.msra.mxu0 0.0
    %3237 = vmatprep.subr.mxu0 0.0
    %3238 = vmatpush1.msra.mxu0 0.0
    %3239 = vmatprep.subr.mxu0 0.0
    %3240 = vmatpush1.msra.mxu0 0.0
    %3241 = vmatprep.subr.mxu0 0.0
    %3242 = vmatpush1.msra.mxu0 0.0
    %3243 = vmatprep.subr.mxu0 0.0
    %3244 = vmatpush1.msra.mxu0 0.0
    %3245 = vmatprep.subr.mxu0 0.0
    %3246 = vmatpush1.msra.mxu0 0.0
    %3247 = vmatprep.subr.mxu0 0.0
    %3248 = vmatpush1.msra.mxu0 0.0
    %3249 = vmatprep.subr.mxu0 0.0
    %3250 = vmatpush1.msra.mxu0 0.0
    %3251 = vmatprep.subr.mxu0 0.0
    %3252 = vmatpush1.msra.mxu0 0.0
    %3253 = vmatprep.subr.mxu0 0.0
    %3254 = vmatpush1.msra.mxu0 0.0
    %3255 = vmatprep.subr.mxu0 0.0
    %3256 = vmatpush1.msra.mxu0 0.0
    %3257 = vmatprep.mubr.f32.mxu0 0.0
    %3258 = vmatmul.mubr.f32.gmra.mrb[0].mxu0 %v3191
    %v3259 = vpop.f32.mrb[0].mxu0
    %v3260 = vadd.f32 0.0, %v3259
    %v3261 = vpop.f32.mrb[0].mxu0
    %3262 = vdwg.mxu0
    %3263 = vrot.lane.b32.xlu0 %v2018, 40
    %v3264 = vpop.permute.xlu0 %3263
    %v3267 = vsel %vm195, %v3186, 0
    %3269 = vmatprep.subr.mxu0 0.0
    %3270 = vmatpush1.msra.mxu0 %v3264
    %3271 = vmatprep.subr.mxu0 0.0
    %3272 = vmatpush1.msra.mxu0 0.0
    %3273 = vmatprep.subr.mxu0 0.0
    %3274 = vmatpush1.msra.mxu0 0.0
    %3275 = vmatprep.subr.mxu0 0.0
    %3276 = vmatpush1.msra.mxu0 0.0
    %3277 = vmatprep.subr.mxu0 0.0
    %3278 = vmatpush1.msra.mxu0 0.0
    %3279 = vmatprep.subr.mxu0 0.0
    %3280 = vmatpush1.msra.mxu0 0.0
    %3281 = vmatprep.subr.mxu0 0.0
    %3282 = vmatpush1.msra.mxu0 0.0
    %3283 = vmatprep.subr.mxu0 0.0
    %3284 = vmatpush1.msra.mxu0 0.0
    %3285 = vmatprep.subr.mxu0 0.0
    %3286 = vmatpush1.msra.mxu0 0.0
    %3287 = vmatprep.subr.mxu0 0.0
    %3288 = vmatpush1.msra.mxu0 0.0
    %3289 = vmatprep.subr.mxu0 0.0
    %3290 = vmatpush1.msra.mxu0 0.0
    %3291 = vmatprep.subr.mxu0 0.0
    %3292 = vmatpush1.msra.mxu0 0.0
    %3293 = vmatprep.subr.mxu0 0.0
    %3294 = vmatpush1.msra.mxu0 0.0
    %3295 = vmatprep.subr.mxu0 0.0
    %3296 = vmatpush1.msra.mxu0 0.0
    %3297 = vmatprep.subr.mxu0 0.0
    %3298 = vmatpush1.msra.mxu0 0.0
    %3299 = vmatprep.subr.mxu0 0.0
    %3300 = vmatpush1.msra.mxu0 0.0
    %3301 = vmatprep.subr.mxu0 0.0
    %3302 = vmatpush1.msra.mxu0 0.0
    %3303 = vmatprep.subr.mxu0 0.0
    %3304 = vmatpush1.msra.mxu0 0.0
    %3305 = vmatprep.subr.mxu0 0.0
    %3306 = vmatpush1.msra.mxu0 0.0
    %3307 = vmatprep.subr.mxu0 0.0
    %3308 = vmatpush1.msra.mxu0 0.0
    %3309 = vmatprep.subr.mxu0 0.0
    %3310 = vmatpush1.msra.mxu0 0.0
    %3311 = vmatprep.subr.mxu0 0.0
    %3312 = vmatpush1.msra.mxu0 0.0
    %3313 = vmatprep.subr.mxu0 0.0
    %3314 = vmatpush1.msra.mxu0 0.0
    %3315 = vmatprep.subr.mxu0 0.0
    %3316 = vmatpush1.msra.mxu0 0.0
    %3317 = vmatprep.subr.mxu0 0.0
    %3318 = vmatpush1.msra.mxu0 0.0
    %3319 = vmatprep.subr.mxu0 0.0
    %3320 = vmatpush1.msra.mxu0 0.0
    %3321 = vmatprep.subr.mxu0 0.0
    %3322 = vmatpush1.msra.mxu0 0.0
    %3323 = vmatprep.subr.mxu0 0.0
    %3324 = vmatpush1.msra.mxu0 0.0
    %3325 = vmatprep.subr.mxu0 0.0
    %3326 = vmatpush1.msra.mxu0 0.0
    %3327 = vmatprep.subr.mxu0 0.0
    %3328 = vmatpush1.msra.mxu0 0.0
    %3329 = vmatprep.subr.mxu0 0.0
    %3330 = vmatpush1.msra.mxu0 0.0
    %3331 = vmatprep.subr.mxu0 0.0
    %3332 = vmatpush1.msra.mxu0 0.0
    %3333 = vmatprep.mubr.f32.mxu0 0.0
    %3334 = vmatmul.mubr.f32.gmra.mrb[0].mxu0 %v3267
    %v3335 = vpop.f32.mrb[0].mxu0
    %v3336 = vadd.f32 0.0, %v3335
    %v3337 = vpop.f32.mrb[0].mxu0
    %3338 = vdwg.mxu0
    %3341 = vrot.lane.b32.xlu0 %v2600, 8
    %v3342 = vpop.permute.xlu0 %3341
    %3343 = vrot.lane.b32.xlu0 %v2676, 8
    %v3344 = vpop.permute.xlu0 %3343
    %3349 = vrot.lane.b32.xlu0 %v2930, 16
    %v3350 = vpop.permute.xlu0 %3349
    %3351 = vrot.lane.b32.xlu0 %v3006, 16
    %v3352 = vpop.permute.xlu0 %3351
    %3357 = vrot.lane.b32.xlu0 %v3260, 24
    %v3358 = vpop.permute.xlu0 %3357
    %3359 = vrot.lane.b32.xlu0 %v3336, 24
    %v3360 = vpop.permute.xlu0 %3359
    %v3363 = vsel %vm195, %v2270, %v3342
    %v3364 = vsel %vm195, %v2346, %v3344
    %v3365 = vsel %vm1537, %v3363, %v3350
    %v3366 = vsel %vm1537, %v3364, %v3352
    %v3367 = vsel %vm1540, %v3365, %v3358
    %v3368 = vsel %vm1540, %v3366, %v3360
    %s3369 = scalar_lea.vmem %s4, 32
    %v3370 = vld [vmem:[%s3369] sm:$0xff]
    %v3371 = vld [vmem:[%s3369 + $0x8] sm:$0xff]
    %v3372 = vld [vmem:[%s3369 + $0x10] sm:$0xff]
    %v3373 = vld [vmem:[%s3369 + $0x18] sm:$0xff]
    %v3375 = vsel %vm57, %v3367, 0
    %v3378 = vsel %vm57, %v3368, 0
    %3380 = vmatprep.subr.mxu0 0.0
    %3381 = vmatpush1.msra.mxu0 %v3370
    %3382 = vmatprep.subr.mxu0 0.0
    %3383 = vmatpush1.msra.mxu0 %v3371
    %3384 = vmatprep.subr.mxu0 0.0
    %3385 = vmatpush1.msra.mxu0 %v3372
    %3386 = vmatprep.subr.mxu0 0.0
    %3387 = vmatpush1.msra.mxu0 %v3373
    %3388 = vmatprep.subr.mxu0 0.0
    %3389 = vmatpush1.msra.mxu0 0.0
    %3390 = vmatprep.subr.mxu0 0.0
    %3391 = vmatpush1.msra.mxu0 0.0
    %3392 = vmatprep.subr.mxu0 0.0
    %3393 = vmatpush1.msra.mxu0 0.0
    %3394 = vmatprep.subr.mxu0 0.0
    %3395 = vmatpush1.msra.mxu0 0.0
    %3396 = vmatprep.subr.mxu0 0.0
    %3397 = vmatpush1.msra.mxu0 0.0
    %3398 = vmatprep.subr.mxu0 0.0
    %3399 = vmatpush1.msra.mxu0 0.0
    %3400 = vmatprep.subr.mxu0 0.0
    %3401 = vmatpush1.msra.mxu0 0.0
    %3402 = vmatprep.subr.mxu0 0.0
    %3403 = vmatpush1.msra.mxu0 0.0
    %3404 = vmatprep.subr.mxu0 0.0
    %3405 = vmatpush1.msra.mxu0 0.0
    %3406 = vmatprep.subr.mxu0 0.0
    %3407 = vmatpush1.msra.mxu0 0.0
    %3408 = vmatprep.subr.mxu0 0.0
    %3409 = vmatpush1.msra.mxu0 0.0
    %3410 = vmatprep.subr.mxu0 0.0
    %3411 = vmatpush1.msra.mxu0 0.0
    %3412 = vmatprep.subr.mxu0 0.0
    %3413 = vmatpush1.msra.mxu0 0.0
    %3414 = vmatprep.subr.mxu0 0.0
    %3415 = vmatpush1.msra.mxu0 0.0
    %3416 = vmatprep.subr.mxu0 0.0
    %3417 = vmatpush1.msra.mxu0 0.0
    %3418 = vmatprep.subr.mxu0 0.0
    %3419 = vmatpush1.msra.mxu0 0.0
    %3420 = vmatprep.subr.mxu0 0.0
    %3421 = vmatpush1.msra.mxu0 0.0
    %3422 = vmatprep.subr.mxu0 0.0
    %3423 = vmatpush1.msra.mxu0 0.0
    %3424 = vmatprep.subr.mxu0 0.0
    %3425 = vmatpush1.msra.mxu0 0.0
    %3426 = vmatprep.subr.mxu0 0.0
    %3427 = vmatpush1.msra.mxu0 0.0
    %3428 = vmatprep.subr.mxu0 0.0
    %3429 = vmatpush1.msra.mxu0 0.0
    %3430 = vmatprep.subr.mxu0 0.0
    %3431 = vmatpush1.msra.mxu0 0.0
    %3432 = vmatprep.subr.mxu0 0.0
    %3433 = vmatpush1.msra.mxu0 0.0
    %3434 = vmatprep.subr.mxu0 0.0
    %3435 = vmatpush1.msra.mxu0 0.0
    %3436 = vmatprep.subr.mxu0 0.0
    %3437 = vmatpush1.msra.mxu0 0.0
    %3438 = vmatprep.subr.mxu0 0.0
    %3439 = vmatpush1.msra.mxu0 0.0
    %3440 = vmatprep.subr.mxu0 0.0
    %3441 = vmatpush1.msra.mxu0 0.0
    %3442 = vmatprep.subr.mxu0 0.0
    %3443 = vmatpush1.msra.mxu0 0.0
    %3444 = vmatprep.mubr.f32.mxu0 0.0
    %3445 = vmatmul.mubr.f32.gmra.mrb[0].mxu0 %v3375
    %v3446 = vpop.f32.mrb[0].mxu0
    %v3447 = vadd.f32 0.0, %v3446
    %v3448 = vpop.f32.mrb[0].mxu0
    %3449 = vmatprep.mubr.f32.mxu0 0.0
    %3450 = vmatmul.mubr.f32.gmra.mrb[0].mxu0 %v3378
    %v3451 = vpop.f32.mrb[0].mxu0
    %v3452 = vadd.f32 0.0, %v3451
    %v3453 = vpop.f32.mrb[0].mxu0
    %3454 = vdwg.mxu0
    %v3455 = vadd.f32 %v1881, %v3447
    %v3456 = vadd.f32 %v1882, %v3452
    %s3457 = scalar_lea.vmem %s5, 1
    %v3458 = vld [vmem:[%s3457] sm:$0x1]
    %s3459 = scalar_lea.vmem %s6, 1
    %v3460 = vld [vmem:[%s3459] sm:$0x1]
    %v3461 = vsel %vm57, %v3455, 0.0
    %3462 = vadd.xlane.f32.xlu0 %v3461
    %v3463 = vpop.xlane.xlu0 %3462
    %v3464 = vsel %vm57, %v3456, 0.0
    %3465 = vadd.xlane.f32.xlu0 %v3464
    %v3466 = vpop.xlane.xlu0 %3465
    %v3467 = vmul.f32 %v3463, %v64
    %v3468 = vmul.f32 %v3466, %v64
    %v3469 = vmul.f32 %v3455, %v3455
    %v3470 = vmul.f32 %v3456, %v3456
    %v3471 = vsel %vm57, %v3469, 0.0
    %3472 = vadd.xlane.f32.xlu0 %v3471
    %v3473 = vpop.xlane.xlu0 %3472
    %v3474 = vsel %vm57, %v3470, 0.0
    %3475 = vadd.xlane.f32.xlu0 %v3474
    %v3476 = vpop.xlane.xlu0 %3475
    %v3477 = vmul.f32 %v3473, %v64
    %v3478 = vmul.f32 %v3476, %v64
    %v3479 = vmul.f32 %v3467, %v3467
    %v3480 = vmul.f32 %v3468, %v3468
    %v3481 = vsub.f32 %v3477, %v3479
    %v3482 = vsub.f32 %v3478, %v3480
    %v3483 = vmax.f32 %v3481, 0.0
    %v3484 = vmax.f32 %v3482, 0.0
    %v3485 = vsub.f32 %v3455, %v3467
    %v3486 = vsub.f32 %v3456, %v3468
    %v3487 = vadd.f32 %v3483, 1e-05
    %v3488 = vadd.f32 %v3484, 1e-05
    %v3489 = vrsqrt.pop %v3487
    %v3490 = vrsqrt.pop %v3488
    %v3491 = vmul.f32 %v3485, %v3489
    %v3492 = vmul.f32 %v3486, %v3490
    %v3494 = vlaneseq
    %v3495 = vshrl.u32 %v3494, 7
    %v3496 = vsub.s32 0, %v3495
    %v3497 = vrot.slane %v3458, %v3496
    %v3499 = vmul.f32 %v3491, %v3497
    %v3500 = vmul.f32 %v3492, %v3497
    %v3502 = vlaneseq
    %v3503 = vshrl.u32 %v3502, 7
    %v3504 = vsub.s32 0, %v3503
    %v3505 = vrot.slane %v3460, %v3504
    %v3507 = vadd.f32 %v3499, %v3505
    %v3508 = vadd.f32 %v3500, %v3505
    %s3509 = scalar_lea.vmem %s7, 32
    %v3510 = vld [vmem:[%s3509] sm:$0xff]
    %v3511 = vld [vmem:[%s3509 + $0x8] sm:$0xff]
    %v3512 = vld [vmem:[%s3509 + $0x10] sm:$0xff]
    %v3513 = vld [vmem:[%s3509 + $0x18] sm:$0xff]
    %s3514 = scalar_lea.vmem %s8, 1
    %v3515 = vld [vmem:[%s3514] sm:$0x1]
    %v3517 = vlaneseq
    %v3518 = vshrl.u32 %v3517, 7
    %v3519 = vsub.s32 0, %v3518
    %v3520 = vrot.slane %v3515, %v3519
    %v3523 = vsel %vm57, %v3507, 0
    %v3526 = vsel %vm57, %v3508, 0
    %3528 = vmatprep.subr.mxu0 0.0
    %3529 = vmatpush1.msra.mxu0 %v3510
    %3530 = vmatprep.subr.mxu0 0.0
    %3531 = vmatpush1.msra.mxu0 %v3511
    %3532 = vmatprep.subr.mxu0 0.0
    %3533 = vmatpush1.msra.mxu0 %v3512
    %3534 = vmatprep.subr.mxu0 0.0
    %3535 = vmatpush1.msra.mxu0 %v3513
    %3536 = vmatprep.subr.mxu0 0.0
    %3537 = vmatpush1.msra.mxu0 0.0
    %3538 = vmatprep.subr.mxu0 0.0
    %3539 = vmatpush1.msra.mxu0 0.0
    %3540 = vmatprep.subr.mxu0 0.0
    %3541 = vmatpush1.msra.mxu0 0.0
    %3542 = vmatprep.subr.mxu0 0.0
    %3543 = vmatpush1.msra.mxu0 0.0
    %3544 = vmatprep.subr.mxu0 0.0
    %3545 = vmatpush1.msra.mxu0 0.0
    %3546 = vmatprep.subr.mxu0 0.0
    %3547 = vmatpush1.msra.mxu0 0.0
    %3548 = vmatprep.subr.mxu0 0.0
    %3549 = vmatpush1.msra.mxu0 0.0
    %3550 = vmatprep.subr.mxu0 0.0
    %3551 = vmatpush1.msra.mxu0 0.0
    %3552 = vmatprep.subr.mxu0 0.0
    %3553 = vmatpush1.msra.mxu0 0.0
    %3554 = vmatprep.subr.mxu0 0.0
    %3555 = vmatpush1.msra.mxu0 0.0
    %3556 = vmatprep.subr.mxu0 0.0
    %3557 = vmatpush1.msra.mxu0 0.0
    %3558 = vmatprep.subr.mxu0 0.0
    %3559 = vmatpush1.msra.mxu0 0.0
    %3560 = vmatprep.subr.mxu0 0.0
    %3561 = vmatpush1.msra.mxu0 0.0
    %3562 = vmatprep.subr.mxu0 0.0
    %3563 = vmatpush1.msra.mxu0 0.0
    %3564 = vmatprep.subr.mxu0 0.0
    %3565 = vmatpush1.msra.mxu0 0.0
    %3566 = vmatprep.subr.mxu0 0.0
    %3567 = vmatpush1.msra.mxu0 0.0
    %3568 = vmatprep.subr.mxu0 0.0
    %3569 = vmatpush1.msra.mxu0 0.0
    %3570 = vmatprep.subr.mxu0 0.0
    %3571 = vmatpush1.msra.mxu0 0.0
    %3572 = vmatprep.subr.mxu0 0.0
    %3573 = vmatpush1.msra.mxu0 0.0
    %3574 = vmatprep.subr.mxu0 0.0
    %3575 = vmatpush1.msra.mxu0 0.0
    %3576 = vmatprep.subr.mxu0 0.0
    %3577 = vmatpush1.msra.mxu0 0.0
    %3578 = vmatprep.subr.mxu0 0.0
    %3579 = vmatpush1.msra.mxu0 0.0
    %3580 = vmatprep.subr.mxu0 0.0
    %3581 = vmatpush1.msra.mxu0 0.0
    %3582 = vmatprep.subr.mxu0 0.0
    %3583 = vmatpush1.msra.mxu0 0.0
    %3584 = vmatprep.subr.mxu0 0.0
    %3585 = vmatpush1.msra.mxu0 0.0
    %3586 = vmatprep.subr.mxu0 0.0
    %3587 = vmatpush1.msra.mxu0 0.0
    %3588 = vmatprep.subr.mxu0 0.0
    %3589 = vmatpush1.msra.mxu0 0.0
    %3590 = vmatprep.subr.mxu0 0.0
    %3591 = vmatpush1.msra.mxu0 0.0
    %3592 = vmatprep.mubr.f32.mxu0 0.0
    %3593 = vmatmul.mubr.f32.gmra.mrb[0].mxu0 %v3523
    %v3594 = vpop.f32.mrb[0].mxu0
    %v3595 = vadd.f32 %v3520, %v3594
    %v3596 = vpop.f32.mrb[0].mxu0
    %3597 = vmatprep.mubr.f32.mxu0 0.0
    %3598 = vmatmul.mubr.f32.gmra.mrb[0].mxu0 %v3526
    %v3599 = vpop.f32.mrb[0].mxu0
    %v3600 = vadd.f32 %v3520, %v3599
    %v3601 = vpop.f32.mrb[0].mxu0
    %3602 = vdwg.mxu0
    %v3603 = vmul.f32 %v3595, 0.5
    %v3604 = vmul.f32 %v3600, 0.5
    %v3605 = vmul.f32 %v3595, 0.70710677
    %v3606 = vmul.f32 %v3600, 0.70710677
    %v3607 = verf.f32.pop %v3605
    %v3608 = verf.f32.pop %v3606
    %v3609 = vadd.f32 %v3607, 1.0
    %v3610 = vadd.f32 %v3608, 1.0
    %v3611 = vmul.f32 %v3603, %v3609
    %v3612 = vmul.f32 %v3604, %v3610
    %s3613 = scalar_lea.vmem %s9, 64
    %v3614 = vld [vmem:[%s3613] sm:$0xff]
    %v3615 = vld [vmem:[%s3613 + $0x8] sm:$0xff]
    %v3616 = vld [vmem:[%s3613 + $0x10] sm:$0xff]
    %v3617 = vld [vmem:[%s3613 + $0x18] sm:$0xff]
    %v3618 = vld [vmem:[%s3613 + $0x20] sm:$0xff]
    %v3619 = vld [vmem:[%s3613 + $0x28] sm:$0xff]
    %v3620 = vld [vmem:[%s3613 + $0x30] sm:$0xff]
    %v3621 = vld [vmem:[%s3613 + $0x38] sm:$0xff]
    %v3623 = vsel %vm1790, %v3611, 0
    %v3626 = vsel %vm1790, %v3612, 0
    %3628 = vmatprep.subr.mxu0 0.0
    %3629 = vmatpush1.msra.mxu0 %v3614
    %3630 = vmatprep.subr.mxu0 0.0
    %3631 = vmatpush1.msra.mxu0 %v3615
    %3632 = vmatprep.subr.mxu0 0.0
    %3633 = vmatpush1.msra.mxu0 %v3616
    %3634 = vmatprep.subr.mxu0 0.0
    %3635 = vmatpush1.msra.mxu0 %v3617
    %3636 = vmatprep.subr.mxu0 0.0
    %3637 = vmatpush1.msra.mxu0 %v3618
    %3638 = vmatprep.subr.mxu0 0.0
    %3639 = vmatpush1.msra.mxu0 %v3619
    %3640 = vmatprep.subr.mxu0 0.0
    %3641 = vmatpush1.msra.mxu0 %v3620
    %3642 = vmatprep.subr.mxu0 0.0
    %3643 = vmatpush1.msra.mxu0 %v3621
    %3644 = vmatprep.subr.mxu0 0.0
    %3645 = vmatpush1.msra.mxu0 0.0
    %3646 = vmatprep.subr.mxu0 0.0
    %3647 = vmatpush1.msra.mxu0 0.0
    %3648 = vmatprep.subr.mxu0 0.0
    %3649 = vmatpush1.msra.mxu0 0.0
    %3650 = vmatprep.subr.mxu0 0.0
    %3651 = vmatpush1.msra.mxu0 0.0
    %3652 = vmatprep.subr.mxu0 0.0
    %3653 = vmatpush1.msra.mxu0 0.0
    %3654 = vmatprep.subr.mxu0 0.0
    %3655 = vmatpush1.msra.mxu0 0.0
    %3656 = vmatprep.subr.mxu0 0.0
    %3657 = vmatpush1.msra.mxu0 0.0
    %3658 = vmatprep.subr.mxu0 0.0
    %3659 = vmatpush1.msra.mxu0 0.0
    %3660 = vmatprep.subr.mxu0 0.0
    %3661 = vmatpush1.msra.mxu0 0.0
    %3662 = vmatprep.subr.mxu0 0.0
    %3663 = vmatpush1.msra.mxu0 0.0
    %3664 = vmatprep.subr.mxu0 0.0
    %3665 = vmatpush1.msra.mxu0 0.0
    %3666 = vmatprep.subr.mxu0 0.0
    %3667 = vmatpush1.msra.mxu0 0.0
    %3668 = vmatprep.subr.mxu0 0.0
    %3669 = vmatpush1.msra.mxu0 0.0
    %3670 = vmatprep.subr.mxu0 0.0
    %3671 = vmatpush1.msra.mxu0 0.0
    %3672 = vmatprep.subr.mxu0 0.0
    %3673 = vmatpush1.msra.mxu0 0.0
    %3674 = vmatprep.subr.mxu0 0.0
    %3675 = vmatpush1.msra.mxu0 0.0
    %3676 = vmatprep.subr.mxu0 0.0
    %3677 = vmatpush1.msra.mxu0 0.0
    %3678 = vmatprep.subr.mxu0 0.0
    %3679 = vmatpush1.msra.mxu0 0.0
    %3680 = vmatprep.subr.mxu0 0.0
    %3681 = vmatpush1.msra.mxu0 0.0
    %3682 = vmatprep.subr.mxu0 0.0
    %3683 = vmatpush1.msra.mxu0 0.0
    %3684 = vmatprep.subr.mxu0 0.0
    %3685 = vmatpush1.msra.mxu0 0.0
    %3686 = vmatprep.subr.mxu0 0.0
    %3687 = vmatpush1.msra.mxu0 0.0
    %3688 = vmatprep.subr.mxu0 0.0
    %3689 = vmatpush1.msra.mxu0 0.0
    %3690 = vmatprep.subr.mxu0 0.0
    %3691 = vmatpush1.msra.mxu0 0.0
    %3692 = vmatprep.mubr.f32.mxu0 0.0
    %3693 = vmatmul.mubr.f32.gmra.mrb[0].mxu0 %v3623
    %v3694 = vpop.f32.mrb[0].mxu0
    %v3695 = vadd.f32 0.0, %v3694
    %v3696 = vpop.f32.mrb[0].mxu0
    %3697 = vmatprep.mubr.f32.mxu0 0.0
    %3698 = vmatmul.mubr.f32.gmra.mrb[0].mxu0 %v3626
    %v3699 = vpop.f32.mrb[0].mxu0
    %v3700 = vadd.f32 0.0, %v3699
    %v3701 = vpop.f32.mrb[0].mxu0
    %3702 = vdwg.mxu0
    %v3703 = vadd.f32 %v3455, %v3695
    %v3704 = vadd.f32 %v3456, %v3700
    %s3705 = scalar_lea.vmem %s10, 1
    %v3706 = vld [vmem:[%s3705] sm:$0x1]
    %v3708 = vlaneseq
    %v3709 = vshrl.u32 %v3708, 7
    %v3710 = vsub.s32 0, %v3709
    %v3711 = vrot.slane %v3706, %v3710
    %v3713 = vadd.f32 %v3703, %v3711
    %v3714 = vadd.f32 %v3704, %v3711
    %3715 = vst.msk [vmem:[#allocation5] sm:$0xff] %vm57, %v3713
    %3716 = vst.msk [vmem:[#allocation5 + $0x8] sm:$0xff] %vm57, %v3714
    // Predicated region
    $region50: #{tpu_custom_call.1} parent=1 // pred_check
      _
    $region51: #{tpu_custom_call.1} parent=1 // pred_check_branch
      %3718 = sbr.rel (0) target = $region53
    $region52: #{tpu_custom_call.1} parent=1 // pred_region
      %s3720 = ssub.s32 256, 256
      %3721 = vsyncadd [#allocation4], %s3720
      %s3722 = sshll.u32 [#allocation5], 4
      %s3723 = int_to_ptr.vmem [resolvable:$true] %s3722
      %3728 = dma.vmem_to_hbm [thread:$0]  %s3723, 256, %s11, [#allocation4], 128, 128, 8
    $region53: #{tpu_custom_call.1} parent=1 // pred_fallthru
      _
    // Predicated region
    $region54: #{tpu_custom_call.1} parent=1 // pred_check
      _
    $region55: #{tpu_custom_call.1} parent=1 // pred_check_branch
      %3730 = sbr.rel (0) target = $region57
    $region56: #{tpu_custom_call.1} parent=1 // pred_region
      %3731 = dma.done [#allocation4], 256
    $region57: #{tpu_custom_call.1} parent=1 // pred_fallthru
      _
    %3732 = vsyncpa [#allocation3], 1
    %3733 = vsyncpa [#allocation4], 1

</llo_original>
